<compile_context>
chip_gen: v5e
topology: v5e:2x2
jax: 0.10.0
libtpu: 0.0.40
codegen_flags: <defaults>
</compile_context>

<pallas_src>
import numpy as np
import jax
import jax.numpy as jnp
from jax.experimental import pallas as pl
from jax.experimental.pallas import tpu as pltpu


def _lrelu(x, slope=0.1):
    return jnp.where(x >= 0, x, slope * x)


# ----------------------------------------------------------------------------
# host-side constructors (numpy): DFT matrices, banded conv matrices, packing
# ----------------------------------------------------------------------------

def _dft_mats(H, W, C):
    """Matrices implementing rfft2 / irfft2 (norm='backward') as real matmuls
    on the lane-dense (H, W*C) layout (channel-minor)."""
    Wf = W // 2 + 1
    u = np.arange(H)[:, None]
    h = np.arange(H)[None, :]
    ang_h = 2.0 * np.pi * u * h / H
    fhr = np.cos(ang_h)                      # forward DFT over H (real part)
    fhi = -np.sin(ang_h)                     # forward DFT over H (imag part)
    ghr = np.cos(ang_h) / H                  # inverse (ifft) over H
    ghi = np.sin(ang_h) / H

    w = np.arange(W)[:, None]
    v = np.arange(Wf)[None, :]
    ang_w = 2.0 * np.pi * w * v / W
    fwr = np.cos(ang_w)
    fwi = -np.sin(ang_w)
    eye_c = np.eye(C)
    fwr_e = np.kron(fwr, eye_c)              # (W*C, Wf*C)
    fwi_e = np.kron(fwi, eye_c)
    # [Tr | Ti] @ fw_big = [Zr | Zi]
    fw_big = np.block([[fwr_e, fwi_e], [-fwi_e, fwr_e]])     # (2*W*C, 2*Wf*C)

    # irfft over W (torch/pocketfft: imaginary part of DC and Nyquist ignored)
    vv = np.arange(Wf)[:, None]
    ww = np.arange(W)[None, :]
    ang_i = 2.0 * np.pi * vv * ww / W
    cw = 2.0 * np.cos(ang_i) / W
    sw = -2.0 * np.sin(ang_i) / W
    cw[0, :] = 1.0 / W
    sw[0, :] = 0.0
    if W % 2 == 0:
        cw[Wf - 1, :] = np.cos(ang_i[Wf - 1, :]) / W         # (-1)^w / W
        sw[Wf - 1, :] = 0.0
    iw_big = np.concatenate([np.kron(cw, eye_c), np.kron(sw, eye_c)], axis=0)

    return (fhr.astype(np.float32), fhi.astype(np.float32),
            ghr.astype(np.float32), ghi.astype(np.float32),
            fw_big.astype(np.float32), iw_big.astype(np.float32))


def _band3(wt, W):
    """wt: (3, 3, cin, cout).  Returns (3, W*cin, W*cout): a 3x3 'same' conv as
    three banded matmuls (one per kernel row); the dx shift and the zero padding
    along W are baked into the matrices, so only a row halo is needed."""
    _, _, cin, cout = wt.shape
    m = np.zeros((3, W * cin, W * cout), np.float32)
    for dy in range(3):
        for w in range(W):
            for dx in range(3):
                wi = w + dx - 1
                if 0 <= wi < W:
                    m[dy, wi * cin:(wi + 1) * cin, w * cout:(w + 1) * cout] = wt[dy, dx]
    return m


class _Pack:
    """Packs many small 2-D weight arrays of one lane width into a single
    lane-dense array; sections start at 8-row-aligned offsets so the in-kernel
    static slices stay sublane aligned."""

    def __init__(self, lanes):
        self.lanes = lanes
        self.rows = 0
        self.items = []

    def add(self, arr):
        arr = np.asarray(arr, np.float32)
        assert arr.ndim == 2 and arr.shape[1] == self.lanes, arr.shape
        off = self.rows
        self.items.append((off, arr))
        self.rows += ((arr.shape[0] + 7) // 8) * 8
        return off

    def finish(self):
        buf = np.zeros((max(self.rows, 8), self.lanes), np.float32)
        for off, arr in self.items:
            buf[off:off + arr.shape[0]] = arr
        return buf


# ----------------------------------------------------------------------------
# model builder: synthetic deterministic params + the fused Pallas forward
# ----------------------------------------------------------------------------

def build_model(nc, N, H, W, key):
    assert nc % 2 == 0 and nc >= 2
    C = nc
    s1 = nc // 2
    s2 = nc - s1                      # == s1 for even nc, so 2*s2 == C
    Wf = W // 2 + 1
    WC = W * C
    WfC = Wf * C
    Wp2 = (Wf + 2) * C                # padded flat width of the frequency scratch

    keys = iter(jax.random.split(key, 32))

    def rnd(shape, scale):
        return (np.asarray(jax.random.normal(next(keys), shape, jnp.float32))
                * scale).astype(np.float32)

    def conv3(cin, cout):
        return rnd((3, 3, cin, cout), 0.2 / np.sqrt(9.0 * cin)), rnd((cout,), 0.01)

    def conv1(cin, cout):
        return rnd((cin, cout), 0.2 / np.sqrt(cin)), rnd((cout,), 0.01)

    def dwconv():
        return rnd((3, 3, C), 0.2 / 3.0), rnd((C,), 0.01)

    # ---- FreBlockSpa: depthwise3x3 -> lrelu(0.1) -> depthwise3x3, real & imag ----
    r1w, r1b = dwconv(); r2w, r2b = dwconv()
    i1w, i1b = dwconv(); i2w, i2b = dwconv()
    dwpack = np.zeros((20, 2, 1, WfC), np.float32)       # taps (18) + biases (2)
    for dy in range(3):
        for dx in range(3):
            k = dy * 3 + dx
            dwpack[k, 0, 0] = np.tile(r1w[dy, dx], Wf)
            dwpack[k, 1, 0] = np.tile(i1w[dy, dx], Wf)
            dwpack[9 + k, 0, 0] = np.tile(r2w[dy, dx], Wf)
            dwpack[9 + k, 1, 0] = np.tile(i2w[dy, dx], Wf)
    dwpack[18, 0, 0] = np.tile(r1b, Wf)
    dwpack[18, 1, 0] = np.tile(i1b, Wf)
    dwpack[19, 0, 0] = np.tile(r2b, Wf)
    dwpack[19, 1, 0] = np.tile(i2b, Wf)

    # ---- SpaBlock (InvBlock) UNets + fusion convs ----
    f_c1w, f_c1b = conv3(s2, s1); f_c2w, f_c2b = conv3(s1, s1); f_idw, f_idb = conv1(s2, s1)
    h_c1w, h_c1b = conv3(s1, s2); h_c2w, h_c2b = conv3(s2, s2); h_idw, h_idb = conv1(s1, s2)
    g_c1w, g_c1b = conv3(s1, s2); g_c2w, g_c2b = conv3(s2, s2); g_idw, g_idb = conv1(s1, s2)
    fs_w, fs_b = conv3(C, C)
    cat_w, cat_b = conv3(2 * C, C)

    # fuse H|G (same input y1): conv1/identity concatenated along cout,
    # conv2 block-diagonal -> the fused [hout|gout] is only split at the coupling.
    hg_c1w = np.concatenate([h_c1w, g_c1w], axis=3)
    hg_c1b = np.concatenate([h_c1b, g_c1b], axis=0)
    hg_idw = np.concatenate([h_idw, g_idw], axis=1)
    hg_idb = np.concatenate([h_idb, g_idb], axis=0)
    hg_c2w = np.zeros((3, 3, 2 * s2, 2 * s2), np.float32)
    hg_c2w[:, :, :s2, :s2] = h_c2w
    hg_c2w[:, :, s2:, s2:] = g_c2w
    hg_c2b = np.concatenate([h_c2b, g_c2b], axis=0)

    # InstanceNorm2d(out//2, affine=True) defaults; pass-through entries unused.
    f_gamma = np.ones((s1,), np.float32); f_beta = np.zeros((s1,), np.float32)
    hg_gamma = np.ones((2 * s2,), np.float32); hg_beta = np.zeros((2 * s2,), np.float32)

    # ---- DFT matrices, channel-selection, HIN-stat matrices ----
    fhr, fhi, ghr, ghi, fw_big, iw_big = _dft_mats(H, W, C)
    w16 = np.concatenate([fhr, fhi, ghr, ghi], axis=0)              # (4H, H)

    eye_w = np.eye(W, dtype=np.float32)
    sel1 = np.kron(eye_w, np.eye(C, dtype=np.float32)[:, :s1])      # channels [0, s1)
    sel2 = np.kron(eye_w, np.eye(C, dtype=np.float32)[:, s1:])      # channels [s1, C)
    p_s1 = np.kron(np.full((W, W), 1.0 / W, np.float32), np.eye(s1, dtype=np.float32))
    p_c = np.kron(np.full((W, W), 1.0 / W, np.float32), np.eye(2 * s2, dtype=np.float32))

    def tile_w(vec):
        return np.tile(np.asarray(vec, np.float32), W)

    # ---- pack everything into a few lane-dense arrays ----
    pk32 = _Pack(W * s1)
    o32 = {
        'f_c1': pk32.add(_band3(f_c1w, W).reshape(3 * W * s2, W * s1)),
        'f_c2': pk32.add(_band3(f_c2w, W).reshape(3 * W * s1, W * s1)),
        'f_id': pk32.add(np.kron(eye_w, f_idw)),
        'sel1': pk32.add(sel1),
        'sel2': pk32.add(sel2),
        'p': pk32.add(p_s1),
        'f_vec': pk32.add(np.stack([tile_w(f_c1b), tile_w(f_c2b), tile_w(f_idb),
                                    tile_w(f_gamma), tile_w(f_beta)], axis=0)),
    }
    w32 = pk32.finish()

    cat_s_bands = np.concatenate(
        [np.concatenate([_band3(cat_w[:, :, :s1, :], W)[dy],
                         _band3(cat_w[:, :, s1:C, :], W)[dy]], axis=0)
         for dy in range(3)], axis=0)                               # (3*W*C, W*C)

    pk64 = _Pack(W * C)
    o64 = {
        'iw': pk64.add(iw_big),
        'hg_c1': pk64.add(_band3(hg_c1w, W).reshape(3 * W * s1, W * 2 * s2)),
        'hg_c2': pk64.add(_band3(hg_c2w, W).reshape(3 * W * 2 * s2, W * 2 * s2)),
        'hg_id': pk64.add(np.kron(eye_w, hg_idw)),
        'p': pk64.add(p_c),
        'fs': pk64.add(_band3(fs_w, W).reshape(3 * W * C, W * C)),
        'cat_s': pk64.add(cat_s_bands),
        'cat_f': pk64.add(_band3(cat_w[:, :, C:, :], W).reshape(3 * W * C, W * C)),
        'hg_vec': pk64.add(np.stack([tile_w(hg_c1b), tile_w(hg_c2b), tile_w(hg_idb),
                                     tile_w(hg_gamma), tile_w(hg_beta)], axis=0)),
        'fc_vec': pk64.add(np.stack([tile_w(fs_b), tile_w(cat_b)], axis=0)),
    }
    w64 = pk64.finish()

    # ------------------------------------------------------------------------
    # the fused kernel
    # ------------------------------------------------------------------------
    def kernel(x_ref, w16_ref, fw_ref, dw_ref, w32_ref, w64_ref,
               o_ref, rowbuf, padf):
        f32 = jnp.float32

        # zero only the 1-pixel halo (interiors are always overwritten first)
        zrow = jnp.zeros((1, WC), f32)
        rowbuf[0:1, :] = zrow
        rowbuf[H + 1:H + 2, :] = zrow
        zfrow = jnp.zeros((2, 1, Wp2), f32)
        padf[:, 0:1, :] = zfrow
        padf[:, H + 1:H + 2, :] = zfrow
        zfcol = jnp.zeros((2, H + 2, C), f32)
        padf[:, :, 0:C] = zfcol
        padf[:, :, C + WfC:Wp2] = zfcol

        x2d = x_ref[0]                                   # (H, W*C) lane dense

        def band_conv(x_flat, pk, off, cin, cout, bias_row):
            """3x3 'same' conv = 3 banded matmuls over the row-halo scratch."""
            wcin = W * cin
            rowbuf[1:H + 1, 0:wcin] = x_flat
            out = bias_row
            for dy in range(3):
                m = pk[off + dy * wcin: off + (dy + 1) * wcin, :]
                out = out + jnp.dot(rowbuf[dy:dy + H, 0:wcin], m,
                                    preferred_element_type=f32)
            return out

        def unet(x_flat, pk, c1, c2, idm, pmat, vecs, cin, cout, group):
            """UNetConvBlock: conv3 -> half-instance-norm -> lrelu -> conv3
            -> lrelu -> + identity(1x1)."""
            vec = pk[vecs:vecs + 5, :]
            out = band_conv(x_flat, pk, c1, cin, cout, vec[0:1])
            p = pk[pmat:pmat + W * cout, :]
            mean = jnp.mean(jnp.dot(out, p, preferred_element_type=f32),
                            axis=0, keepdims=True)
            ex2 = jnp.mean(jnp.dot(out * out, p, preferred_element_type=f32),
                           axis=0, keepdims=True)
            inv = jax.lax.rsqrt(ex2 - mean * mean + 1e-5)
            normed = (out - mean) * inv * vec[3:4] + vec[4:5]
            ch = jax.lax.broadcasted_iota(jnp.int32, out.shape, 1) % group
            out = _lrelu(jnp.where(ch < (group // 2), normed, out))
            out = _lrelu(band_conv(out, pk, c2, cout, cout, vec[1:2]))
            ident = jnp.dot(x_flat, pk[idm:idm + W * cin, :],
                            preferred_element_type=f32) + vec[2:3]
            return out + ident

        # -------- frequency branch: rfft2 as DFT matmuls --------
        fhr_m = w16_ref[0:H, :]
        fhi_m = w16_ref[H:2 * H, :]
        ghr_m = w16_ref[2 * H:3 * H, :]
        ghi_m = w16_ref[3 * H:4 * H, :]
        tr = jnp.dot(fhr_m, x2d, preferred_element_type=f32)
        ti = jnp.dot(fhi_m, x2d, preferred_element_type=f32)
        zri = jnp.dot(jnp.concatenate([tr, ti], axis=1), fw_ref[...],
                      preferred_element_type=f32)        # (H, 2*Wf*C) = [Re|Im]

        # FreBlockSpa: real & imag processed stacked (one tap loop for both)
        padf[0, 1:H + 1, C:C + WfC] = zri[:, 0:WfC]
        padf[1, 1:H + 1, C:C + WfC] = zri[:, WfC:2 * WfC]

        def dw_conv(tap0, bias_idx):
            acc = jnp.zeros((2, H, WfC), f32)
            for dy in range(3):
                for dx in range(3):
                    acc = acc + (padf[:, dy:dy + H, dx * C:dx * C + WfC]
                                 * dw_ref[tap0 + dy * 3 + dx])
            return acc + dw_ref[bias_idx]

        z1 = _lrelu(dw_conv(0, 18))
        padf[:, 1:H + 1, C:C + WfC] = z1
        z2 = dw_conv(9, 19)

        # irfft2 (ifft over H, then irfft over W; DC/Nyquist imag ignored)
        zr2 = z2[0]
        zi2 = z2[1]
        ur = (jnp.dot(ghr_m, zr2, preferred_element_type=f32)
              - jnp.dot(ghi_m, zi2, preferred_element_type=f32))
        ui = (jnp.dot(ghi_m, zr2, preferred_element_type=f32)
              + jnp.dot(ghr_m, zi2, preferred_element_type=f32))
        xfs = jnp.dot(jnp.concatenate([ur, ui], axis=1),
                      w64_ref[o64['iw']:o64['iw'] + 2 * WfC, :],
                      preferred_element_type=f32)        # (H, W*C)

        # -------- spatial branch: SpaBlock / InvBlock --------
        sel1_m = w32_ref[o32['sel1']:o32['sel1'] + WC, :]
        sel2_m = w32_ref[o32['sel2']:o32['sel2'] + WC, :]
        x1 = jnp.dot(x2d, sel1_m, preferred_element_type=f32)
        x2 = jnp.dot(x2d, sel2_m, preferred_element_type=f32)

        y1 = x1 + unet(x2, w32_ref, o32['f_c1'], o32['f_c2'], o32['f_id'],
                       o32['p'], o32['f_vec'], s2, s1, s1)
        hg = unet(y1, w64_ref, o64['hg_c1'], o64['hg_c2'], o64['hg_id'],
                  o64['p'], o64['hg_vec'], s1, 2 * s2, s2)
        hout = jnp.dot(hg, sel1_m, preferred_element_type=f32)
        gout = jnp.dot(hg, sel2_m, preferred_element_type=f32)
        sgate = 0.8 * (2.0 * jax.nn.sigmoid(hout) - 1.0)
        y2 = x2 * jnp.exp(sgate) + gout
        xs1 = x1 + y1                                    # SpaBlock residual
        xs2 = x2 + y2

        # -------- frequency_spatial conv + cat conv + final residual --------
        fcv = w64_ref[o64['fc_vec']:o64['fc_vec'] + 2, :]
        xfsc = band_conv(xfs, w64_ref, o64['fs'], C, C, fcv[0:1])

        cat = fcv[1:2]
        rowbuf[1:H + 1, 0:WC] = jnp.concatenate([xs1, xs2], axis=1)
        for dy in range(3):
            m = w64_ref[o64['cat_s'] + dy * WC:o64['cat_s'] + (dy + 1) * WC, :]
            cat = cat + jnp.dot(rowbuf[dy:dy + H, 0:WC], m,
                                preferred_element_type=f32)
        rowbuf[1:H + 1, 0:WC] = xfsc
        for dy in range(3):
            m = w64_ref[o64['cat_f'] + dy * WC:o64['cat_f'] + (dy + 1) * WC, :]
            cat = cat + jnp.dot(rowbuf[dy:dy + H, 0:WC], m,
                                preferred_element_type=f32)

        o_ref[0] = cat + x2d                             # + xori

    # ------------------------------------------------------------------------
    # pallas_call + jitted wrapper
    # ------------------------------------------------------------------------
    def _full(arr):
        return pl.BlockSpec(arr.shape, lambda n, _nd=arr.ndim: (0,) * _nd)

    call = pl.pallas_call(
        kernel,
        grid=(N,),
        in_specs=[pl.BlockSpec((1, H, WC), lambda n: (n, 0, 0)),
                  _full(w16), _full(fw_big), _full(dwpack),
                  _full(w32), _full(w64)],
        out_specs=pl.BlockSpec((1, H, WC), lambda n: (n, 0, 0)),
        out_shape=jax.ShapeDtypeStruct((N, H, WC), jnp.float32),
        scratch_shapes=[pltpu.VMEM((H + 2, WC), jnp.float32),        # row halo
                        pltpu.VMEM((2, H + 2, Wp2), jnp.float32)],   # freq halo
        compiler_params=pltpu.CompilerParams(
            dimension_semantics=("parallel",)),
    )

    params = dict(w16=jnp.asarray(w16), fw=jnp.asarray(fw_big),
                  dw=jnp.asarray(dwpack), w32=jnp.asarray(w32),
                  w64=jnp.asarray(w64))

    @jax.jit
    def forward(p, x_nchw):
        xh = jnp.transpose(x_nchw, (0, 2, 3, 1)).reshape(N, H, W * C)
        out = call(xh, p['w16'], p['fw'], p['dw'], p['w32'], p['w64'])
        return jnp.transpose(out.reshape(N, H, W, C), (0, 3, 1, 2))

    return params, forward


# ----------------------------------------------------------------------------
# main
# ----------------------------------------------------------------------------

if __name__ == "__main__":
    nc, N, H, W = 4, 2, 16, 16

    root = jax.random.PRNGKey(0)
    pkey, xkey = jax.random.split(root)
    params, forward = build_model(nc=nc, N=N, H=H, W=W, key=pkey)

    x = jax.random.normal(xkey, (N, nc, H, W), jnp.float32)   # NCHW, torch-like

    out = jax.block_until_ready(forward(params, x))

    assert out.shape == (N, nc, H, W), out.shape
    assert out.dtype == jnp.float32
    assert bool(jnp.all(jnp.isfinite(out)))
    print("KERNEL_OK")
</pallas_src>

<mosaic_0001>
module attributes {stable_mosaic.version = 11 : i64} {
  func.func @kernel(%arg0: i32, %arg1: memref<1x16x64xf32, #tpu.memory_space<vmem>>, %arg2: memref<64x16xf32, #tpu.memory_space<vmem>>, %arg3: memref<128x72xf32, #tpu.memory_space<vmem>>, %arg4: memref<20x2x1x36xf32, #tpu.memory_space<vmem>>, %arg5: memref<392x32xf32, #tpu.memory_space<vmem>>, %arg6: memref<1048x64xf32, #tpu.memory_space<vmem>>, %arg7: memref<1x16x64xf32, #tpu.memory_space<vmem>>, %arg8: memref<18x64xf32, #tpu.memory_space<vmem>>, %arg9: memref<2x18x44xf32, #tpu.memory_space<vmem>>) attributes {dimension_semantics = [#tpu.dimension_semantics<parallel>], iteration_bounds = array<i64: 2>, scalar_prefetch = 0 : i64, scratch_operands = 2 : i64, tpu.core_type = #tpu.core_type<tc>, window_params = [{transform_indices = @transform_0, window_bounds = array<i64: 1, 16, 64>}, {pipeline_mode = #tpu.pipeline_mode<synchronous>, transform_indices = @transform_1, window_bounds = array<i64: 64, 16>}, {pipeline_mode = #tpu.pipeline_mode<synchronous>, transform_indices = @transform_2, window_bounds = array<i64: 128, 72>}, {pipeline_mode = #tpu.pipeline_mode<synchronous>, transform_indices = @transform_3, window_bounds = array<i64: 20, 2, 1, 36>}, {pipeline_mode = #tpu.pipeline_mode<synchronous>, transform_indices = @transform_4, window_bounds = array<i64: 392, 32>}, {pipeline_mode = #tpu.pipeline_mode<synchronous>, transform_indices = @transform_5, window_bounds = array<i64: 1048, 64>}, {transform_indices = @transform_6, window_bounds = array<i64: 1, 16, 64>}]} {
    %cst = arith.constant 0.000000e+00 : f32
    %0 = vector.broadcast %cst : f32 to vector<1x64xf32>
    %c0 = arith.constant 0 : index
    %c0_0 = arith.constant 0 : index
    %1 = vector.load %arg8[%c0, %c0_0] : memref<18x64xf32, #tpu.memory_space<vmem>>, vector<1x64xf32>
    tpu.vector_store %arg8[%c0, %c0_0], %0 {strides = array<i32>} : memref<18x64xf32, #tpu.memory_space<vmem>>, vector<1x64xf32>,
    %c17 = arith.constant 17 : index
    %c0_1 = arith.constant 0 : index
    %2 = vector.load %arg8[%c17, %c0_1] : memref<18x64xf32, #tpu.memory_space<vmem>>, vector<1x64xf32>
    tpu.vector_store %arg8[%c17, %c0_1], %0 {strides = array<i32>} : memref<18x64xf32, #tpu.memory_space<vmem>>, vector<1x64xf32>,
    %cst_2 = arith.constant 0.000000e+00 : f32
    %3 = vector.broadcast %cst_2 : f32 to vector<2x1x44xf32>
    %c0_3 = arith.constant 0 : index
    %c0_4 = arith.constant 0 : index
    %c0_5 = arith.constant 0 : index
    %4 = vector.load %arg9[%c0_3, %c0_4, %c0_5] : memref<2x18x44xf32, #tpu.memory_space<vmem>>, vector<2x1x44xf32>
    tpu.vector_store %arg9[%c0_3, %c0_4, %c0_5], %3 {strides = array<i32>} : memref<2x18x44xf32, #tpu.memory_space<vmem>>, vector<2x1x44xf32>,
    %c0_6 = arith.constant 0 : index
    %c17_7 = arith.constant 17 : index
    %c0_8 = arith.constant 0 : index
    %5 = vector.load %arg9[%c0_6, %c17_7, %c0_8] : memref<2x18x44xf32, #tpu.memory_space<vmem>>, vector<2x1x44xf32>
    tpu.vector_store %arg9[%c0_6, %c17_7, %c0_8], %3 {strides = array<i32>} : memref<2x18x44xf32, #tpu.memory_space<vmem>>, vector<2x1x44xf32>,
    %cst_9 = arith.constant 0.000000e+00 : f32
    %6 = vector.broadcast %cst_9 : f32 to vector<2x18x4xf32>
    %c0_10 = arith.constant 0 : index
    %c0_11 = arith.constant 0 : index
    %c0_12 = arith.constant 0 : index
    %7 = vector.load %arg9[%c0_10, %c0_11, %c0_12] : memref<2x18x44xf32, #tpu.memory_space<vmem>>, vector<2x18x4xf32>
    tpu.vector_store %arg9[%c0_10, %c0_11, %c0_12], %6 {strides = array<i32>} : memref<2x18x44xf32, #tpu.memory_space<vmem>>, vector<2x18x4xf32>,
    %c0_13 = arith.constant 0 : index
    %c0_14 = arith.constant 0 : index
    %c40 = arith.constant 40 : index
    %8 = vector.load %arg9[%c0_13, %c0_14, %c40] : memref<2x18x44xf32, #tpu.memory_space<vmem>>, vector<2x18x4xf32>
    tpu.vector_store %arg9[%c0_13, %c0_14, %c40], %6 {strides = array<i32>} : memref<2x18x44xf32, #tpu.memory_space<vmem>>, vector<2x18x4xf32>,
    %c0_15 = arith.constant 0 : index
    %c0_16 = arith.constant 0 : index
    %c0_17 = arith.constant 0 : index
    %9 = vector.load %arg1[%c0_15, %c0_16, %c0_17] : memref<1x16x64xf32, #tpu.memory_space<vmem>>, vector<1x16x64xf32>
    %10 = vector.shape_cast %9 : vector<1x16x64xf32> to vector<16x64xf32>
    %c0_18 = arith.constant 0 : index
    %c0_19 = arith.constant 0 : index
    %11 = vector.load %arg2[%c0_18, %c0_19] : memref<64x16xf32, #tpu.memory_space<vmem>>, vector<16x16xf32>
    %c16 = arith.constant 16 : index
    %c0_20 = arith.constant 0 : index
    %12 = vector.load %arg2[%c16, %c0_20] : memref<64x16xf32, #tpu.memory_space<vmem>>, vector<16x16xf32>
    %c32 = arith.constant 32 : index
    %c0_21 = arith.constant 0 : index
    %13 = vector.load %arg2[%c32, %c0_21] : memref<64x16xf32, #tpu.memory_space<vmem>>, vector<16x16xf32>
    %c48 = arith.constant 48 : index
    %c0_22 = arith.constant 0 : index
    %14 = vector.load %arg2[%c48, %c0_22] : memref<64x16xf32, #tpu.memory_space<vmem>>, vector<16x16xf32>
    %cst_23 = arith.constant dense<0.000000e+00> : vector<16x64xf32>
    %15 = tpu.matmul %11, %10, %cst_23 {dimension_numbers = #tpu.dot_dimension_numbers<[1], [0], [0], [1], [0, 0, 1, 1], [], []>} : vector<16x16xf32>, vector<16x64xf32>, vector<16x64xf32> -> vector<16x64xf32>
    %cst_24 = arith.constant dense<0.000000e+00> : vector<16x64xf32>
    %16 = tpu.matmul %12, %10, %cst_24 {dimension_numbers = #tpu.dot_dimension_numbers<[1], [0], [0], [1], [0, 0, 1, 1], [], []>} : vector<16x16xf32>, vector<16x64xf32>, vector<16x64xf32> -> vector<16x64xf32>
    %17 = tpu.concatenate %15, %16 in 1 : vector<16x64xf32>, vector<16x64xf32> -> vector<16x128xf32>
    %c0_25 = arith.constant 0 : index
    %c0_26 = arith.constant 0 : index
    %18 = vector.load %arg3[%c0_25, %c0_26] : memref<128x72xf32, #tpu.memory_space<vmem>>, vector<128x72xf32>
    %cst_27 = arith.constant dense<0.000000e+00> : vector<16x72xf32>
    %19 = tpu.matmul %17, %18, %cst_27 {dimension_numbers = #tpu.dot_dimension_numbers<[1], [0], [0], [1], [0, 0, 1, 1], [], []>} : vector<16x128xf32>, vector<128x72xf32>, vector<16x72xf32> -> vector<16x72xf32>
    %20 = vector.extract_strided_slice %19 {offsets = [0, 0], sizes = [16, 36], strides = [1, 1]} : vector<16x72xf32> to vector<16x36xf32>
    %c0_28 = arith.constant 0 : index
    %c1 = arith.constant 1 : index
    %c4 = arith.constant 4 : index
    %21 = vector.load %arg9[%c0_28, %c1, %c4] : memref<2x18x44xf32, #tpu.memory_space<vmem>>, vector<1x16x36xf32>
    %22 = vector.shape_cast %21 : vector<1x16x36xf32> to vector<16x36xf32>
    %23 = vector.shape_cast %20 : vector<16x36xf32> to vector<1x16x36xf32>
    tpu.vector_store %arg9[%c0_28, %c1, %c4], %23 {strides = array<i32>} : memref<2x18x44xf32, #tpu.memory_space<vmem>>, vector<1x16x36xf32>,
    %24 = vector.extract_strided_slice %19 {offsets = [0, 36], sizes = [16, 36], strides = [1, 1]} : vector<16x72xf32> to vector<16x36xf32>
    %c1_29 = arith.constant 1 : index
    %c1_30 = arith.constant 1 : index
    %c4_31 = arith.constant 4 : index
    %25 = vector.load %arg9[%c1_29, %c1_30, %c4_31] : memref<2x18x44xf32, #tpu.memory_space<vmem>>, vector<1x16x36xf32>
    %26 = vector.shape_cast %25 : vector<1x16x36xf32> to vector<16x36xf32>
    %27 = vector.shape_cast %24 : vector<16x36xf32> to vector<1x16x36xf32>
    tpu.vector_store %arg9[%c1_29, %c1_30, %c4_31], %27 {strides = array<i32>} : memref<2x18x44xf32, #tpu.memory_space<vmem>>, vector<1x16x36xf32>,
    %cst_32 = arith.constant 0.000000e+00 : f32
    %28 = vector.broadcast %cst_32 : f32 to vector<2x16x36xf32>
    %c0_33 = arith.constant 0 : index
    %c0_34 = arith.constant 0 : index
    %c0_35 = arith.constant 0 : index
    %29 = vector.load %arg9[%c0_33, %c0_34, %c0_35] : memref<2x18x44xf32, #tpu.memory_space<vmem>>, vector<2x16x36xf32>
    %c0_36 = arith.constant 0 : index
    %c0_37 = arith.constant 0 : index
    %c0_38 = arith.constant 0 : index
    %c0_39 = arith.constant 0 : index
    %30 = vector.load %arg4[%c0_36, %c0_37, %c0_38, %c0_39] : memref<20x2x1x36xf32, #tpu.memory_space<vmem>>, vector<1x2x1x36xf32>
    %31 = vector.shape_cast %30 : vector<1x2x1x36xf32> to vector<2x1x36xf32>
    %32 = vector.broadcast %31 : vector<2x1x36xf32> to vector<2x16x36xf32>
    %33 = arith.mulf %29, %32 : vector<2x16x36xf32>
    %34 = arith.addf %28, %33 : vector<2x16x36xf32>
    %c0_40 = arith.constant 0 : index
    %c0_41 = arith.constant 0 : index
    %c4_42 = arith.constant 4 : index
    %35 = vector.load %arg9[%c0_40, %c0_41, %c4_42] : memref<2x18x44xf32, #tpu.memory_space<vmem>>, vector<2x16x36xf32>
    %c1_43 = arith.constant 1 : index
    %c0_44 = arith.constant 0 : index
    %c0_45 = arith.constant 0 : index
    %c0_46 = arith.constant 0 : index
    %36 = vector.load %arg4[%c1_43, %c0_44, %c0_45, %c0_46] : memref<20x2x1x36xf32, #tpu.memory_space<vmem>>, vector<1x2x1x36xf32>
    %37 = vector.shape_cast %36 : vector<1x2x1x36xf32> to vector<2x1x36xf32>
    %38 = vector.broadcast %37 : vector<2x1x36xf32> to vector<2x16x36xf32>
    %39 = arith.mulf %35, %38 : vector<2x16x36xf32>
    %40 = arith.addf %34, %39 : vector<2x16x36xf32>
    %c0_47 = arith.constant 0 : index
    %c0_48 = arith.constant 0 : index
    %c8 = arith.constant 8 : index
    %41 = vector.load %arg9[%c0_47, %c0_48, %c8] : memref<2x18x44xf32, #tpu.memory_space<vmem>>, vector<2x16x36xf32>
    %c2 = arith.constant 2 : index
    %c0_49 = arith.constant 0 : index
    %c0_50 = arith.constant 0 : index
    %c0_51 = arith.constant 0 : index
    %42 = vector.load %arg4[%c2, %c0_49, %c0_50, %c0_51] : memref<20x2x1x36xf32, #tpu.memory_space<vmem>>, vector<1x2x1x36xf32>
    %43 = vector.shape_cast %42 : vector<1x2x1x36xf32> to vector<2x1x36xf32>
    %44 = vector.broadcast %43 : vector<2x1x36xf32> to vector<2x16x36xf32>
    %45 = arith.mulf %41, %44 : vector<2x16x36xf32>
    %46 = arith.addf %40, %45 : vector<2x16x36xf32>
    %c0_52 = arith.constant 0 : index
    %c1_53 = arith.constant 1 : index
    %c0_54 = arith.constant 0 : index
    %47 = vector.load %arg9[%c0_52, %c1_53, %c0_54] : memref<2x18x44xf32, #tpu.memory_space<vmem>>, vector<2x16x36xf32>
    %c3 = arith.constant 3 : index
    %c0_55 = arith.constant 0 : index
    %c0_56 = arith.constant 0 : index
    %c0_57 = arith.constant 0 : index
    %48 = vector.load %arg4[%c3, %c0_55, %c0_56, %c0_57] : memref<20x2x1x36xf32, #tpu.memory_space<vmem>>, vector<1x2x1x36xf32>
    %49 = vector.shape_cast %48 : vector<1x2x1x36xf32> to vector<2x1x36xf32>
    %50 = vector.broadcast %49 : vector<2x1x36xf32> to vector<2x16x36xf32>
    %51 = arith.mulf %47, %50 : vector<2x16x36xf32>
    %52 = arith.addf %46, %51 : vector<2x16x36xf32>
    %c0_58 = arith.constant 0 : index
    %c1_59 = arith.constant 1 : index
    %c4_60 = arith.constant 4 : index
    %53 = vector.load %arg9[%c0_58, %c1_59, %c4_60] : memref<2x18x44xf32, #tpu.memory_space<vmem>>, vector<2x16x36xf32>
    %c4_61 = arith.constant 4 : index
    %c0_62 = arith.constant 0 : index
    %c0_63 = arith.constant 0 : index
    %c0_64 = arith.constant 0 : index
    %54 = vector.load %arg4[%c4_61, %c0_62, %c0_63, %c0_64] : memref<20x2x1x36xf32, #tpu.memory_space<vmem>>, vector<1x2x1x36xf32>
    %55 = vector.shape_cast %54 : vector<1x2x1x36xf32> to vector<2x1x36xf32>
    %56 = vector.broadcast %55 : vector<2x1x36xf32> to vector<2x16x36xf32>
    %57 = arith.mulf %53, %56 : vector<2x16x36xf32>
    %58 = arith.addf %52, %57 : vector<2x16x36xf32>
    %c0_65 = arith.constant 0 : index
    %c1_66 = arith.constant 1 : index
    %c8_67 = arith.constant 8 : index
    %59 = vector.load %arg9[%c0_65, %c1_66, %c8_67] : memref<2x18x44xf32, #tpu.memory_space<vmem>>, vector<2x16x36xf32>
    %c5 = arith.constant 5 : index
    %c0_68 = arith.constant 0 : index
    %c0_69 = arith.constant 0 : index
    %c0_70 = arith.constant 0 : index
    %60 = vector.load %arg4[%c5, %c0_68, %c0_69, %c0_70] : memref<20x2x1x36xf32, #tpu.memory_space<vmem>>, vector<1x2x1x36xf32>
    %61 = vector.shape_cast %60 : vector<1x2x1x36xf32> to vector<2x1x36xf32>
    %62 = vector.broadcast %61 : vector<2x1x36xf32> to vector<2x16x36xf32>
    %63 = arith.mulf %59, %62 : vector<2x16x36xf32>
    %64 = arith.addf %58, %63 : vector<2x16x36xf32>
    %c0_71 = arith.constant 0 : index
    %c2_72 = arith.constant 2 : index
    %c0_73 = arith.constant 0 : index
    %65 = vector.load %arg9[%c0_71, %c2_72, %c0_73] : memref<2x18x44xf32, #tpu.memory_space<vmem>>, vector<2x16x36xf32>
    %c6 = arith.constant 6 : index
    %c0_74 = arith.constant 0 : index
    %c0_75 = arith.constant 0 : index
    %c0_76 = arith.constant 0 : index
    %66 = vector.load %arg4[%c6, %c0_74, %c0_75, %c0_76] : memref<20x2x1x36xf32, #tpu.memory_space<vmem>>, vector<1x2x1x36xf32>
    %67 = vector.shape_cast %66 : vector<1x2x1x36xf32> to vector<2x1x36xf32>
    %68 = vector.broadcast %67 : vector<2x1x36xf32> to vector<2x16x36xf32>
    %69 = arith.mulf %65, %68 : vector<2x16x36xf32>
    %70 = arith.addf %64, %69 : vector<2x16x36xf32>
    %c0_77 = arith.constant 0 : index
    %c2_78 = arith.constant 2 : index
    %c4_79 = arith.constant 4 : index
    %71 = vector.load %arg9[%c0_77, %c2_78, %c4_79] : memref<2x18x44xf32, #tpu.memory_space<vmem>>, vector<2x16x36xf32>
    %c7 = arith.constant 7 : index
    %c0_80 = arith.constant 0 : index
    %c0_81 = arith.constant 0 : index
    %c0_82 = arith.constant 0 : index
    %72 = vector.load %arg4[%c7, %c0_80, %c0_81, %c0_82] : memref<20x2x1x36xf32, #tpu.memory_space<vmem>>, vector<1x2x1x36xf32>
    %73 = vector.shape_cast %72 : vector<1x2x1x36xf32> to vector<2x1x36xf32>
    %74 = vector.broadcast %73 : vector<2x1x36xf32> to vector<2x16x36xf32>
    %75 = arith.mulf %71, %74 : vector<2x16x36xf32>
    %76 = arith.addf %70, %75 : vector<2x16x36xf32>
    %c0_83 = arith.constant 0 : index
    %c2_84 = arith.constant 2 : index
    %c8_85 = arith.constant 8 : index
    %77 = vector.load %arg9[%c0_83, %c2_84, %c8_85] : memref<2x18x44xf32, #tpu.memory_space<vmem>>, vector<2x16x36xf32>
    %c8_86 = arith.constant 8 : index
    %c0_87 = arith.constant 0 : index
    %c0_88 = arith.constant 0 : index
    %c0_89 = arith.constant 0 : index
    %78 = vector.load %arg4[%c8_86, %c0_87, %c0_88, %c0_89] : memref<20x2x1x36xf32, #tpu.memory_space<vmem>>, vector<1x2x1x36xf32>
    %79 = vector.shape_cast %78 : vector<1x2x1x36xf32> to vector<2x1x36xf32>
    %80 = vector.broadcast %79 : vector<2x1x36xf32> to vector<2x16x36xf32>
    %81 = arith.mulf %77, %80 : vector<2x16x36xf32>
    %82 = arith.addf %76, %81 : vector<2x16x36xf32>
    %c18 = arith.constant 18 : index
    %c0_90 = arith.constant 0 : index
    %c0_91 = arith.constant 0 : index
    %c0_92 = arith.constant 0 : index
    %83 = vector.load %arg4[%c18, %c0_90, %c0_91, %c0_92] : memref<20x2x1x36xf32, #tpu.memory_space<vmem>>, vector<1x2x1x36xf32>
    %84 = vector.shape_cast %83 : vector<1x2x1x36xf32> to vector<2x1x36xf32>
    %85 = vector.broadcast %84 : vector<2x1x36xf32> to vector<2x16x36xf32>
    %86 = arith.addf %82, %85 : vector<2x16x36xf32>
    %cst_93 = arith.constant 0.000000e+00 : f32
    %87 = vector.broadcast %cst_93 : f32 to vector<2x16x36xf32>
    %88 = arith.cmpf oge, %86, %87 : vector<2x16x36xf32>
    %cst_94 = arith.constant 1.000000e-01 : f32
    %89 = vector.broadcast %cst_94 : f32 to vector<2x16x36xf32>
    %90 = arith.mulf %89, %86 : vector<2x16x36xf32>
    %91 = arith.select %88, %86, %90 : vector<2x16x36xi1>, vector<2x16x36xf32>
    %c0_95 = arith.constant 0 : index
    %c1_96 = arith.constant 1 : index
    %c4_97 = arith.constant 4 : index
    %92 = vector.load %arg9[%c0_95, %c1_96, %c4_97] : memref<2x18x44xf32, #tpu.memory_space<vmem>>, vector<2x16x36xf32>
    tpu.vector_store %arg9[%c0_95, %c1_96, %c4_97], %91 {strides = array<i32>} : memref<2x18x44xf32, #tpu.memory_space<vmem>>, vector<2x16x36xf32>,
    %cst_98 = arith.constant 0.000000e+00 : f32
    %93 = vector.broadcast %cst_98 : f32 to vector<2x16x36xf32>
    %c0_99 = arith.constant 0 : index
    %c0_100 = arith.constant 0 : index
    %c0_101 = arith.constant 0 : index
    %94 = vector.load %arg9[%c0_99, %c0_100, %c0_101] : memref<2x18x44xf32, #tpu.memory_space<vmem>>, vector<2x16x36xf32>
    %c9 = arith.constant 9 : index
    %c0_102 = arith.constant 0 : index
    %c0_103 = arith.constant 0 : index
    %c0_104 = arith.constant 0 : index
    %95 = vector.load %arg4[%c9, %c0_102, %c0_103, %c0_104] : memref<20x2x1x36xf32, #tpu.memory_space<vmem>>, vector<1x2x1x36xf32>
    %96 = vector.shape_cast %95 : vector<1x2x1x36xf32> to vector<2x1x36xf32>
    %97 = vector.broadcast %96 : vector<2x1x36xf32> to vector<2x16x36xf32>
    %98 = arith.mulf %94, %97 : vector<2x16x36xf32>
    %99 = arith.addf %93, %98 : vector<2x16x36xf32>
    %c0_105 = arith.constant 0 : index
    %c0_106 = arith.constant 0 : index
    %c4_107 = arith.constant 4 : index
    %100 = vector.load %arg9[%c0_105, %c0_106, %c4_107] : memref<2x18x44xf32, #tpu.memory_space<vmem>>, vector<2x16x36xf32>
    %c10 = arith.constant 10 : index
    %c0_108 = arith.constant 0 : index
    %c0_109 = arith.constant 0 : index
    %c0_110 = arith.constant 0 : index
    %101 = vector.load %arg4[%c10, %c0_108, %c0_109, %c0_110] : memref<20x2x1x36xf32, #tpu.memory_space<vmem>>, vector<1x2x1x36xf32>
    %102 = vector.shape_cast %101 : vector<1x2x1x36xf32> to vector<2x1x36xf32>
    %103 = vector.broadcast %102 : vector<2x1x36xf32> to vector<2x16x36xf32>
    %104 = arith.mulf %100, %103 : vector<2x16x36xf32>
    %105 = arith.addf %99, %104 : vector<2x16x36xf32>
    %c0_111 = arith.constant 0 : index
    %c0_112 = arith.constant 0 : index
    %c8_113 = arith.constant 8 : index
    %106 = vector.load %arg9[%c0_111, %c0_112, %c8_113] : memref<2x18x44xf32, #tpu.memory_space<vmem>>, vector<2x16x36xf32>
    %c11 = arith.constant 11 : index
    %c0_114 = arith.constant 0 : index
    %c0_115 = arith.constant 0 : index
    %c0_116 = arith.constant 0 : index
    %107 = vector.load %arg4[%c11, %c0_114, %c0_115, %c0_116] : memref<20x2x1x36xf32, #tpu.memory_space<vmem>>, vector<1x2x1x36xf32>
    %108 = vector.shape_cast %107 : vector<1x2x1x36xf32> to vector<2x1x36xf32>
    %109 = vector.broadcast %108 : vector<2x1x36xf32> to vector<2x16x36xf32>
    %110 = arith.mulf %106, %109 : vector<2x16x36xf32>
    %111 = arith.addf %105, %110 : vector<2x16x36xf32>
    %c0_117 = arith.constant 0 : index
    %c1_118 = arith.constant 1 : index
    %c0_119 = arith.constant 0 : index
    %112 = vector.load %arg9[%c0_117, %c1_118, %c0_119] : memref<2x18x44xf32, #tpu.memory_space<vmem>>, vector<2x16x36xf32>
    %c12 = arith.constant 12 : index
    %c0_120 = arith.constant 0 : index
    %c0_121 = arith.constant 0 : index
    %c0_122 = arith.constant 0 : index
    %113 = vector.load %arg4[%c12, %c0_120, %c0_121, %c0_122] : memref<20x2x1x36xf32, #tpu.memory_space<vmem>>, vector<1x2x1x36xf32>
    %114 = vector.shape_cast %113 : vector<1x2x1x36xf32> to vector<2x1x36xf32>
    %115 = vector.broadcast %114 : vector<2x1x36xf32> to vector<2x16x36xf32>
    %116 = arith.mulf %112, %115 : vector<2x16x36xf32>
    %117 = arith.addf %111, %116 : vector<2x16x36xf32>
    %c0_123 = arith.constant 0 : index
    %c1_124 = arith.constant 1 : index
    %c4_125 = arith.constant 4 : index
    %118 = vector.load %arg9[%c0_123, %c1_124, %c4_125] : memref<2x18x44xf32, #tpu.memory_space<vmem>>, vector<2x16x36xf32>
    %c13 = arith.constant 13 : index
    %c0_126 = arith.constant 0 : index
    %c0_127 = arith.constant 0 : index
    %c0_128 = arith.constant 0 : index
    %119 = vector.load %arg4[%c13, %c0_126, %c0_127, %c0_128] : memref<20x2x1x36xf32, #tpu.memory_space<vmem>>, vector<1x2x1x36xf32>
    %120 = vector.shape_cast %119 : vector<1x2x1x36xf32> to vector<2x1x36xf32>
    %121 = vector.broadcast %120 : vector<2x1x36xf32> to vector<2x16x36xf32>
    %122 = arith.mulf %118, %121 : vector<2x16x36xf32>
    %123 = arith.addf %117, %122 : vector<2x16x36xf32>
    %c0_129 = arith.constant 0 : index
    %c1_130 = arith.constant 1 : index
    %c8_131 = arith.constant 8 : index
    %124 = vector.load %arg9[%c0_129, %c1_130, %c8_131] : memref<2x18x44xf32, #tpu.memory_space<vmem>>, vector<2x16x36xf32>
    %c14 = arith.constant 14 : index
    %c0_132 = arith.constant 0 : index
    %c0_133 = arith.constant 0 : index
    %c0_134 = arith.constant 0 : index
    %125 = vector.load %arg4[%c14, %c0_132, %c0_133, %c0_134] : memref<20x2x1x36xf32, #tpu.memory_space<vmem>>, vector<1x2x1x36xf32>
    %126 = vector.shape_cast %125 : vector<1x2x1x36xf32> to vector<2x1x36xf32>
    %127 = vector.broadcast %126 : vector<2x1x36xf32> to vector<2x16x36xf32>
    %128 = arith.mulf %124, %127 : vector<2x16x36xf32>
    %129 = arith.addf %123, %128 : vector<2x16x36xf32>
    %c0_135 = arith.constant 0 : index
    %c2_136 = arith.constant 2 : index
    %c0_137 = arith.constant 0 : index
    %130 = vector.load %arg9[%c0_135, %c2_136, %c0_137] : memref<2x18x44xf32, #tpu.memory_space<vmem>>, vector<2x16x36xf32>
    %c15 = arith.constant 15 : index
    %c0_138 = arith.constant 0 : index
    %c0_139 = arith.constant 0 : index
    %c0_140 = arith.constant 0 : index
    %131 = vector.load %arg4[%c15, %c0_138, %c0_139, %c0_140] : memref<20x2x1x36xf32, #tpu.memory_space<vmem>>, vector<1x2x1x36xf32>
    %132 = vector.shape_cast %131 : vector<1x2x1x36xf32> to vector<2x1x36xf32>
    %133 = vector.broadcast %132 : vector<2x1x36xf32> to vector<2x16x36xf32>
    %134 = arith.mulf %130, %133 : vector<2x16x36xf32>
    %135 = arith.addf %129, %134 : vector<2x16x36xf32>
    %c0_141 = arith.constant 0 : index
    %c2_142 = arith.constant 2 : index
    %c4_143 = arith.constant 4 : index
    %136 = vector.load %arg9[%c0_141, %c2_142, %c4_143] : memref<2x18x44xf32, #tpu.memory_space<vmem>>, vector<2x16x36xf32>
    %c16_144 = arith.constant 16 : index
    %c0_145 = arith.constant 0 : index
    %c0_146 = arith.constant 0 : index
    %c0_147 = arith.constant 0 : index
    %137 = vector.load %arg4[%c16_144, %c0_145, %c0_146, %c0_147] : memref<20x2x1x36xf32, #tpu.memory_space<vmem>>, vector<1x2x1x36xf32>
    %138 = vector.shape_cast %137 : vector<1x2x1x36xf32> to vector<2x1x36xf32>
    %139 = vector.broadcast %138 : vector<2x1x36xf32> to vector<2x16x36xf32>
    %140 = arith.mulf %136, %139 : vector<2x16x36xf32>
    %141 = arith.addf %135, %140 : vector<2x16x36xf32>
    %c0_148 = arith.constant 0 : index
    %c2_149 = arith.constant 2 : index
    %c8_150 = arith.constant 8 : index
    %142 = vector.load %arg9[%c0_148, %c2_149, %c8_150] : memref<2x18x44xf32, #tpu.memory_space<vmem>>, vector<2x16x36xf32>
    %c17_151 = arith.constant 17 : index
    %c0_152 = arith.constant 0 : index
    %c0_153 = arith.constant 0 : index
    %c0_154 = arith.constant 0 : index
    %143 = vector.load %arg4[%c17_151, %c0_152, %c0_153, %c0_154] : memref<20x2x1x36xf32, #tpu.memory_space<vmem>>, vector<1x2x1x36xf32>
    %144 = vector.shape_cast %143 : vector<1x2x1x36xf32> to vector<2x1x36xf32>
    %145 = vector.broadcast %144 : vector<2x1x36xf32> to vector<2x16x36xf32>
    %146 = arith.mulf %142, %145 : vector<2x16x36xf32>
    %147 = arith.addf %141, %146 : vector<2x16x36xf32>
    %c19 = arith.constant 19 : index
    %c0_155 = arith.constant 0 : index
    %c0_156 = arith.constant 0 : index
    %c0_157 = arith.constant 0 : index
    %148 = vector.load %arg4[%c19, %c0_155, %c0_156, %c0_157] : memref<20x2x1x36xf32, #tpu.memory_space<vmem>>, vector<1x2x1x36xf32>
    %149 = vector.shape_cast %148 : vector<1x2x1x36xf32> to vector<2x1x36xf32>
    %150 = vector.broadcast %149 : vector<2x1x36xf32> to vector<2x16x36xf32>
    %151 = arith.addf %147, %150 : vector<2x16x36xf32>
    %152 = vector.extract_strided_slice %151 {offsets = [0, 0, 0], sizes = [1, 16, 36], strides = [1, 1, 1]} : vector<2x16x36xf32> to vector<1x16x36xf32>
    %153 = vector.shape_cast %152 : vector<1x16x36xf32> to vector<16x36xf32>
    %154 = vector.extract_strided_slice %151 {offsets = [1, 0, 0], sizes = [1, 16, 36], strides = [1, 1, 1]} : vector<2x16x36xf32> to vector<1x16x36xf32>
    %155 = vector.shape_cast %154 : vector<1x16x36xf32> to vector<16x36xf32>
    %cst_158 = arith.constant dense<0.000000e+00> : vector<16x36xf32>
    %156 = tpu.matmul %13, %153, %cst_158 {dimension_numbers = #tpu.dot_dimension_numbers<[1], [0], [0], [1], [0, 0, 1, 1], [], []>} : vector<16x16xf32>, vector<16x36xf32>, vector<16x36xf32> -> vector<16x36xf32>
    %cst_159 = arith.constant dense<0.000000e+00> : vector<16x36xf32>
    %157 = tpu.matmul %14, %155, %cst_159 {dimension_numbers = #tpu.dot_dimension_numbers<[1], [0], [0], [1], [0, 0, 1, 1], [], []>} : vector<16x16xf32>, vector<16x36xf32>, vector<16x36xf32> -> vector<16x36xf32>
    %158 = arith.subf %156, %157 : vector<16x36xf32>
    %cst_160 = arith.constant dense<0.000000e+00> : vector<16x36xf32>
    %159 = tpu.matmul %14, %153, %cst_160 {dimension_numbers = #tpu.dot_dimension_numbers<[1], [0], [0], [1], [0, 0, 1, 1], [], []>} : vector<16x16xf32>, vector<16x36xf32>, vector<16x36xf32> -> vector<16x36xf32>
    %cst_161 = arith.constant dense<0.000000e+00> : vector<16x36xf32>
    %160 = tpu.matmul %13, %155, %cst_161 {dimension_numbers = #tpu.dot_dimension_numbers<[1], [0], [0], [1], [0, 0, 1, 1], [], []>} : vector<16x16xf32>, vector<16x36xf32>, vector<16x36xf32> -> vector<16x36xf32>
    %161 = arith.addf %159, %160 : vector<16x36xf32>
    %162 = tpu.concatenate %158, %161 in 1 : vector<16x36xf32>, vector<16x36xf32> -> vector<16x72xf32>
    %c0_162 = arith.constant 0 : index
    %c0_163 = arith.constant 0 : index
    %163 = vector.load %arg6[%c0_162, %c0_163] : memref<1048x64xf32, #tpu.memory_space<vmem>>, vector<72x64xf32>
    %cst_164 = arith.constant dense<0.000000e+00> : vector<16x64xf32>
    %164 = tpu.matmul %162, %163, %cst_164 {dimension_numbers = #tpu.dot_dimension_numbers<[1], [0], [0], [1], [0, 0, 1, 1], [], []>} : vector<16x72xf32>, vector<72x64xf32>, vector<16x64xf32> -> vector<16x64xf32>
    %c224 = arith.constant 224 : index
    %c0_165 = arith.constant 0 : index
    %165 = vector.load %arg5[%c224, %c0_165] : memref<392x32xf32, #tpu.memory_space<vmem>>, vector<64x32xf32>
    %c288 = arith.constant 288 : index
    %c0_166 = arith.constant 0 : index
    %166 = vector.load %arg5[%c288, %c0_166] : memref<392x32xf32, #tpu.memory_space<vmem>>, vector<64x32xf32>
    %cst_167 = arith.constant dense<0.000000e+00> : vector<16x32xf32>
    %167 = tpu.matmul %10, %165, %cst_167 {dimension_numbers = #tpu.dot_dimension_numbers<[1], [0], [0], [1], [0, 0, 1, 1], [], []>} : vector<16x64xf32>, vector<64x32xf32>, vector<16x32xf32> -> vector<16x32xf32>
    %cst_168 = arith.constant dense<0.000000e+00> : vector<16x32xf32>
    %168 = tpu.matmul %10, %166, %cst_168 {dimension_numbers = #tpu.dot_dimension_numbers<[1], [0], [0], [1], [0, 0, 1, 1], [], []>} : vector<16x64xf32>, vector<64x32xf32>, vector<16x32xf32> -> vector<16x32xf32>
    %c384 = arith.constant 384 : index
    %c0_169 = arith.constant 0 : index
    %169 = vector.load %arg5[%c384, %c0_169] : memref<392x32xf32, #tpu.memory_space<vmem>>, vector<5x32xf32>
    %170 = vector.extract_strided_slice %169 {offsets = [0, 0], sizes = [1, 32], strides = [1, 1]} : vector<5x32xf32> to vector<1x32xf32>
    %c1_170 = arith.constant 1 : index
    %c0_171 = arith.constant 0 : index
    %171 = vector.load %arg8[%c1_170, %c0_171] : memref<18x64xf32, #tpu.memory_space<vmem>>, vector<16x32xf32>
    tpu.vector_store %arg8[%c1_170, %c0_171], %168 {strides = array<i32>} : memref<18x64xf32, #tpu.memory_space<vmem>>, vector<16x32xf32>,
    %c0_172 = arith.constant 0 : index
    %c0_173 = arith.constant 0 : index
    %172 = vector.load %arg5[%c0_172, %c0_173] : memref<392x32xf32, #tpu.memory_space<vmem>>, vector<32x32xf32>
    %c0_174 = arith.constant 0 : index
    %c0_175 = arith.constant 0 : index
    %173 = vector.load %arg8[%c0_174, %c0_175] : memref<18x64xf32, #tpu.memory_space<vmem>>, vector<16x32xf32>
    %cst_176 = arith.constant dense<0.000000e+00> : vector<16x32xf32>
    %174 = tpu.matmul %173, %172, %cst_176 {dimension_numbers = #tpu.dot_dimension_numbers<[1], [0], [0], [1], [0, 0, 1, 1], [], []>} : vector<16x32xf32>, vector<32x32xf32>, vector<16x32xf32> -> vector<16x32xf32>
    %175 = vector.broadcast %170 : vector<1x32xf32> to vector<16x32xf32>
    %176 = arith.addf %175, %174 : vector<16x32xf32>
    %c32_177 = arith.constant 32 : index
    %c0_178 = arith.constant 0 : index
    %177 = vector.load %arg5[%c32_177, %c0_178] : memref<392x32xf32, #tpu.memory_space<vmem>>, vector<32x32xf32>
    %c1_179 = arith.constant 1 : index
    %c0_180 = arith.constant 0 : index
    %178 = vector.load %arg8[%c1_179, %c0_180] : memref<18x64xf32, #tpu.memory_space<vmem>>, vector<16x32xf32>
    %cst_181 = arith.constant dense<0.000000e+00> : vector<16x32xf32>
    %179 = tpu.matmul %178, %177, %cst_181 {dimension_numbers = #tpu.dot_dimension_numbers<[1], [0], [0], [1], [0, 0, 1, 1], [], []>} : vector<16x32xf32>, vector<32x32xf32>, vector<16x32xf32> -> vector<16x32xf32>
    %180 = arith.addf %176, %179 : vector<16x32xf32>
    %c64 = arith.constant 64 : index
    %c0_182 = arith.constant 0 : index
    %181 = vector.load %arg5[%c64, %c0_182] : memref<392x32xf32, #tpu.memory_space<vmem>>, vector<32x32xf32>
    %c2_183 = arith.constant 2 : index
    %c0_184 = arith.constant 0 : index
    %182 = vector.load %arg8[%c2_183, %c0_184] : memref<18x64xf32, #tpu.memory_space<vmem>>, vector<16x32xf32>
    %cst_185 = arith.constant dense<0.000000e+00> : vector<16x32xf32>
    %183 = tpu.matmul %182, %181, %cst_185 {dimension_numbers = #tpu.dot_dimension_numbers<[1], [0], [0], [1], [0, 0, 1, 1], [], []>} : vector<16x32xf32>, vector<32x32xf32>, vector<16x32xf32> -> vector<16x32xf32>
    %184 = arith.addf %180, %183 : vector<16x32xf32>
    %c352 = arith.constant 352 : index
    %c0_186 = arith.constant 0 : index
    %185 = vector.load %arg5[%c352, %c0_186] : memref<392x32xf32, #tpu.memory_space<vmem>>, vector<32x32xf32>
    %cst_187 = arith.constant dense<0.000000e+00> : vector<16x32xf32>
    %186 = tpu.matmul %184, %185, %cst_187 {dimension_numbers = #tpu.dot_dimension_numbers<[1], [0], [0], [1], [0, 0, 1, 1], [], []>} : vector<16x32xf32>, vector<32x32xf32>, vector<16x32xf32> -> vector<16x32xf32>
    %cst_188 = arith.constant dense<0.000000e+00> : vector<32xf32>
    %187 = vector.multi_reduction <add>, %186, %cst_188 [0] : vector<16x32xf32> to vector<32xf32>
    %188 = vector.shape_cast %187 : vector<32xf32> to vector<1x32xf32>
    %cst_189 = arith.constant 1.600000e+01 : f32
    %189 = vector.broadcast %cst_189 : f32 to vector<1x32xf32>
    %190 = arith.divf %188, %189 : vector<1x32xf32>
    %191 = arith.mulf %184, %184 : vector<16x32xf32>
    %cst_190 = arith.constant dense<0.000000e+00> : vector<16x32xf32>
    %192 = tpu.matmul %191, %185, %cst_190 {dimension_numbers = #tpu.dot_dimension_numbers<[1], [0], [0], [1], [0, 0, 1, 1], [], []>} : vector<16x32xf32>, vector<32x32xf32>, vector<16x32xf32> -> vector<16x32xf32>
    %cst_191 = arith.constant dense<0.000000e+00> : vector<32xf32>
    %193 = vector.multi_reduction <add>, %192, %cst_191 [0] : vector<16x32xf32> to vector<32xf32>
    %194 = vector.shape_cast %193 : vector<32xf32> to vector<1x32xf32>
    %cst_192 = arith.constant 1.600000e+01 : f32
    %195 = vector.broadcast %cst_192 : f32 to vector<1x32xf32>
    %196 = arith.divf %194, %195 : vector<1x32xf32>
    %197 = arith.mulf %190, %190 : vector<1x32xf32>
    %198 = arith.subf %196, %197 : vector<1x32xf32>
    %cst_193 = arith.constant 9.99999974E-6 : f32
    %199 = vector.broadcast %cst_193 : f32 to vector<1x32xf32>
    %200 = arith.addf %198, %199 : vector<1x32xf32>
    %201 = math.rsqrt %200 : vector<1x32xf32>
    %202 = vector.broadcast %190 : vector<1x32xf32> to vector<16x32xf32>
    %203 = arith.subf %184, %202 : vector<16x32xf32>
    %204 = vector.broadcast %201 : vector<1x32xf32> to vector<16x32xf32>
    %205 = arith.mulf %203, %204 : vector<16x32xf32>
    %206 = vector.extract_strided_slice %169 {offsets = [3, 0], sizes = [1, 32], strides = [1, 1]} : vector<5x32xf32> to vector<1x32xf32>
    %207 = vector.broadcast %206 : vector<1x32xf32> to vector<16x32xf32>
    %208 = arith.mulf %205, %207 : vector<16x32xf32>
    %209 = vector.extract_strided_slice %169 {offsets = [4, 0], sizes = [1, 32], strides = [1, 1]} : vector<5x32xf32> to vector<1x32xf32>
    %210 = vector.broadcast %209 : vector<1x32xf32> to vector<16x32xf32>
    %211 = arith.addf %208, %210 : vector<16x32xf32>
    %212 = tpu.iota {dimensions = array<i32: 1>} : vector<16x32xi32>
    %c2_i32 = arith.constant 2 : i32
    %c0_i32 = arith.constant 0 : i32
    %213 = arith.cmpi eq, %c2_i32, %c0_i32 : i32
    %c1_i32 = arith.constant 1 : i32
    %214 = arith.select %213, %c1_i32, %c2_i32 : i32
    %215 = vector.broadcast %214 : i32 to vector<16x32xi32>
    %216 = arith.remsi %212, %215 : vector<16x32xi32>
    %c0_i32_194 = arith.constant 0 : i32
    %217 = vector.broadcast %c0_i32_194 : i32 to vector<16x32xi32>
    %218 = arith.cmpi ne, %216, %217 : vector<16x32xi32>
    %c0_i32_195 = arith.constant 0 : i32
    %219 = vector.broadcast %c0_i32_195 : i32 to vector<16x32xi32>
    %220 = arith.cmpi slt, %216, %219 : vector<16x32xi32>
    %c0_i32_196 = arith.constant 0 : i32
    %221 = arith.cmpi slt, %214, %c0_i32_196 : i32
    %222 = vector.broadcast %221 : i1 to vector<16x32xi1>
    %223 = vector.broadcast %222 : vector<16x32xi1> to vector<16x32xi1>
    %224 = arith.xori %220, %223 : vector<16x32xi1>
    %225 = arith.andi %224, %218 : vector<16x32xi1>
    %226 = vector.broadcast %214 : i32 to vector<16x32xi32>
    %227 = arith.addi %216, %226 : vector<16x32xi32>
    %228 = arith.select %225, %227, %216 : vector<16x32xi1>, vector<16x32xi32>
    %c1_i32_197 = arith.constant 1 : i32
    %229 = vector.broadcast %c1_i32_197 : i32 to vector<16x32xi32>
    %230 = arith.cmpi slt, %228, %229 : vector<16x32xi32>
    %231 = arith.select %230, %211, %184 : vector<16x32xi1>, vector<16x32xf32>
    %cst_198 = arith.constant 0.000000e+00 : f32
    %232 = vector.broadcast %cst_198 : f32 to vector<16x32xf32>
    %233 = arith.cmpf oge, %231, %232 : vector<16x32xf32>
    %cst_199 = arith.constant 1.000000e-01 : f32
    %234 = vector.broadcast %cst_199 : f32 to vector<16x32xf32>
    %235 = arith.mulf %234, %231 : vector<16x32xf32>
    %236 = arith.select %233, %231, %235 : vector<16x32xi1>, vector<16x32xf32>
    %237 = vector.extract_strided_slice %169 {offsets = [1, 0], sizes = [1, 32], strides = [1, 1]} : vector<5x32xf32> to vector<1x32xf32>
    %c1_200 = arith.constant 1 : index
    %c0_201 = arith.constant 0 : index
    %238 = vector.load %arg8[%c1_200, %c0_201] : memref<18x64xf32, #tpu.memory_space<vmem>>, vector<16x32xf32>
    tpu.vector_store %arg8[%c1_200, %c0_201], %236 {strides = array<i32>} : memref<18x64xf32, #tpu.memory_space<vmem>>, vector<16x32xf32>,
    %c96 = arith.constant 96 : index
    %c0_202 = arith.constant 0 : index
    %239 = vector.load %arg5[%c96, %c0_202] : memref<392x32xf32, #tpu.memory_space<vmem>>, vector<32x32xf32>
    %c0_203 = arith.constant 0 : index
    %c0_204 = arith.constant 0 : index
    %240 = vector.load %arg8[%c0_203, %c0_204] : memref<18x64xf32, #tpu.memory_space<vmem>>, vector<16x32xf32>
    %cst_205 = arith.constant dense<0.000000e+00> : vector<16x32xf32>
    %241 = tpu.matmul %240, %239, %cst_205 {dimension_numbers = #tpu.dot_dimension_numbers<[1], [0], [0], [1], [0, 0, 1, 1], [], []>} : vector<16x32xf32>, vector<32x32xf32>, vector<16x32xf32> -> vector<16x32xf32>
    %242 = vector.broadcast %237 : vector<1x32xf32> to vector<16x32xf32>
    %243 = arith.addf %242, %241 : vector<16x32xf32>
    %c128 = arith.constant 128 : index
    %c0_206 = arith.constant 0 : index
    %244 = vector.load %arg5[%c128, %c0_206] : memref<392x32xf32, #tpu.memory_space<vmem>>, vector<32x32xf32>
    %c1_207 = arith.constant 1 : index
    %c0_208 = arith.constant 0 : index
    %245 = vector.load %arg8[%c1_207, %c0_208] : memref<18x64xf32, #tpu.memory_space<vmem>>, vector<16x32xf32>
    %cst_209 = arith.constant dense<0.000000e+00> : vector<16x32xf32>
    %246 = tpu.matmul %245, %244, %cst_209 {dimension_numbers = #tpu.dot_dimension_numbers<[1], [0], [0], [1], [0, 0, 1, 1], [], []>} : vector<16x32xf32>, vector<32x32xf32>, vector<16x32xf32> -> vector<16x32xf32>
    %247 = arith.addf %243, %246 : vector<16x32xf32>
    %c160 = arith.constant 160 : index
    %c0_210 = arith.constant 0 : index
    %248 = vector.load %arg5[%c160, %c0_210] : memref<392x32xf32, #tpu.memory_space<vmem>>, vector<32x32xf32>
    %c2_211 = arith.constant 2 : index
    %c0_212 = arith.constant 0 : index
    %249 = vector.load %arg8[%c2_211, %c0_212] : memref<18x64xf32, #tpu.memory_space<vmem>>, vector<16x32xf32>
    %cst_213 = arith.constant dense<0.000000e+00> : vector<16x32xf32>
    %250 = tpu.matmul %249, %248, %cst_213 {dimension_numbers = #tpu.dot_dimension_numbers<[1], [0], [0], [1], [0, 0, 1, 1], [], []>} : vector<16x32xf32>, vector<32x32xf32>, vector<16x32xf32> -> vector<16x32xf32>
    %251 = arith.addf %247, %250 : vector<16x32xf32>
    %cst_214 = arith.constant 0.000000e+00 : f32
    %252 = vector.broadcast %cst_214 : f32 to vector<16x32xf32>
    %253 = arith.cmpf oge, %251, %252 : vector<16x32xf32>
    %cst_215 = arith.constant 1.000000e-01 : f32
    %254 = vector.broadcast %cst_215 : f32 to vector<16x32xf32>
    %255 = arith.mulf %254, %251 : vector<16x32xf32>
    %256 = arith.select %253, %251, %255 : vector<16x32xi1>, vector<16x32xf32>
    %c192 = arith.constant 192 : index
    %c0_216 = arith.constant 0 : index
    %257 = vector.load %arg5[%c192, %c0_216] : memref<392x32xf32, #tpu.memory_space<vmem>>, vector<32x32xf32>
    %cst_217 = arith.constant dense<0.000000e+00> : vector<16x32xf32>
    %258 = tpu.matmul %168, %257, %cst_217 {dimension_numbers = #tpu.dot_dimension_numbers<[1], [0], [0], [1], [0, 0, 1, 1], [], []>} : vector<16x32xf32>, vector<32x32xf32>, vector<16x32xf32> -> vector<16x32xf32>
    %259 = vector.extract_strided_slice %169 {offsets = [2, 0], sizes = [1, 32], strides = [1, 1]} : vector<5x32xf32> to vector<1x32xf32>
    %260 = vector.broadcast %259 : vector<1x32xf32> to vector<16x32xf32>
    %261 = arith.addf %258, %260 : vector<16x32xf32>
    %262 = arith.addf %256, %261 : vector<16x32xf32>
    %263 = arith.addf %167, %262 : vector<16x32xf32>
    %c1032 = arith.constant 1032 : index
    %c0_218 = arith.constant 0 : index
    %264 = vector.load %arg6[%c1032, %c0_218] : memref<1048x64xf32, #tpu.memory_space<vmem>>, vector<5x64xf32>
    %265 = vector.extract_strided_slice %264 {offsets = [0, 0], sizes = [1, 64], strides = [1, 1]} : vector<5x64xf32> to vector<1x64xf32>
    %c1_219 = arith.constant 1 : index
    %c0_220 = arith.constant 0 : index
    %266 = vector.load %arg8[%c1_219, %c0_220] : memref<18x64xf32, #tpu.memory_space<vmem>>, vector<16x32xf32>
    tpu.vector_store %arg8[%c1_219, %c0_220], %263 {strides = array<i32>} : memref<18x64xf32, #tpu.memory_space<vmem>>, vector<16x32xf32>,
    %c72 = arith.constant 72 : index
    %c0_221 = arith.constant 0 : index
    %267 = vector.load %arg6[%c72, %c0_221] : memref<1048x64xf32, #tpu.memory_space<vmem>>, vector<32x64xf32>
    %c0_222 = arith.constant 0 : index
    %c0_223 = arith.constant 0 : index
    %268 = vector.load %arg8[%c0_222, %c0_223] : memref<18x64xf32, #tpu.memory_space<vmem>>, vector<16x32xf32>
    %cst_224 = arith.constant dense<0.000000e+00> : vector<16x64xf32>
    %269 = tpu.matmul %268, %267, %cst_224 {dimension_numbers = #tpu.dot_dimension_numbers<[1], [0], [0], [1], [0, 0, 1, 1], [], []>} : vector<16x32xf32>, vector<32x64xf32>, vector<16x64xf32> -> vector<16x64xf32>
    %270 = vector.broadcast %265 : vector<1x64xf32> to vector<16x64xf32>
    %271 = arith.addf %270, %269 : vector<16x64xf32>
    %c104 = arith.constant 104 : index
    %c0_225 = arith.constant 0 : index
    %272 = vector.load %arg6[%c104, %c0_225] : memref<1048x64xf32, #tpu.memory_space<vmem>>, vector<32x64xf32>
    %c1_226 = arith.constant 1 : index
    %c0_227 = arith.constant 0 : index
    %273 = vector.load %arg8[%c1_226, %c0_227] : memref<18x64xf32, #tpu.memory_space<vmem>>, vector<16x32xf32>
    %cst_228 = arith.constant dense<0.000000e+00> : vector<16x64xf32>
    %274 = tpu.matmul %273, %272, %cst_228 {dimension_numbers = #tpu.dot_dimension_numbers<[1], [0], [0], [1], [0, 0, 1, 1], [], []>} : vector<16x32xf32>, vector<32x64xf32>, vector<16x64xf32> -> vector<16x64xf32>
    %275 = arith.addf %271, %274 : vector<16x64xf32>
    %c136 = arith.constant 136 : index
    %c0_229 = arith.constant 0 : index
    %276 = vector.load %arg6[%c136, %c0_229] : memref<1048x64xf32, #tpu.memory_space<vmem>>, vector<32x64xf32>
    %c2_230 = arith.constant 2 : index
    %c0_231 = arith.constant 0 : index
    %277 = vector.load %arg8[%c2_230, %c0_231] : memref<18x64xf32, #tpu.memory_space<vmem>>, vector<16x32xf32>
    %cst_232 = arith.constant dense<0.000000e+00> : vector<16x64xf32>
    %278 = tpu.matmul %277, %276, %cst_232 {dimension_numbers = #tpu.dot_dimension_numbers<[1], [0], [0], [1], [0, 0, 1, 1], [], []>} : vector<16x32xf32>, vector<32x64xf32>, vector<16x64xf32> -> vector<16x64xf32>
    %279 = arith.addf %275, %278 : vector<16x64xf32>
    %c392 = arith.constant 392 : index
    %c0_233 = arith.constant 0 : index
    %280 = vector.load %arg6[%c392, %c0_233] : memref<1048x64xf32, #tpu.memory_space<vmem>>, vector<64x64xf32>
    %cst_234 = arith.constant dense<0.000000e+00> : vector<16x64xf32>
    %281 = tpu.matmul %279, %280, %cst_234 {dimension_numbers = #tpu.dot_dimension_numbers<[1], [0], [0], [1], [0, 0, 1, 1], [], []>} : vector<16x64xf32>, vector<64x64xf32>, vector<16x64xf32> -> vector<16x64xf32>
    %cst_235 = arith.constant dense<0.000000e+00> : vector<64xf32>
    %282 = vector.multi_reduction <add>, %281, %cst_235 [0] : vector<16x64xf32> to vector<64xf32>
    %283 = vector.shape_cast %282 : vector<64xf32> to vector<1x64xf32>
    %cst_236 = arith.constant 1.600000e+01 : f32
    %284 = vector.broadcast %cst_236 : f32 to vector<1x64xf32>
    %285 = arith.divf %283, %284 : vector<1x64xf32>
    %286 = arith.mulf %279, %279 : vector<16x64xf32>
    %cst_237 = arith.constant dense<0.000000e+00> : vector<16x64xf32>
    %287 = tpu.matmul %286, %280, %cst_237 {dimension_numbers = #tpu.dot_dimension_numbers<[1], [0], [0], [1], [0, 0, 1, 1], [], []>} : vector<16x64xf32>, vector<64x64xf32>, vector<16x64xf32> -> vector<16x64xf32>
    %cst_238 = arith.constant dense<0.000000e+00> : vector<64xf32>
    %288 = vector.multi_reduction <add>, %287, %cst_238 [0] : vector<16x64xf32> to vector<64xf32>
    %289 = vector.shape_cast %288 : vector<64xf32> to vector<1x64xf32>
    %cst_239 = arith.constant 1.600000e+01 : f32
    %290 = vector.broadcast %cst_239 : f32 to vector<1x64xf32>
    %291 = arith.divf %289, %290 : vector<1x64xf32>
    %292 = arith.mulf %285, %285 : vector<1x64xf32>
    %293 = arith.subf %291, %292 : vector<1x64xf32>
    %cst_240 = arith.constant 9.99999974E-6 : f32
    %294 = vector.broadcast %cst_240 : f32 to vector<1x64xf32>
    %295 = arith.addf %293, %294 : vector<1x64xf32>
    %296 = math.rsqrt %295 : vector<1x64xf32>
    %297 = vector.broadcast %285 : vector<1x64xf32> to vector<16x64xf32>
    %298 = arith.subf %279, %297 : vector<16x64xf32>
    %299 = vector.broadcast %296 : vector<1x64xf32> to vector<16x64xf32>
    %300 = arith.mulf %298, %299 : vector<16x64xf32>
    %301 = vector.extract_strided_slice %264 {offsets = [3, 0], sizes = [1, 64], strides = [1, 1]} : vector<5x64xf32> to vector<1x64xf32>
    %302 = vector.broadcast %301 : vector<1x64xf32> to vector<16x64xf32>
    %303 = arith.mulf %300, %302 : vector<16x64xf32>
    %304 = vector.extract_strided_slice %264 {offsets = [4, 0], sizes = [1, 64], strides = [1, 1]} : vector<5x64xf32> to vector<1x64xf32>
    %305 = vector.broadcast %304 : vector<1x64xf32> to vector<16x64xf32>
    %306 = arith.addf %303, %305 : vector<16x64xf32>
    %307 = tpu.iota {dimensions = array<i32: 1>} : vector<16x64xi32>
    %c2_i32_241 = arith.constant 2 : i32
    %c0_i32_242 = arith.constant 0 : i32
    %308 = arith.cmpi eq, %c2_i32_241, %c0_i32_242 : i32
    %c1_i32_243 = arith.constant 1 : i32
    %309 = arith.select %308, %c1_i32_243, %c2_i32_241 : i32
    %310 = vector.broadcast %309 : i32 to vector<16x64xi32>
    %311 = arith.remsi %307, %310 : vector<16x64xi32>
    %c0_i32_244 = arith.constant 0 : i32
    %312 = vector.broadcast %c0_i32_244 : i32 to vector<16x64xi32>
    %313 = arith.cmpi ne, %311, %312 : vector<16x64xi32>
    %c0_i32_245 = arith.constant 0 : i32
    %314 = vector.broadcast %c0_i32_245 : i32 to vector<16x64xi32>
    %315 = arith.cmpi slt, %311, %314 : vector<16x64xi32>
    %c0_i32_246 = arith.constant 0 : i32
    %316 = arith.cmpi slt, %309, %c0_i32_246 : i32
    %317 = vector.broadcast %316 : i1 to vector<16x64xi1>
    %318 = vector.broadcast %317 : vector<16x64xi1> to vector<16x64xi1>
    %319 = arith.xori %315, %318 : vector<16x64xi1>
    %320 = arith.andi %319, %313 : vector<16x64xi1>
    %321 = vector.broadcast %309 : i32 to vector<16x64xi32>
    %322 = arith.addi %311, %321 : vector<16x64xi32>
    %323 = arith.select %320, %322, %311 : vector<16x64xi1>, vector<16x64xi32>
    %c1_i32_247 = arith.constant 1 : i32
    %324 = vector.broadcast %c1_i32_247 : i32 to vector<16x64xi32>
    %325 = arith.cmpi slt, %323, %324 : vector<16x64xi32>
    %326 = arith.select %325, %306, %279 : vector<16x64xi1>, vector<16x64xf32>
    %cst_248 = arith.constant 0.000000e+00 : f32
    %327 = vector.broadcast %cst_248 : f32 to vector<16x64xf32>
    %328 = arith.cmpf oge, %326, %327 : vector<16x64xf32>
    %cst_249 = arith.constant 1.000000e-01 : f32
    %329 = vector.broadcast %cst_249 : f32 to vector<16x64xf32>
    %330 = arith.mulf %329, %326 : vector<16x64xf32>
    %331 = arith.select %328, %326, %330 : vector<16x64xi1>, vector<16x64xf32>
    %332 = vector.extract_strided_slice %264 {offsets = [1, 0], sizes = [1, 64], strides = [1, 1]} : vector<5x64xf32> to vector<1x64xf32>
    %c1_250 = arith.constant 1 : index
    %c0_251 = arith.constant 0 : index
    %333 = vector.load %arg8[%c1_250, %c0_251] : memref<18x64xf32, #tpu.memory_space<vmem>>, vector<16x64xf32>
    tpu.vector_store %arg8[%c1_250, %c0_251], %331 {strides = array<i32>} : memref<18x64xf32, #tpu.memory_space<vmem>>, vector<16x64xf32>,
    %c168 = arith.constant 168 : index
    %c0_252 = arith.constant 0 : index
    %334 = vector.load %arg6[%c168, %c0_252] : memref<1048x64xf32, #tpu.memory_space<vmem>>, vector<64x64xf32>
    %c0_253 = arith.constant 0 : index
    %c0_254 = arith.constant 0 : index
    %335 = vector.load %arg8[%c0_253, %c0_254] : memref<18x64xf32, #tpu.memory_space<vmem>>, vector<16x64xf32>
    %cst_255 = arith.constant dense<0.000000e+00> : vector<16x64xf32>
    %336 = tpu.matmul %335, %334, %cst_255 {dimension_numbers = #tpu.dot_dimension_numbers<[1], [0], [0], [1], [0, 0, 1, 1], [], []>} : vector<16x64xf32>, vector<64x64xf32>, vector<16x64xf32> -> vector<16x64xf32>
    %337 = vector.broadcast %332 : vector<1x64xf32> to vector<16x64xf32>
    %338 = arith.addf %337, %336 : vector<16x64xf32>
    %c232 = arith.constant 232 : index
    %c0_256 = arith.constant 0 : index
    %339 = vector.load %arg6[%c232, %c0_256] : memref<1048x64xf32, #tpu.memory_space<vmem>>, vector<64x64xf32>
    %c1_257 = arith.constant 1 : index
    %c0_258 = arith.constant 0 : index
    %340 = vector.load %arg8[%c1_257, %c0_258] : memref<18x64xf32, #tpu.memory_space<vmem>>, vector<16x64xf32>
    %cst_259 = arith.constant dense<0.000000e+00> : vector<16x64xf32>
    %341 = tpu.matmul %340, %339, %cst_259 {dimension_numbers = #tpu.dot_dimension_numbers<[1], [0], [0], [1], [0, 0, 1, 1], [], []>} : vector<16x64xf32>, vector<64x64xf32>, vector<16x64xf32> -> vector<16x64xf32>
    %342 = arith.addf %338, %341 : vector<16x64xf32>
    %c296 = arith.constant 296 : index
    %c0_260 = arith.constant 0 : index
    %343 = vector.load %arg6[%c296, %c0_260] : memref<1048x64xf32, #tpu.memory_space<vmem>>, vector<64x64xf32>
    %c2_261 = arith.constant 2 : index
    %c0_262 = arith.constant 0 : index
    %344 = vector.load %arg8[%c2_261, %c0_262] : memref<18x64xf32, #tpu.memory_space<vmem>>, vector<16x64xf32>
    %cst_263 = arith.constant dense<0.000000e+00> : vector<16x64xf32>
    %345 = tpu.matmul %344, %343, %cst_263 {dimension_numbers = #tpu.dot_dimension_numbers<[1], [0], [0], [1], [0, 0, 1, 1], [], []>} : vector<16x64xf32>, vector<64x64xf32>, vector<16x64xf32> -> vector<16x64xf32>
    %346 = arith.addf %342, %345 : vector<16x64xf32>
    %cst_264 = arith.constant 0.000000e+00 : f32
    %347 = vector.broadcast %cst_264 : f32 to vector<16x64xf32>
    %348 = arith.cmpf oge, %346, %347 : vector<16x64xf32>
    %cst_265 = arith.constant 1.000000e-01 : f32
    %349 = vector.broadcast %cst_265 : f32 to vector<16x64xf32>
    %350 = arith.mulf %349, %346 : vector<16x64xf32>
    %351 = arith.select %348, %346, %350 : vector<16x64xi1>, vector<16x64xf32>
    %c360 = arith.constant 360 : index
    %c0_266 = arith.constant 0 : index
    %352 = vector.load %arg6[%c360, %c0_266] : memref<1048x64xf32, #tpu.memory_space<vmem>>, vector<32x64xf32>
    %cst_267 = arith.constant dense<0.000000e+00> : vector<16x64xf32>
    %353 = tpu.matmul %263, %352, %cst_267 {dimension_numbers = #tpu.dot_dimension_numbers<[1], [0], [0], [1], [0, 0, 1, 1], [], []>} : vector<16x32xf32>, vector<32x64xf32>, vector<16x64xf32> -> vector<16x64xf32>
    %354 = vector.extract_strided_slice %264 {offsets = [2, 0], sizes = [1, 64], strides = [1, 1]} : vector<5x64xf32> to vector<1x64xf32>
    %355 = vector.broadcast %354 : vector<1x64xf32> to vector<16x64xf32>
    %356 = arith.addf %353, %355 : vector<16x64xf32>
    %357 = arith.addf %351, %356 : vector<16x64xf32>
    %cst_268 = arith.constant dense<0.000000e+00> : vector<16x32xf32>
    %358 = tpu.matmul %357, %165, %cst_268 {dimension_numbers = #tpu.dot_dimension_numbers<[1], [0], [0], [1], [0, 0, 1, 1], [], []>} : vector<16x64xf32>, vector<64x32xf32>, vector<16x32xf32> -> vector<16x32xf32>
    %cst_269 = arith.constant dense<0.000000e+00> : vector<16x32xf32>
    %359 = tpu.matmul %357, %166, %cst_269 {dimension_numbers = #tpu.dot_dimension_numbers<[1], [0], [0], [1], [0, 0, 1, 1], [], []>} : vector<16x64xf32>, vector<64x32xf32>, vector<16x32xf32> -> vector<16x32xf32>
    %360 = arith.negf %358 : vector<16x32xf32>
    %361 = math.exp %360 : vector<16x32xf32>
    %cst_270 = arith.constant 1.000000e+00 : f32
    %362 = vector.broadcast %cst_270 : f32 to vector<16x32xf32>
    %363 = arith.addf %362, %361 : vector<16x32xf32>
    %364 = arith.divf %362, %363 : vector<16x32xf32>
    %cst_271 = arith.constant 2.000000e+00 : f32
    %365 = vector.broadcast %cst_271 : f32 to vector<16x32xf32>
    %366 = arith.mulf %365, %364 : vector<16x32xf32>
    %cst_272 = arith.constant 1.000000e+00 : f32
    %367 = vector.broadcast %cst_272 : f32 to vector<16x32xf32>
    %368 = arith.subf %366, %367 : vector<16x32xf32>
    %cst_273 = arith.constant 8.000000e-01 : f32
    %369 = vector.broadcast %cst_273 : f32 to vector<16x32xf32>
    %370 = arith.mulf %369, %368 : vector<16x32xf32>
    %371 = math.exp %370 : vector<16x32xf32>
    %372 = arith.mulf %168, %371 : vector<16x32xf32>
    %373 = arith.addf %372, %359 : vector<16x32xf32>
    %374 = arith.addf %167, %263 : vector<16x32xf32>
    %375 = arith.addf %168, %373 : vector<16x32xf32>
    %c1040 = arith.constant 1040 : index
    %c0_274 = arith.constant 0 : index
    %376 = vector.load %arg6[%c1040, %c0_274] : memref<1048x64xf32, #tpu.memory_space<vmem>>, vector<2x64xf32>
    %377 = vector.extract_strided_slice %376 {offsets = [0, 0], sizes = [1, 64], strides = [1, 1]} : vector<2x64xf32> to vector<1x64xf32>
    %c1_275 = arith.constant 1 : index
    %c0_276 = arith.constant 0 : index
    %378 = vector.load %arg8[%c1_275, %c0_276] : memref<18x64xf32, #tpu.memory_space<vmem>>, vector<16x64xf32>
    tpu.vector_store %arg8[%c1_275, %c0_276], %164 {strides = array<i32>} : memref<18x64xf32, #tpu.memory_space<vmem>>, vector<16x64xf32>,
    %c456 = arith.constant 456 : index
    %c0_277 = arith.constant 0 : index
    %379 = vector.load %arg6[%c456, %c0_277] : memref<1048x64xf32, #tpu.memory_space<vmem>>, vector<64x64xf32>
    %c0_278 = arith.constant 0 : index
    %c0_279 = arith.constant 0 : index
    %380 = vector.load %arg8[%c0_278, %c0_279] : memref<18x64xf32, #tpu.memory_space<vmem>>, vector<16x64xf32>
    %cst_280 = arith.constant dense<0.000000e+00> : vector<16x64xf32>
    %381 = tpu.matmul %380, %379, %cst_280 {dimension_numbers = #tpu.dot_dimension_numbers<[1], [0], [0], [1], [0, 0, 1, 1], [], []>} : vector<16x64xf32>, vector<64x64xf32>, vector<16x64xf32> -> vector<16x64xf32>
    %382 = vector.broadcast %377 : vector<1x64xf32> to vector<16x64xf32>
    %383 = arith.addf %382, %381 : vector<16x64xf32>
    %c520 = arith.constant 520 : index
    %c0_281 = arith.constant 0 : index
    %384 = vector.load %arg6[%c520, %c0_281] : memref<1048x64xf32, #tpu.memory_space<vmem>>, vector<64x64xf32>
    %c1_282 = arith.constant 1 : index
    %c0_283 = arith.constant 0 : index
    %385 = vector.load %arg8[%c1_282, %c0_283] : memref<18x64xf32, #tpu.memory_space<vmem>>, vector<16x64xf32>
    %cst_284 = arith.constant dense<0.000000e+00> : vector<16x64xf32>
    %386 = tpu.matmul %385, %384, %cst_284 {dimension_numbers = #tpu.dot_dimension_numbers<[1], [0], [0], [1], [0, 0, 1, 1], [], []>} : vector<16x64xf32>, vector<64x64xf32>, vector<16x64xf32> -> vector<16x64xf32>
    %387 = arith.addf %383, %386 : vector<16x64xf32>
    %c584 = arith.constant 584 : index
    %c0_285 = arith.constant 0 : index
    %388 = vector.load %arg6[%c584, %c0_285] : memref<1048x64xf32, #tpu.memory_space<vmem>>, vector<64x64xf32>
    %c2_286 = arith.constant 2 : index
    %c0_287 = arith.constant 0 : index
    %389 = vector.load %arg8[%c2_286, %c0_287] : memref<18x64xf32, #tpu.memory_space<vmem>>, vector<16x64xf32>
    %cst_288 = arith.constant dense<0.000000e+00> : vector<16x64xf32>
    %390 = tpu.matmul %389, %388, %cst_288 {dimension_numbers = #tpu.dot_dimension_numbers<[1], [0], [0], [1], [0, 0, 1, 1], [], []>} : vector<16x64xf32>, vector<64x64xf32>, vector<16x64xf32> -> vector<16x64xf32>
    %391 = arith.addf %387, %390 : vector<16x64xf32>
    %392 = vector.extract_strided_slice %376 {offsets = [1, 0], sizes = [1, 64], strides = [1, 1]} : vector<2x64xf32> to vector<1x64xf32>
    %393 = tpu.concatenate %374, %375 in 1 : vector<16x32xf32>, vector<16x32xf32> -> vector<16x64xf32>
    %c1_289 = arith.constant 1 : index
    %c0_290 = arith.constant 0 : index
    %394 = vector.load %arg8[%c1_289, %c0_290] : memref<18x64xf32, #tpu.memory_space<vmem>>, vector<16x64xf32>
    tpu.vector_store %arg8[%c1_289, %c0_290], %393 {strides = array<i32>} : memref<18x64xf32, #tpu.memory_space<vmem>>, vector<16x64xf32>,
    %c648 = arith.constant 648 : index
    %c0_291 = arith.constant 0 : index
    %395 = vector.load %arg6[%c648, %c0_291] : memref<1048x64xf32, #tpu.memory_space<vmem>>, vector<64x64xf32>
    %c0_292 = arith.constant 0 : index
    %c0_293 = arith.constant 0 : index
    %396 = vector.load %arg8[%c0_292, %c0_293] : memref<18x64xf32, #tpu.memory_space<vmem>>, vector<16x64xf32>
    %cst_294 = arith.constant dense<0.000000e+00> : vector<16x64xf32>
    %397 = tpu.matmul %396, %395, %cst_294 {dimension_numbers = #tpu.dot_dimension_numbers<[1], [0], [0], [1], [0, 0, 1, 1], [], []>} : vector<16x64xf32>, vector<64x64xf32>, vector<16x64xf32> -> vector<16x64xf32>
    %398 = vector.broadcast %392 : vector<1x64xf32> to vector<16x64xf32>
    %399 = arith.addf %398, %397 : vector<16x64xf32>
    %c712 = arith.constant 712 : index
    %c0_295 = arith.constant 0 : index
    %400 = vector.load %arg6[%c712, %c0_295] : memref<1048x64xf32, #tpu.memory_space<vmem>>, vector<64x64xf32>
    %c1_296 = arith.constant 1 : index
    %c0_297 = arith.constant 0 : index
    %401 = vector.load %arg8[%c1_296, %c0_297] : memref<18x64xf32, #tpu.memory_space<vmem>>, vector<16x64xf32>
    %cst_298 = arith.constant dense<0.000000e+00> : vector<16x64xf32>
    %402 = tpu.matmul %401, %400, %cst_298 {dimension_numbers = #tpu.dot_dimension_numbers<[1], [0], [0], [1], [0, 0, 1, 1], [], []>} : vector<16x64xf32>, vector<64x64xf32>, vector<16x64xf32> -> vector<16x64xf32>
    %403 = arith.addf %399, %402 : vector<16x64xf32>
    %c776 = arith.constant 776 : index
    %c0_299 = arith.constant 0 : index
    %404 = vector.load %arg6[%c776, %c0_299] : memref<1048x64xf32, #tpu.memory_space<vmem>>, vector<64x64xf32>
    %c2_300 = arith.constant 2 : index
    %c0_301 = arith.constant 0 : index
    %405 = vector.load %arg8[%c2_300, %c0_301] : memref<18x64xf32, #tpu.memory_space<vmem>>, vector<16x64xf32>
    %cst_302 = arith.constant dense<0.000000e+00> : vector<16x64xf32>
    %406 = tpu.matmul %405, %404, %cst_302 {dimension_numbers = #tpu.dot_dimension_numbers<[1], [0], [0], [1], [0, 0, 1, 1], [], []>} : vector<16x64xf32>, vector<64x64xf32>, vector<16x64xf32> -> vector<16x64xf32>
    %407 = arith.addf %403, %406 : vector<16x64xf32>
    %c1_303 = arith.constant 1 : index
    %c0_304 = arith.constant 0 : index
    %408 = vector.load %arg8[%c1_303, %c0_304] : memref<18x64xf32, #tpu.memory_space<vmem>>, vector<16x64xf32>
    tpu.vector_store %arg8[%c1_303, %c0_304], %391 {strides = array<i32>} : memref<18x64xf32, #tpu.memory_space<vmem>>, vector<16x64xf32>,
    %c840 = arith.constant 840 : index
    %c0_305 = arith.constant 0 : index
    %409 = vector.load %arg6[%c840, %c0_305] : memref<1048x64xf32, #tpu.memory_space<vmem>>, vector<64x64xf32>
    %c0_306 = arith.constant 0 : index
    %c0_307 = arith.constant 0 : index
    %410 = vector.load %arg8[%c0_306, %c0_307] : memref<18x64xf32, #tpu.memory_space<vmem>>, vector<16x64xf32>
    %cst_308 = arith.constant dense<0.000000e+00> : vector<16x64xf32>
    %411 = tpu.matmul %410, %409, %cst_308 {dimension_numbers = #tpu.dot_dimension_numbers<[1], [0], [0], [1], [0, 0, 1, 1], [], []>} : vector<16x64xf32>, vector<64x64xf32>, vector<16x64xf32> -> vector<16x64xf32>
    %412 = arith.addf %407, %411 : vector<16x64xf32>
    %c904 = arith.constant 904 : index
    %c0_309 = arith.constant 0 : index
    %413 = vector.load %arg6[%c904, %c0_309] : memref<1048x64xf32, #tpu.memory_space<vmem>>, vector<64x64xf32>
    %c1_310 = arith.constant 1 : index
    %c0_311 = arith.constant 0 : index
    %414 = vector.load %arg8[%c1_310, %c0_311] : memref<18x64xf32, #tpu.memory_space<vmem>>, vector<16x64xf32>
    %cst_312 = arith.constant dense<0.000000e+00> : vector<16x64xf32>
    %415 = tpu.matmul %414, %413, %cst_312 {dimension_numbers = #tpu.dot_dimension_numbers<[1], [0], [0], [1], [0, 0, 1, 1], [], []>} : vector<16x64xf32>, vector<64x64xf32>, vector<16x64xf32> -> vector<16x64xf32>
    %416 = arith.addf %412, %415 : vector<16x64xf32>
    %c968 = arith.constant 968 : index
    %c0_313 = arith.constant 0 : index
    %417 = vector.load %arg6[%c968, %c0_313] : memref<1048x64xf32, #tpu.memory_space<vmem>>, vector<64x64xf32>
    %c2_314 = arith.constant 2 : index
    %c0_315 = arith.constant 0 : index
    %418 = vector.load %arg8[%c2_314, %c0_315] : memref<18x64xf32, #tpu.memory_space<vmem>>, vector<16x64xf32>
    %cst_316 = arith.constant dense<0.000000e+00> : vector<16x64xf32>
    %419 = tpu.matmul %418, %417, %cst_316 {dimension_numbers = #tpu.dot_dimension_numbers<[1], [0], [0], [1], [0, 0, 1, 1], [], []>} : vector<16x64xf32>, vector<64x64xf32>, vector<16x64xf32> -> vector<16x64xf32>
    %420 = arith.addf %416, %419 : vector<16x64xf32>
    %421 = arith.addf %420, %10 : vector<16x64xf32>
    %c0_317 = arith.constant 0 : index
    %c0_318 = arith.constant 0 : index
    %c0_319 = arith.constant 0 : index
    %422 = vector.load %arg7[%c0_317, %c0_318, %c0_319] : memref<1x16x64xf32, #tpu.memory_space<vmem>>, vector<1x16x64xf32>
    %423 = vector.shape_cast %422 : vector<1x16x64xf32> to vector<16x64xf32>
    %424 = vector.shape_cast %421 : vector<16x64xf32> to vector<1x16x64xf32>
    tpu.vector_store %arg7[%c0_317, %c0_318, %c0_319], %424 {strides = array<i32>} : memref<1x16x64xf32, #tpu.memory_space<vmem>>, vector<1x16x64xf32>,
    return
  }
  func.func @transform_0(%arg0: i32) -> (i32, i32, i32) {
    %c0_i32 = arith.constant 0 : i32
    %c0_i32_0 = arith.constant 0 : i32
    %c0_i32_1 = arith.constant 0 : i32
    return %arg0, %c0_i32, %c0_i32_0 : i32, i32, i32
  }
  func.func @transform_1(%arg0: i32) -> (i32, i32) {
    %c0_i32 = arith.constant 0 : i32
    %c0_i32_0 = arith.constant 0 : i32
    %c0_i32_1 = arith.constant 0 : i32
    return %c0_i32, %c0_i32_0 : i32, i32
  }
  func.func @transform_2(%arg0: i32) -> (i32, i32) {
    %c0_i32 = arith.constant 0 : i32
    %c0_i32_0 = arith.constant 0 : i32
    %c0_i32_1 = arith.constant 0 : i32
    return %c0_i32, %c0_i32_0 : i32, i32
  }
  func.func @transform_3(%arg0: i32) -> (i32, i32, i32, i32) {
    %c0_i32 = arith.constant 0 : i32
    %c0_i32_0 = arith.constant 0 : i32
    %c0_i32_1 = arith.constant 0 : i32
    %c0_i32_2 = arith.constant 0 : i32
    %c0_i32_3 = arith.constant 0 : i32
    return %c0_i32, %c0_i32_0, %c0_i32_1, %c0_i32_2 : i32, i32, i32, i32
  }
  func.func @transform_4(%arg0: i32) -> (i32, i32) {
    %c0_i32 = arith.constant 0 : i32
    %c0_i32_0 = arith.constant 0 : i32
    %c0_i32_1 = arith.constant 0 : i32
    return %c0_i32, %c0_i32_0 : i32, i32
  }
  func.func @transform_5(%arg0: i32) -> (i32, i32) {
    %c0_i32 = arith.constant 0 : i32
    %c0_i32_0 = arith.constant 0 : i32
    %c0_i32_1 = arith.constant 0 : i32
    return %c0_i32, %c0_i32_0 : i32, i32
  }
  func.func @transform_6(%arg0: i32) -> (i32, i32, i32) {
    %c0_i32 = arith.constant 0 : i32
    %c0_i32_0 = arith.constant 0 : i32
    %c0_i32_1 = arith.constant 0 : i32
    return %arg0, %c0_i32, %c0_i32_0 : i32, i32, i32
  }
}

</mosaic_0001>

<llo_original>
// kernel: forward.1
$region0: #{forward.1}
  #allocation0 [shape = 'u32[]', space=smem, size = 0x4, offset = 0x4, fixed_abs, tag = 'smem constant byte address 0x4 - core index']
  #allocation1 [shape = 'u32[72,128]{1,0:T(1,128)}', space=vmem, size = 0x9000, scoped, tag = 'internal scratch']
  #allocation2 [shape = 'f32[18,64]{1,0:T(8,128)}', space=vmem, size = 0x3000, scoped, tag = 'scratch operand']
  #allocation3 [shape = 'f32[2,18,44]{2,1,0:T(8,128)}', space=vmem, size = 0x6000, scoped, tag = 'scratch operand']
  %s0 = inlined_call_operand.vmem [shape: f32[2,16,64], index: 0, kind: input, shape index: {}]
  %s1 = inlined_call_operand.vmem [shape: f32[64,16], index: 1, kind: input, shape index: {}]
  %s2 = inlined_call_operand.vmem [shape: f32[128,72], index: 2, kind: input, shape index: {}]
  %s3 = inlined_call_operand.vmem [shape: f32[20,2,1,36], index: 3, kind: input, shape index: {}]
  %s4 = inlined_call_operand.vmem [shape: f32[392,32], index: 4, kind: input, shape index: {}]
  %s5 = inlined_call_operand.vmem [shape: f32[1048,64], index: 5, kind: input, shape index: {}]
  %s6 = inlined_call_operand.vmem [shape: f32[2,16,64], index: 6, kind: output, shape index: {}]
  %s7 = sld [smem:[#allocation0]]
  $region57: #{forward.1} parent=0
    _
  %s9 = ssub.s32 1, %s7
  %s10 = scalar_select 0, %s9, %s7
  loop: start=0, step=1, limit=4
  $region2: #{forward.1} parent=0 // loop_pre_header
    _
  $region3: #{forward.1} parent=0 // loop_header
    %s12 = sphi 0, %s16
    %p13 = scmp.ge.s32.totalorder %s12, 4
    %s22 = sphi 0, %s24
    %s25 = sphi 0, %s22
    %s26 = sphi 0, %s25
    %s42 = sphi 0, %s26
    %s46 = sphi 0, %s46
    %s48 = sphi 0, %s46
    %s49 = sphi 0, %s48
    %s63 = sphi 0, %s49
    %s67 = sphi 0, %s67
    %s69 = sphi 0, %s67
    %s70 = sphi 0, %s69
    %s84 = sphi 0, %s70
    %s88 = sphi 0, %s88
    %s90 = sphi 0, %s88
    %s91 = sphi 0, %s90
    %s105 = sphi 0, %s91
    %s109 = sphi 0, %s109
    %s111 = sphi 0, %s109
    %s112 = sphi 0, %s111
    %s126 = sphi 0, %s112
    %s130 = sphi 0, %s130
    %s132 = sphi 0, %s130
    %s133 = sphi 0, %s132
    %s147 = sphi 0, %s133
    %s153 = sphi 0, %s155
    %s156 = sphi 0, %s153
    %s157 = sphi 0, %s156
    %s173 = sphi 0, %s157
  $region4: #{forward.1} parent=0 // loop_header_branch
    %15 = sbr.rel (%p13) target = $region8
  $region5: #{forward.1} parent=0 // loop_body
    %s17 = ssub.s32 %s12, 1
    %s18 = ssub.s32 %s12, 2
    %s19 = sadd.s32 %s12, 1
    %s20 = ssub.s32 %s12, %s19
    %p21 = scmp.eq.s32.totalorder %s20, 0
    %s23 = sadd.s32 %s22, 1
    %s24 = scalar_select %p21, %s22, %s23
    %p27 = pneg %p21
    %p28 = scmp.eq.s32.totalorder %s12, 1
    %p29 = por %p27, %p28
    %p30 = scmp.ne.s32.totalorder %s22, %s25
    %p31 = scmp.eq.s32.totalorder %s12, 0
    %p32 = por %p30, %p31
    %p33 = scmp.ne.s32.totalorder %s22, %s25
    %p34 = scmp.eq.s32.totalorder %s17, 1
    %p35 = por %p33, %p34
    %p36 = scmp.ne.s32.totalorder %s25, %s26
    %p37 = scmp.eq.s32.totalorder %s17, 0
    %p38 = por %p36, %p37
    %p39 = scmp.ne.s32.totalorder %s25, %s26
    %p40 = scmp.eq.s32.totalorder %s18, 1
    %p41 = por %p39, %p40
    %p43 = scmp.ne.s32.totalorder %s26, %s42
    %p44 = scmp.eq.s32.totalorder %s18, 0
    %p45 = por %p43, %p44
    %s47 = sadd.s32 %s46, 1
    %p50 = scmp.eq.s32.totalorder %s12, 1
    %p51 = scmp.ne.s32.totalorder %s46, %s48
    %p52 = scmp.eq.s32.totalorder %s12, 0
    %p53 = por %p51, %p52
    %p54 = scmp.ne.s32.totalorder %s46, %s48
    %p55 = scmp.eq.s32.totalorder %s17, 1
    %p56 = por %p54, %p55
    %p57 = scmp.ne.s32.totalorder %s48, %s49
    %p58 = scmp.eq.s32.totalorder %s17, 0
    %p59 = por %p57, %p58
    %p60 = scmp.ne.s32.totalorder %s48, %s49
    %p61 = scmp.eq.s32.totalorder %s18, 1
    %p62 = por %p60, %p61
    %p64 = scmp.ne.s32.totalorder %s49, %s63
    %p65 = scmp.eq.s32.totalorder %s18, 0
    %p66 = por %p64, %p65
    %s68 = sadd.s32 %s67, 1
    %p71 = scmp.eq.s32.totalorder %s12, 1
    %p72 = scmp.ne.s32.totalorder %s67, %s69
    %p73 = scmp.eq.s32.totalorder %s12, 0
    %p74 = por %p72, %p73
    %p75 = scmp.ne.s32.totalorder %s67, %s69
    %p76 = scmp.eq.s32.totalorder %s17, 1
    %p77 = por %p75, %p76
    %p78 = scmp.ne.s32.totalorder %s69, %s70
    %p79 = scmp.eq.s32.totalorder %s17, 0
    %p80 = por %p78, %p79
    %p81 = scmp.ne.s32.totalorder %s69, %s70
    %p82 = scmp.eq.s32.totalorder %s18, 1
    %p83 = por %p81, %p82
    %p85 = scmp.ne.s32.totalorder %s70, %s84
    %p86 = scmp.eq.s32.totalorder %s18, 0
    %p87 = por %p85, %p86
    %s89 = sadd.s32 %s88, 1
    %p92 = scmp.eq.s32.totalorder %s12, 1
    %p93 = scmp.ne.s32.totalorder %s88, %s90
    %p94 = scmp.eq.s32.totalorder %s12, 0
    %p95 = por %p93, %p94
    %p96 = scmp.ne.s32.totalorder %s88, %s90
    %p97 = scmp.eq.s32.totalorder %s17, 1
    %p98 = por %p96, %p97
    %p99 = scmp.ne.s32.totalorder %s90, %s91
    %p100 = scmp.eq.s32.totalorder %s17, 0
    %p101 = por %p99, %p100
    %p102 = scmp.ne.s32.totalorder %s90, %s91
    %p103 = scmp.eq.s32.totalorder %s18, 1
    %p104 = por %p102, %p103
    %p106 = scmp.ne.s32.totalorder %s91, %s105
    %p107 = scmp.eq.s32.totalorder %s18, 0
    %p108 = por %p106, %p107
    %s110 = sadd.s32 %s109, 1
    %p113 = scmp.eq.s32.totalorder %s12, 1
    %p114 = scmp.ne.s32.totalorder %s109, %s111
    %p115 = scmp.eq.s32.totalorder %s12, 0
    %p116 = por %p114, %p115
    %p117 = scmp.ne.s32.totalorder %s109, %s111
    %p118 = scmp.eq.s32.totalorder %s17, 1
    %p119 = por %p117, %p118
    %p120 = scmp.ne.s32.totalorder %s111, %s112
    %p121 = scmp.eq.s32.totalorder %s17, 0
    %p122 = por %p120, %p121
    %p123 = scmp.ne.s32.totalorder %s111, %s112
    %p124 = scmp.eq.s32.totalorder %s18, 1
    %p125 = por %p123, %p124
    %p127 = scmp.ne.s32.totalorder %s112, %s126
    %p128 = scmp.eq.s32.totalorder %s18, 0
    %p129 = por %p127, %p128
    %s131 = sadd.s32 %s130, 1
    %p134 = scmp.eq.s32.totalorder %s12, 1
    %p135 = scmp.ne.s32.totalorder %s130, %s132
    %p136 = scmp.eq.s32.totalorder %s12, 0
    %p137 = por %p135, %p136
    %p138 = scmp.ne.s32.totalorder %s130, %s132
    %p139 = scmp.eq.s32.totalorder %s17, 1
    %p140 = por %p138, %p139
    %p141 = scmp.ne.s32.totalorder %s132, %s133
    %p142 = scmp.eq.s32.totalorder %s17, 0
    %p143 = por %p141, %p142
    %p144 = scmp.ne.s32.totalorder %s132, %s133
    %p145 = scmp.eq.s32.totalorder %s18, 1
    %p146 = por %p144, %p145
    %p148 = scmp.ne.s32.totalorder %s133, %s147
    %p149 = scmp.eq.s32.totalorder %s18, 0
    %p150 = por %p148, %p149
    %s151 = ssub.s32 %s12, %s19
    %p152 = scmp.eq.s32.totalorder %s151, 0
    %s154 = sadd.s32 %s153, 1
    %s155 = scalar_select %p152, %s153, %s154
    %p158 = pneg %p152
    %p159 = scmp.eq.s32.totalorder %s12, 1
    %p160 = por %p158, %p159
    %p161 = scmp.ne.s32.totalorder %s153, %s156
    %p162 = scmp.eq.s32.totalorder %s12, 0
    %p163 = por %p161, %p162
    %p164 = scmp.ne.s32.totalorder %s153, %s156
    %p165 = scmp.eq.s32.totalorder %s17, 1
    %p166 = por %p164, %p165
    %p167 = scmp.ne.s32.totalorder %s156, %s157
    %p168 = scmp.eq.s32.totalorder %s17, 0
    %p169 = por %p167, %p168
    %p170 = scmp.ne.s32.totalorder %s156, %s157
    %p171 = scmp.eq.s32.totalorder %s18, 1
    %p172 = por %p170, %p171
    %p174 = scmp.ne.s32.totalorder %s157, %s173
    %p175 = scmp.eq.s32.totalorder %s18, 0
    %p176 = por %p174, %p175
    %p177 = scmp.le.s32.totalorder 1, %s12
    %p178 = scmp.lt.s32.totalorder %s12, 3
    %p179 = pnand %p177, %p178
    %p180 = pneg %p179
    // Predicated region
    $region9: #{forward.1} parent=5 // pred_check
      _
    $region10: #{forward.1} parent=5 // pred_check_branch
      %182 = sbr.rel (%p179) target = $region12
    $region11: #{forward.1} parent=5 // pred_region
      %s183 = ssub.s32 %s12, 1
      // Predicated region
      $region13: #{forward.1} parent=11 // pred_check
        %p184 = pneg %p59
      $region14: #{forward.1} parent=11 // pred_check_branch
        %186 = sbr.rel (%p184) target = $region16
      $region15: #{forward.1} parent=11 // pred_region
        _
      $region16: #{forward.1} parent=11 // pred_fallthru
        _
      // Predicated region
      $region17: #{forward.1} parent=11 // pred_check
        %p187 = pneg %p80
      $region18: #{forward.1} parent=11 // pred_check_branch
        %189 = sbr.rel (%p187) target = $region20
      $region19: #{forward.1} parent=11 // pred_region
        _
      $region20: #{forward.1} parent=11 // pred_fallthru
        _
      // Predicated region
      $region21: #{forward.1} parent=11 // pred_check
        %p190 = pneg %p101
      $region22: #{forward.1} parent=11 // pred_check_branch
        %192 = sbr.rel (%p190) target = $region24
      $region23: #{forward.1} parent=11 // pred_region
        _
      $region24: #{forward.1} parent=11 // pred_fallthru
        _
      // Predicated region
      $region25: #{forward.1} parent=11 // pred_check
        %p193 = pneg %p122
      $region26: #{forward.1} parent=11 // pred_check_branch
        %195 = sbr.rel (%p193) target = $region28
      $region27: #{forward.1} parent=11 // pred_region
        _
      $region28: #{forward.1} parent=11 // pred_fallthru
        _
      // Predicated region
      $region29: #{forward.1} parent=11 // pred_check
        %p196 = pneg %p143
      $region30: #{forward.1} parent=11 // pred_check_branch
        %198 = sbr.rel (%p196) target = $region32
      $region31: #{forward.1} parent=11 // pred_region
        _
      $region32: #{forward.1} parent=11 // pred_fallthru
        _
    $region12: #{forward.1} parent=5 // pred_fallthru
      _
    %p199 = scmp.lt.s32.totalorder %s12, 2
    // Predicated region
    $region33: #{forward.1} parent=5 // pred_check
      %p200 = pneg %p199
    $region34: #{forward.1} parent=5 // pred_check_branch
      %202 = sbr.rel (%p200) target = $region36
    $region35: #{forward.1} parent=5 // pred_region
      // Predicated region
      $region37: #{forward.1} parent=35 // pred_check
        %p203 = pneg %p32
      $region38: #{forward.1} parent=35 // pred_check_branch
        %205 = sbr.rel (%p203) target = $region40
      $region39: #{forward.1} parent=35 // pred_region
        %p206 = scmp.lt.s32.totalorder %s12, 1
        %s207 = scalar_select %p206, %s12, 1
        %s208 = smul.addr %s207, 2
        %s209 = smul.addr %s208, 8
        %s210 = scalar_lea.vmem %s0, %s209
      $region40: #{forward.1} parent=35 // pred_fallthru
        _
    $region36: #{forward.1} parent=5 // pred_fallthru
      _
    %p211 = scmp.le.s32.totalorder 1, %s12
    %p212 = scmp.lt.s32.totalorder %s12, 3
    %p213 = pnand %p211, %p212
    %p214 = pneg %p213
    // Predicated region
    $region41: #{forward.1} parent=5 // pred_check
      _
    $region42: #{forward.1} parent=5 // pred_check_branch
      %216 = sbr.rel (%p213) target = $region44
    $region43: #{forward.1} parent=5 // pred_region
      %s217 = ssub.s32 %s12, 1
      %p218 = scmp.lt.s32.totalorder %s17, 1
      %s219 = scalar_select %p218, %s17, 1
      %s220 = smul.addr %s219, 2
      %s221 = smul.addr %s220, 8
      %s222 = scalar_lea.vmem %s0, %s221
      %p223 = pneg %p38
      %p224 = pneg %p35
      %p225 = pneg %p59
      %p226 = pneg %p56
      %p227 = pneg %p80
      %p228 = pneg %p77
      %p229 = pneg %p101
      %p230 = pneg %p98
      %p231 = pneg %p122
      %p232 = pneg %p119
      %p233 = pneg %p143
      %p234 = pneg %p140
      %p235 = pneg %p169
      %p236 = pneg %p166
      %p237 = scmp.lt.s32.totalorder %s17, 1
      %s238 = scalar_select %p237, %s17, 1
      %s239 = smul.addr %s238, 2
      %s240 = smul.addr %s239, 8
      %s241 = scalar_lea.vmem %s6, %s240
      %p242 = scmp.lt.s32.totalorder %s17, 1
      %s243 = scalar_select %p242, %s17, 1
      %s244 = smul.addr %s243, 2
      %s245 = smul.addr %s244, 8
      %s246 = scalar_lea.vmem %s0, %s245
      %p247 = scmp.lt.s32.totalorder %s17, 1
      %s248 = scalar_select %p247, %s17, 1
      %s249 = smul.addr %s248, 2
      %s250 = smul.addr %s249, 8
      %s251 = scalar_lea.vmem %s6, %s250
      %vm252 = vcmask 516096
      %253 = vst.msk [vmem:[#allocation2] sm:$0x1] %vm252, 0.0
      %254 = vst.msk [vmem:[#allocation2 + $0x11] sm:$0x1] %vm252, 0.0
      %vm255 = vcmask 352256
      %256 = vst.msk [vmem:[#allocation3] sm:$0x1] %vm255, 0.0
      %257 = vst.msk [vmem:[#allocation3 + $0x18] sm:$0x1] %vm255, 0.0
      %258 = vst.msk [vmem:[#allocation3 + $0x11] sm:$0x1] %vm255, 0.0
      %259 = vst.msk [vmem:[#allocation3 + $0x29] sm:$0x1] %vm255, 0.0
      %vm260 = vcmask 31744
      %261 = vst.msk [vmem:[#allocation3] sm:$0xff] %vm260, 0.0
      %262 = vst.msk [vmem:[#allocation3 + $0x8] sm:$0xff] %vm260, 0.0
      %vm263 = vcmask 25600
      %264 = vst.msk [vmem:[#allocation3 + $0x10] sm:$0x3] %vm263, 0.0
      %265 = vst.msk [vmem:[#allocation3 + $0x18] sm:$0xff] %vm260, 0.0
      %266 = vst.msk [vmem:[#allocation3 + $0x20] sm:$0xff] %vm260, 0.0
      %267 = vst.msk [vmem:[#allocation3 + $0x28] sm:$0x3] %vm263, 0.0
      %vm268 = vcmask 359744
      %269 = vst.msk [vmem:[#allocation3] sm:$0xff] %vm268, 0.0
      %270 = vst.msk [vmem:[#allocation3 + $0x8] sm:$0xff] %vm268, 0.0
      %vm271 = vcmask 353600
      %272 = vst.msk [vmem:[#allocation3 + $0x10] sm:$0x3] %vm271, 0.0
      %273 = vst.msk [vmem:[#allocation3 + $0x18] sm:$0xff] %vm268, 0.0
      %274 = vst.msk [vmem:[#allocation3 + $0x20] sm:$0xff] %vm268, 0.0
      %275 = vst.msk [vmem:[#allocation3 + $0x28] sm:$0x3] %vm271, 0.0
      %v276 = vld [vmem:[%s246] sm:$0xff]
      %v277 = vld [vmem:[%s246 + $0x8] sm:$0xff]
      %v278 = vld [vmem:[%s1] sm:$0xff]
      %v279 = vld [vmem:[%s1 + $0x8] sm:$0xff]
      %v280 = vld [vmem:[%s1 + $0x10] sm:$0xff]
      %v281 = vld [vmem:[%s1 + $0x18] sm:$0xff]
      %v282 = vld [vmem:[%s1 + $0x20] sm:$0xff]
      %v283 = vld [vmem:[%s1 + $0x28] sm:$0xff]
      %v284 = vld [vmem:[%s1 + $0x30] sm:$0xff]
      %v285 = vld [vmem:[%s1 + $0x38] sm:$0xff]
      %vm286 = vcmask 130048
      %v288 = vsel %vm286, %v278, 0
      %v291 = vsel %vm286, %v279, 0
      %293 = vmatpush.msra.mxu0 0.0
      %294 = vmatpush.msra.mxu0 0.0
      %295 = vmatpush.msra.mxu0 0.0
      %296 = vmatpush.msra.mxu0 0.0
      %297 = vmatpush.msra.mxu0 0.0
      %298 = vmatpush.msra.mxu0 0.0
      %299 = vmatpush.msra.mxu0 0.0
      %300 = vmatpush.msra.mxu0 0.0
      %301 = vmatpush.msra.mxu0 0.0
      %302 = vmatpush.msra.mxu0 0.0
      %303 = vmatpush.msra.mxu0 0.0
      %304 = vmatpush.msra.mxu0 0.0
      %305 = vmatpush.msra.mxu0 0.0
      %306 = vmatpush.msra.mxu0 0.0
      %307 = vmatpush.msra.mxu0 %v277
      %308 = vmatpush.msra.mxu0 %v276
      %309 = vmatmul.f32.gmra.mxu0 %v288
      %v310 = vpop.f32.mrf.mxu0
      %v311 = vadd.f32 0.0, %v310
      %312 = vmatmul.f32.gmra.mxu0 %v291
      %v313 = vpop.f32.mrf.mxu0
      %v314 = vadd.f32 0.0, %v313
      %315 = vdwg.mxu0
      %v317 = vsel %vm286, %v280, 0
      %v320 = vsel %vm286, %v281, 0
      %322 = vmatpush.msra.mxu0 0.0
      %323 = vmatpush.msra.mxu0 0.0
      %324 = vmatpush.msra.mxu0 0.0
      %325 = vmatpush.msra.mxu0 0.0
      %326 = vmatpush.msra.mxu0 0.0
      %327 = vmatpush.msra.mxu0 0.0
      %328 = vmatpush.msra.mxu0 0.0
      %329 = vmatpush.msra.mxu0 0.0
      %330 = vmatpush.msra.mxu0 0.0
      %331 = vmatpush.msra.mxu0 0.0
      %332 = vmatpush.msra.mxu0 0.0
      %333 = vmatpush.msra.mxu0 0.0
      %334 = vmatpush.msra.mxu0 0.0
      %335 = vmatpush.msra.mxu0 0.0
      %336 = vmatpush.msra.mxu0 %v277
      %337 = vmatpush.msra.mxu0 %v276
      %338 = vmatmul.f32.gmra.mxu0 %v317
      %v339 = vpop.f32.mrf.mxu0
      %v340 = vadd.f32 0.0, %v339
      %341 = vmatmul.f32.gmra.mxu0 %v320
      %v342 = vpop.f32.mrf.mxu0
      %v343 = vadd.f32 0.0, %v342
      %344 = vdwg.mxu0
      %347 = vrot.lane.b32.xlu0 %v340, 64
      %v348 = vpop.permute.xlu0 %347
      %349 = vrot.lane.b32.xlu0 %v343, 64
      %v350 = vpop.permute.xlu0 %349
      %vm353 = vcmask 523264
      %v354 = vsel %vm353, %v311, %v348
      %v355 = vsel %vm353, %v314, %v350
      %v356 = vld [vmem:[%s2] sm:$0xff]
      %v357 = vld [vmem:[%s2 + $0x8] sm:$0xff]
      %v358 = vld [vmem:[%s2 + $0x10] sm:$0xff]
      %v359 = vld [vmem:[%s2 + $0x18] sm:$0xff]
      %v360 = vld [vmem:[%s2 + $0x20] sm:$0xff]
      %v361 = vld [vmem:[%s2 + $0x28] sm:$0xff]
      %v362 = vld [vmem:[%s2 + $0x30] sm:$0xff]
      %v363 = vld [vmem:[%s2 + $0x38] sm:$0xff]
      %v364 = vld [vmem:[%s2 + $0x40] sm:$0xff]
      %v365 = vld [vmem:[%s2 + $0x48] sm:$0xff]
      %v366 = vld [vmem:[%s2 + $0x50] sm:$0xff]
      %v367 = vld [vmem:[%s2 + $0x58] sm:$0xff]
      %v368 = vld [vmem:[%s2 + $0x60] sm:$0xff]
      %v369 = vld [vmem:[%s2 + $0x68] sm:$0xff]
      %v370 = vld [vmem:[%s2 + $0x70] sm:$0xff]
      %v371 = vld [vmem:[%s2 + $0x78] sm:$0xff]
      %372 = vmatpush.msra.mxu0 %v371
      %373 = vmatpush.msra.mxu0 %v370
      %374 = vmatpush.msra.mxu0 %v369
      %375 = vmatpush.msra.mxu0 %v368
      %376 = vmatpush.msra.mxu0 %v367
      %377 = vmatpush.msra.mxu0 %v366
      %378 = vmatpush.msra.mxu0 %v365
      %379 = vmatpush.msra.mxu0 %v364
      %380 = vmatpush.msra.mxu0 %v363
      %381 = vmatpush.msra.mxu0 %v362
      %382 = vmatpush.msra.mxu0 %v361
      %383 = vmatpush.msra.mxu0 %v360
      %384 = vmatpush.msra.mxu0 %v359
      %385 = vmatpush.msra.mxu0 %v358
      %386 = vmatpush.msra.mxu0 %v357
      %387 = vmatpush.msra.mxu0 %v356
      %388 = vmatmul.f32.gmra.mxu0 %v354
      %v389 = vpop.f32.mrf.mxu0
      %v390 = vadd.f32 0.0, %v389
      %391 = vmatmul.f32.gmra.mxu0 %v355
      %v392 = vpop.f32.mrf.mxu0
      %v393 = vadd.f32 0.0, %v392
      %394 = vdwg.mxu0
      %397 = vrot.lane.b32.xlu0 %v390, 4
      %v398 = vpop.permute.xlu0 %397
      %399 = vrot.lane.b32.xlu0 %v393, 4
      %v400 = vpop.permute.xlu0 %399
      %vm403 = vcmask 326688
      %404 = vst.msk [vmem:[#allocation3 + $0x1] sm:$0xff] %vm403, %v398
      %405 = vst.msk [vmem:[#allocation3 + $0x9] sm:$0xff] %vm403, %v400
      %406 = vrot.lane.b32.xlu0 %v390, 96
      %v407 = vpop.permute.xlu0 %406
      %408 = vrot.lane.b32.xlu0 %v393, 96
      %v409 = vpop.permute.xlu0 %408
      %s412 = scalar_lea.vmem [#allocation3], 24
      %413 = vst.msk [vmem:[%s412 + $0x1] sm:$0xff] %vm403, %v407
      %414 = vst.msk [vmem:[%s412 + $0x9] sm:$0xff] %vm403, %v409
      %v415 = vld [vmem:[#allocation3] sm:$0xff]
      %v416 = vld [vmem:[#allocation3 + $0x8] sm:$0xff]
      %v417 = vld [vmem:[#allocation3 + $0x18] sm:$0xff]
      %v418 = vld [vmem:[#allocation3 + $0x20] sm:$0xff]
      %v419 = vld [vmem:[%s3] sm:$0x1]
      %v420 = vld [vmem:[%s3 + $0x1] sm:$0x1]
      %v423 = vperm.slane %v419, 0
      %v424 = vperm.slane %v420, 0
      %v427 = vmul.f32 %v415, %v423
      %v428 = vmul.f32 %v416, %v423
      %v429 = vmul.f32 %v417, %v424
      %v430 = vmul.f32 %v418, %v424
      %v431 = vadd.f32 %v427, 0.0
      %v432 = vadd.f32 %v428, 0.0
      %v433 = vadd.f32 %v429, 0.0
      %v434 = vadd.f32 %v430, 0.0
      %s435 = scalar_lea.vmem %s3, 2
      %v436 = vld [vmem:[%s435] sm:$0x1]
      %v437 = vld [vmem:[%s435 + $0x1] sm:$0x1]
      %v440 = vperm.slane %v436, 0
      %v441 = vperm.slane %v437, 0
      %442 = vrot.lane.b32.xlu0 %v440, 4
      %v443 = vpop.permute.xlu0 %442
      %444 = vrot.lane.b32.xlu0 %v441, 4
      %v445 = vpop.permute.xlu0 %444
      %v448 = vmul.f32 %v415, %v443
      %v449 = vmul.f32 %v416, %v443
      %v450 = vmul.f32 %v417, %v445
      %v451 = vmul.f32 %v418, %v445
      %456 = vrot.lane.b32.xlu0 %v448, 124
      %v457 = vpop.permute.xlu0 %456
      %458 = vrot.lane.b32.xlu0 %v449, 124
      %v459 = vpop.permute.xlu0 %458
      %460 = vrot.lane.b32.xlu0 %v450, 124
      %v461 = vpop.permute.xlu0 %460
      %462 = vrot.lane.b32.xlu0 %v451, 124
      %v463 = vpop.permute.xlu0 %462
      %v468 = vadd.f32 %v431, %v457
      %v469 = vadd.f32 %v432, %v459
      %v470 = vadd.f32 %v433, %v461
      %v471 = vadd.f32 %v434, %v463
      %s472 = scalar_lea.vmem %s3, 4
      %v473 = vld [vmem:[%s472] sm:$0x1]
      %v474 = vld [vmem:[%s472 + $0x1] sm:$0x1]
      %v477 = vperm.slane %v473, 0
      %v478 = vperm.slane %v474, 0
      %479 = vrot.lane.b32.xlu0 %v477, 8
      %v480 = vpop.permute.xlu0 %479
      %481 = vrot.lane.b32.xlu0 %v478, 8
      %v482 = vpop.permute.xlu0 %481
      %v485 = vmul.f32 %v415, %v480
      %v486 = vmul.f32 %v416, %v480
      %v487 = vmul.f32 %v417, %v482
      %v488 = vmul.f32 %v418, %v482
      %493 = vrot.lane.b32.xlu0 %v485, 120
      %v494 = vpop.permute.xlu0 %493
      %495 = vrot.lane.b32.xlu0 %v486, 120
      %v496 = vpop.permute.xlu0 %495
      %497 = vrot.lane.b32.xlu0 %v487, 120
      %v498 = vpop.permute.xlu0 %497
      %499 = vrot.lane.b32.xlu0 %v488, 120
      %v500 = vpop.permute.xlu0 %499
      %v505 = vadd.f32 %v468, %v494
      %v506 = vadd.f32 %v469, %v496
      %v507 = vadd.f32 %v470, %v498
      %v508 = vadd.f32 %v471, %v500
      %v509 = vld [vmem:[#allocation3 + $0x1] sm:$0xff]
      %v510 = vld [vmem:[#allocation3 + $0x9] sm:$0xff]
      %v511 = vld [vmem:[#allocation3 + $0x19] sm:$0xff]
      %v512 = vld [vmem:[#allocation3 + $0x21] sm:$0xff]
      %s513 = scalar_lea.vmem %s3, 6
      %v514 = vld [vmem:[%s513] sm:$0x1]
      %v515 = vld [vmem:[%s513 + $0x1] sm:$0x1]
      %v518 = vperm.slane %v514, 0
      %v519 = vperm.slane %v515, 0
      %v522 = vmul.f32 %v509, %v518
      %v523 = vmul.f32 %v510, %v518
      %v524 = vmul.f32 %v511, %v519
      %v525 = vmul.f32 %v512, %v519
      %v526 = vadd.f32 %v505, %v522
      %v527 = vadd.f32 %v506, %v523
      %v528 = vadd.f32 %v507, %v524
      %v529 = vadd.f32 %v508, %v525
      %s530 = scalar_lea.vmem %s3, 8
      %v531 = vld [vmem:[%s530] sm:$0x1]
      %v532 = vld [vmem:[%s530 + $0x1] sm:$0x1]
      %v535 = vperm.slane %v531, 0
      %v536 = vperm.slane %v532, 0
      %537 = vrot.lane.b32.xlu0 %v535, 4
      %v538 = vpop.permute.xlu0 %537
      %539 = vrot.lane.b32.xlu0 %v536, 4
      %v540 = vpop.permute.xlu0 %539
      %v543 = vmul.f32 %v509, %v538
      %v544 = vmul.f32 %v510, %v538
      %v545 = vmul.f32 %v511, %v540
      %v546 = vmul.f32 %v512, %v540
      %551 = vrot.lane.b32.xlu0 %v543, 124
      %v552 = vpop.permute.xlu0 %551
      %553 = vrot.lane.b32.xlu0 %v544, 124
      %v554 = vpop.permute.xlu0 %553
      %555 = vrot.lane.b32.xlu0 %v545, 124
      %v556 = vpop.permute.xlu0 %555
      %557 = vrot.lane.b32.xlu0 %v546, 124
      %v558 = vpop.permute.xlu0 %557
      %v563 = vadd.f32 %v526, %v552
      %v564 = vadd.f32 %v527, %v554
      %v565 = vadd.f32 %v528, %v556
      %v566 = vadd.f32 %v529, %v558
      %s567 = scalar_lea.vmem %s3, 10
      %v568 = vld [vmem:[%s567] sm:$0x1]
      %v569 = vld [vmem:[%s567 + $0x1] sm:$0x1]
      %v572 = vperm.slane %v568, 0
      %v573 = vperm.slane %v569, 0
      %574 = vrot.lane.b32.xlu0 %v572, 8
      %v575 = vpop.permute.xlu0 %574
      %576 = vrot.lane.b32.xlu0 %v573, 8
      %v577 = vpop.permute.xlu0 %576
      %v580 = vmul.f32 %v509, %v575
      %v581 = vmul.f32 %v510, %v575
      %v582 = vmul.f32 %v511, %v577
      %v583 = vmul.f32 %v512, %v577
      %588 = vrot.lane.b32.xlu0 %v580, 120
      %v589 = vpop.permute.xlu0 %588
      %590 = vrot.lane.b32.xlu0 %v581, 120
      %v591 = vpop.permute.xlu0 %590
      %592 = vrot.lane.b32.xlu0 %v582, 120
      %v593 = vpop.permute.xlu0 %592
      %594 = vrot.lane.b32.xlu0 %v583, 120
      %v595 = vpop.permute.xlu0 %594
      %v600 = vadd.f32 %v563, %v589
      %v601 = vadd.f32 %v564, %v591
      %v602 = vadd.f32 %v565, %v593
      %v603 = vadd.f32 %v566, %v595
      %v604 = vld [vmem:[#allocation3 + $0x2] sm:$0xff]
      %v605 = vld [vmem:[#allocation3 + $0xa] sm:$0xff]
      %v606 = vld [vmem:[#allocation3 + $0x1a] sm:$0xff]
      %v607 = vld [vmem:[#allocation3 + $0x22] sm:$0xff]
      %s608 = scalar_lea.vmem %s3, 12
      %v609 = vld [vmem:[%s608] sm:$0x1]
      %v610 = vld [vmem:[%s608 + $0x1] sm:$0x1]
      %v613 = vperm.slane %v609, 0
      %v614 = vperm.slane %v610, 0
      %v617 = vmul.f32 %v604, %v613
      %v618 = vmul.f32 %v605, %v613
      %v619 = vmul.f32 %v606, %v614
      %v620 = vmul.f32 %v607, %v614
      %v621 = vadd.f32 %v600, %v617
      %v622 = vadd.f32 %v601, %v618
      %v623 = vadd.f32 %v602, %v619
      %v624 = vadd.f32 %v603, %v620
      %s625 = scalar_lea.vmem %s3, 14
      %v626 = vld [vmem:[%s625] sm:$0x1]
      %v627 = vld [vmem:[%s625 + $0x1] sm:$0x1]
      %v630 = vperm.slane %v626, 0
      %v631 = vperm.slane %v627, 0
      %632 = vrot.lane.b32.xlu0 %v630, 4
      %v633 = vpop.permute.xlu0 %632
      %634 = vrot.lane.b32.xlu0 %v631, 4
      %v635 = vpop.permute.xlu0 %634
      %v638 = vmul.f32 %v604, %v633
      %v639 = vmul.f32 %v605, %v633
      %v640 = vmul.f32 %v606, %v635
      %v641 = vmul.f32 %v607, %v635
      %646 = vrot.lane.b32.xlu0 %v638, 124
      %v647 = vpop.permute.xlu0 %646
      %648 = vrot.lane.b32.xlu0 %v639, 124
      %v649 = vpop.permute.xlu0 %648
      %650 = vrot.lane.b32.xlu0 %v640, 124
      %v651 = vpop.permute.xlu0 %650
      %652 = vrot.lane.b32.xlu0 %v641, 124
      %v653 = vpop.permute.xlu0 %652
      %v658 = vadd.f32 %v621, %v647
      %v659 = vadd.f32 %v622, %v649
      %v660 = vadd.f32 %v623, %v651
      %v661 = vadd.f32 %v624, %v653
      %s662 = scalar_lea.vmem %s3, 16
      %v663 = vld [vmem:[%s662] sm:$0x1]
      %v664 = vld [vmem:[%s662 + $0x1] sm:$0x1]
      %v667 = vperm.slane %v663, 0
      %v668 = vperm.slane %v664, 0
      %669 = vrot.lane.b32.xlu0 %v667, 8
      %v670 = vpop.permute.xlu0 %669
      %671 = vrot.lane.b32.xlu0 %v668, 8
      %v672 = vpop.permute.xlu0 %671
      %v675 = vmul.f32 %v604, %v670
      %v676 = vmul.f32 %v605, %v670
      %v677 = vmul.f32 %v606, %v672
      %v678 = vmul.f32 %v607, %v672
      %683 = vrot.lane.b32.xlu0 %v675, 120
      %v684 = vpop.permute.xlu0 %683
      %685 = vrot.lane.b32.xlu0 %v676, 120
      %v686 = vpop.permute.xlu0 %685
      %687 = vrot.lane.b32.xlu0 %v677, 120
      %v688 = vpop.permute.xlu0 %687
      %689 = vrot.lane.b32.xlu0 %v678, 120
      %v690 = vpop.permute.xlu0 %689
      %v695 = vadd.f32 %v658, %v684
      %v696 = vadd.f32 %v659, %v686
      %v697 = vadd.f32 %v660, %v688
      %v698 = vadd.f32 %v661, %v690
      %s699 = scalar_lea.vmem %s3, 36
      %v700 = vld [vmem:[%s699] sm:$0x1]
      %v701 = vld [vmem:[%s699 + $0x1] sm:$0x1]
      %v704 = vperm.slane %v700, 0
      %v705 = vperm.slane %v701, 0
      %v708 = vadd.f32 %v695, %v704
      %v709 = vadd.f32 %v696, %v704
      %v710 = vadd.f32 %v697, %v705
      %v711 = vadd.f32 %v698, %v705
      %vm712 = vcmp.ge.f32.partialorder %v708, 0.0
      %vm713 = vcmp.ge.f32.partialorder %v709, 0.0
      %vm714 = vcmp.ge.f32.partialorder %v710, 0.0
      %vm715 = vcmp.ge.f32.partialorder %v711, 0.0
      %v716 = vmul.f32 %v708, 0.1
      %v717 = vmul.f32 %v709, 0.1
      %v718 = vmul.f32 %v710, 0.1
      %v719 = vmul.f32 %v711, 0.1
      %v720 = vsel %vm712, %v708, %v716
      %v721 = vsel %vm713, %v709, %v717
      %v722 = vsel %vm714, %v710, %v718
      %v723 = vsel %vm715, %v711, %v719
      %728 = vrot.lane.b32.xlu0 %v720, 4
      %v729 = vpop.permute.xlu0 %728
      %730 = vrot.lane.b32.xlu0 %v721, 4
      %v731 = vpop.permute.xlu0 %730
      %732 = vrot.lane.b32.xlu0 %v722, 4
      %v733 = vpop.permute.xlu0 %732
      %734 = vrot.lane.b32.xlu0 %v723, 4
      %v735 = vpop.permute.xlu0 %734
      %740 = vst.msk [vmem:[#allocation3 + $0x1] sm:$0xff] %vm403, %v729
      %741 = vst.msk [vmem:[#allocation3 + $0x9] sm:$0xff] %vm403, %v731
      %742 = vst.msk [vmem:[#allocation3 + $0x19] sm:$0xff] %vm403, %v733
      %743 = vst.msk [vmem:[#allocation3 + $0x21] sm:$0xff] %vm403, %v735
      %v744 = vld [vmem:[#allocation3] sm:$0xff]
      %v745 = vld [vmem:[#allocation3 + $0x8] sm:$0xff]
      %v746 = vld [vmem:[#allocation3 + $0x18] sm:$0xff]
      %v747 = vld [vmem:[#allocation3 + $0x20] sm:$0xff]
      %s748 = scalar_lea.vmem %s3, 18
      %v749 = vld [vmem:[%s748] sm:$0x1]
      %v750 = vld [vmem:[%s748 + $0x1] sm:$0x1]
      %v753 = vperm.slane %v749, 0
      %v754 = vperm.slane %v750, 0
      %v757 = vmul.f32 %v744, %v753
      %v758 = vmul.f32 %v745, %v753
      %v759 = vmul.f32 %v746, %v754
      %v760 = vmul.f32 %v747, %v754
      %v761 = vadd.f32 %v757, 0.0
      %v762 = vadd.f32 %v758, 0.0
      %v763 = vadd.f32 %v759, 0.0
      %v764 = vadd.f32 %v760, 0.0
      %s765 = scalar_lea.vmem %s3, 20
      %v766 = vld [vmem:[%s765] sm:$0x1]
      %v767 = vld [vmem:[%s765 + $0x1] sm:$0x1]
      %v770 = vperm.slane %v766, 0
      %v771 = vperm.slane %v767, 0
      %772 = vrot.lane.b32.xlu0 %v770, 4
      %v773 = vpop.permute.xlu0 %772
      %774 = vrot.lane.b32.xlu0 %v771, 4
      %v775 = vpop.permute.xlu0 %774
      %v778 = vmul.f32 %v744, %v773
      %v779 = vmul.f32 %v745, %v773
      %v780 = vmul.f32 %v746, %v775
      %v781 = vmul.f32 %v747, %v775
      %786 = vrot.lane.b32.xlu0 %v778, 124
      %v787 = vpop.permute.xlu0 %786
      %788 = vrot.lane.b32.xlu0 %v779, 124
      %v789 = vpop.permute.xlu0 %788
      %790 = vrot.lane.b32.xlu0 %v780, 124
      %v791 = vpop.permute.xlu0 %790
      %792 = vrot.lane.b32.xlu0 %v781, 124
      %v793 = vpop.permute.xlu0 %792
      %v798 = vadd.f32 %v761, %v787
      %v799 = vadd.f32 %v762, %v789
      %v800 = vadd.f32 %v763, %v791
      %v801 = vadd.f32 %v764, %v793
      %s802 = scalar_lea.vmem %s3, 22
      %v803 = vld [vmem:[%s802] sm:$0x1]
      %v804 = vld [vmem:[%s802 + $0x1] sm:$0x1]
      %v807 = vperm.slane %v803, 0
      %v808 = vperm.slane %v804, 0
      %809 = vrot.lane.b32.xlu0 %v807, 8
      %v810 = vpop.permute.xlu0 %809
      %811 = vrot.lane.b32.xlu0 %v808, 8
      %v812 = vpop.permute.xlu0 %811
      %v815 = vmul.f32 %v744, %v810
      %v816 = vmul.f32 %v745, %v810
      %v817 = vmul.f32 %v746, %v812
      %v818 = vmul.f32 %v747, %v812
      %823 = vrot.lane.b32.xlu0 %v815, 120
      %v824 = vpop.permute.xlu0 %823
      %825 = vrot.lane.b32.xlu0 %v816, 120
      %v826 = vpop.permute.xlu0 %825
      %827 = vrot.lane.b32.xlu0 %v817, 120
      %v828 = vpop.permute.xlu0 %827
      %829 = vrot.lane.b32.xlu0 %v818, 120
      %v830 = vpop.permute.xlu0 %829
      %v835 = vadd.f32 %v798, %v824
      %v836 = vadd.f32 %v799, %v826
      %v837 = vadd.f32 %v800, %v828
      %v838 = vadd.f32 %v801, %v830
      %v839 = vld [vmem:[#allocation3 + $0x1] sm:$0xff]
      %v840 = vld [vmem:[#allocation3 + $0x9] sm:$0xff]
      %v841 = vld [vmem:[#allocation3 + $0x19] sm:$0xff]
      %v842 = vld [vmem:[#allocation3 + $0x21] sm:$0xff]
      %s843 = scalar_lea.vmem %s3, 24
      %v844 = vld [vmem:[%s843] sm:$0x1]
      %v845 = vld [vmem:[%s843 + $0x1] sm:$0x1]
      %v848 = vperm.slane %v844, 0
      %v849 = vperm.slane %v845, 0
      %v852 = vmul.f32 %v839, %v848
      %v853 = vmul.f32 %v840, %v848
      %v854 = vmul.f32 %v841, %v849
      %v855 = vmul.f32 %v842, %v849
      %v856 = vadd.f32 %v835, %v852
      %v857 = vadd.f32 %v836, %v853
      %v858 = vadd.f32 %v837, %v854
      %v859 = vadd.f32 %v838, %v855
      %s860 = scalar_lea.vmem %s3, 26
      %v861 = vld [vmem:[%s860] sm:$0x1]
      %v862 = vld [vmem:[%s860 + $0x1] sm:$0x1]
      %v865 = vperm.slane %v861, 0
      %v866 = vperm.slane %v862, 0
      %867 = vrot.lane.b32.xlu0 %v865, 4
      %v868 = vpop.permute.xlu0 %867
      %869 = vrot.lane.b32.xlu0 %v866, 4
      %v870 = vpop.permute.xlu0 %869
      %v873 = vmul.f32 %v839, %v868
      %v874 = vmul.f32 %v840, %v868
      %v875 = vmul.f32 %v841, %v870
      %v876 = vmul.f32 %v842, %v870
      %881 = vrot.lane.b32.xlu0 %v873, 124
      %v882 = vpop.permute.xlu0 %881
      %883 = vrot.lane.b32.xlu0 %v874, 124
      %v884 = vpop.permute.xlu0 %883
      %885 = vrot.lane.b32.xlu0 %v875, 124
      %v886 = vpop.permute.xlu0 %885
      %887 = vrot.lane.b32.xlu0 %v876, 124
      %v888 = vpop.permute.xlu0 %887
      %v893 = vadd.f32 %v856, %v882
      %v894 = vadd.f32 %v857, %v884
      %v895 = vadd.f32 %v858, %v886
      %v896 = vadd.f32 %v859, %v888
      %s897 = scalar_lea.vmem %s3, 28
      %v898 = vld [vmem:[%s897] sm:$0x1]
      %v899 = vld [vmem:[%s897 + $0x1] sm:$0x1]
      %v902 = vperm.slane %v898, 0
      %v903 = vperm.slane %v899, 0
      %904 = vrot.lane.b32.xlu0 %v902, 8
      %v905 = vpop.permute.xlu0 %904
      %906 = vrot.lane.b32.xlu0 %v903, 8
      %v907 = vpop.permute.xlu0 %906
      %v910 = vmul.f32 %v839, %v905
      %v911 = vmul.f32 %v840, %v905
      %v912 = vmul.f32 %v841, %v907
      %v913 = vmul.f32 %v842, %v907
      %918 = vrot.lane.b32.xlu0 %v910, 120
      %v919 = vpop.permute.xlu0 %918
      %920 = vrot.lane.b32.xlu0 %v911, 120
      %v921 = vpop.permute.xlu0 %920
      %922 = vrot.lane.b32.xlu0 %v912, 120
      %v923 = vpop.permute.xlu0 %922
      %924 = vrot.lane.b32.xlu0 %v913, 120
      %v925 = vpop.permute.xlu0 %924
      %v930 = vadd.f32 %v893, %v919
      %v931 = vadd.f32 %v894, %v921
      %v932 = vadd.f32 %v895, %v923
      %v933 = vadd.f32 %v896, %v925
      %v934 = vld [vmem:[#allocation3 + $0x2] sm:$0xff]
      %v935 = vld [vmem:[#allocation3 + $0xa] sm:$0xff]
      %v936 = vld [vmem:[#allocation3 + $0x1a] sm:$0xff]
      %v937 = vld [vmem:[#allocation3 + $0x22] sm:$0xff]
      %s938 = scalar_lea.vmem %s3, 30
      %v939 = vld [vmem:[%s938] sm:$0x1]
      %v940 = vld [vmem:[%s938 + $0x1] sm:$0x1]
      %v943 = vperm.slane %v939, 0
      %v944 = vperm.slane %v940, 0
      %v947 = vmul.f32 %v934, %v943
      %v948 = vmul.f32 %v935, %v943
      %v949 = vmul.f32 %v936, %v944
      %v950 = vmul.f32 %v937, %v944
      %v951 = vadd.f32 %v930, %v947
      %v952 = vadd.f32 %v931, %v948
      %v953 = vadd.f32 %v932, %v949
      %v954 = vadd.f32 %v933, %v950
      %s955 = scalar_lea.vmem %s3, 32
      %v956 = vld [vmem:[%s955] sm:$0x1]
      %v957 = vld [vmem:[%s955 + $0x1] sm:$0x1]
      %v960 = vperm.slane %v956, 0
      %v961 = vperm.slane %v957, 0
      %962 = vrot.lane.b32.xlu0 %v960, 4
      %v963 = vpop.permute.xlu0 %962
      %964 = vrot.lane.b32.xlu0 %v961, 4
      %v965 = vpop.permute.xlu0 %964
      %v968 = vmul.f32 %v934, %v963
      %v969 = vmul.f32 %v935, %v963
      %v970 = vmul.f32 %v936, %v965
      %v971 = vmul.f32 %v937, %v965
      %976 = vrot.lane.b32.xlu0 %v968, 124
      %v977 = vpop.permute.xlu0 %976
      %978 = vrot.lane.b32.xlu0 %v969, 124
      %v979 = vpop.permute.xlu0 %978
      %980 = vrot.lane.b32.xlu0 %v970, 124
      %v981 = vpop.permute.xlu0 %980
      %982 = vrot.lane.b32.xlu0 %v971, 124
      %v983 = vpop.permute.xlu0 %982
      %v988 = vadd.f32 %v951, %v977
      %v989 = vadd.f32 %v952, %v979
      %v990 = vadd.f32 %v953, %v981
      %v991 = vadd.f32 %v954, %v983
      %s992 = scalar_lea.vmem %s3, 34
      %v993 = vld [vmem:[%s992] sm:$0x1]
      %v994 = vld [vmem:[%s992 + $0x1] sm:$0x1]
      %v997 = vperm.slane %v993, 0
      %v998 = vperm.slane %v994, 0
      %999 = vrot.lane.b32.xlu0 %v997, 8
      %v1000 = vpop.permute.xlu0 %999
      %1001 = vrot.lane.b32.xlu0 %v998, 8
      %v1002 = vpop.permute.xlu0 %1001
      %v1005 = vmul.f32 %v934, %v1000
      %v1006 = vmul.f32 %v935, %v1000
      %v1007 = vmul.f32 %v936, %v1002
      %v1008 = vmul.f32 %v937, %v1002
      %1013 = vrot.lane.b32.xlu0 %v1005, 120
      %v1014 = vpop.permute.xlu0 %1013
      %1015 = vrot.lane.b32.xlu0 %v1006, 120
      %v1016 = vpop.permute.xlu0 %1015
      %1017 = vrot.lane.b32.xlu0 %v1007, 120
      %v1018 = vpop.permute.xlu0 %1017
      %1019 = vrot.lane.b32.xlu0 %v1008, 120
      %v1020 = vpop.permute.xlu0 %1019
      %v1025 = vadd.f32 %v988, %v1014
      %v1026 = vadd.f32 %v989, %v1016
      %v1027 = vadd.f32 %v990, %v1018
      %v1028 = vadd.f32 %v991, %v1020
      %s1029 = scalar_lea.vmem %s3, 38
      %v1030 = vld [vmem:[%s1029] sm:$0x1]
      %v1031 = vld [vmem:[%s1029 + $0x1] sm:$0x1]
      %v1034 = vperm.slane %v1030, 0
      %v1035 = vperm.slane %v1031, 0
      %v1038 = vadd.f32 %v1025, %v1034
      %v1039 = vadd.f32 %v1026, %v1034
      %v1040 = vadd.f32 %v1027, %v1035
      %v1041 = vadd.f32 %v1028, %v1035
      %v1043 = vsel %vm286, %v282, 0
      %v1046 = vsel %vm286, %v283, 0
      %1048 = vmatpush.msra.mxu0 0.0
      %1049 = vmatpush.msra.mxu0 0.0
      %1050 = vmatpush.msra.mxu0 0.0
      %1051 = vmatpush.msra.mxu0 0.0
      %1052 = vmatpush.msra.mxu0 0.0
      %1053 = vmatpush.msra.mxu0 0.0
      %1054 = vmatpush.msra.mxu0 0.0
      %1055 = vmatpush.msra.mxu0 0.0
      %1056 = vmatpush.msra.mxu0 0.0
      %1057 = vmatpush.msra.mxu0 0.0
      %1058 = vmatpush.msra.mxu0 0.0
      %1059 = vmatpush.msra.mxu0 0.0
      %1060 = vmatpush.msra.mxu0 0.0
      %1061 = vmatpush.msra.mxu0 0.0
      %1062 = vmatpush.msra.mxu0 %v1039
      %1063 = vmatpush.msra.mxu0 %v1038
      %1064 = vmatmul.f32.gmra.mxu0 %v1043
      %v1065 = vpop.f32.mrf.mxu0
      %v1066 = vadd.f32 0.0, %v1065
      %1067 = vmatmul.f32.gmra.mxu0 %v1046
      %v1068 = vpop.f32.mrf.mxu0
      %v1069 = vadd.f32 0.0, %v1068
      %1070 = vdwg.mxu0
      %v1072 = vsel %vm286, %v284, 0
      %v1075 = vsel %vm286, %v285, 0
      %1077 = vmatpush.msra.mxu0 0.0
      %1078 = vmatpush.msra.mxu0 0.0
      %1079 = vmatpush.msra.mxu0 0.0
      %1080 = vmatpush.msra.mxu0 0.0
      %1081 = vmatpush.msra.mxu0 0.0
      %1082 = vmatpush.msra.mxu0 0.0
      %1083 = vmatpush.msra.mxu0 0.0
      %1084 = vmatpush.msra.mxu0 0.0
      %1085 = vmatpush.msra.mxu0 0.0
      %1086 = vmatpush.msra.mxu0 0.0
      %1087 = vmatpush.msra.mxu0 0.0
      %1088 = vmatpush.msra.mxu0 0.0
      %1089 = vmatpush.msra.mxu0 0.0
      %1090 = vmatpush.msra.mxu0 0.0
      %1091 = vmatpush.msra.mxu0 %v1041
      %1092 = vmatpush.msra.mxu0 %v1040
      %1093 = vmatmul.f32.gmra.mxu0 %v1072
      %v1094 = vpop.f32.mrf.mxu0
      %v1095 = vadd.f32 0.0, %v1094
      %1096 = vmatmul.f32.gmra.mxu0 %v1075
      %v1097 = vpop.f32.mrf.mxu0
      %v1098 = vadd.f32 0.0, %v1097
      %1099 = vdwg.mxu0
      %v1100 = vsub.f32 %v1066, %v1095
      %v1101 = vsub.f32 %v1069, %v1098
      %1102 = vmatpush.msra.mxu0 0.0
      %1103 = vmatpush.msra.mxu0 0.0
      %1104 = vmatpush.msra.mxu0 0.0
      %1105 = vmatpush.msra.mxu0 0.0
      %1106 = vmatpush.msra.mxu0 0.0
      %1107 = vmatpush.msra.mxu0 0.0
      %1108 = vmatpush.msra.mxu0 0.0
      %1109 = vmatpush.msra.mxu0 0.0
      %1110 = vmatpush.msra.mxu0 0.0
      %1111 = vmatpush.msra.mxu0 0.0
      %1112 = vmatpush.msra.mxu0 0.0
      %1113 = vmatpush.msra.mxu0 0.0
      %1114 = vmatpush.msra.mxu0 0.0
      %1115 = vmatpush.msra.mxu0 0.0
      %1116 = vmatpush.msra.mxu0 %v1041
      %1117 = vmatpush.msra.mxu0 %v1040
      %1118 = vmatmul.f32.gmra.mxu0 %v1043
      %v1119 = vpop.f32.mrf.mxu0
      %v1120 = vadd.f32 0.0, %v1119
      %1121 = vmatmul.f32.gmra.mxu0 %v1046
      %v1122 = vpop.f32.mrf.mxu0
      %v1123 = vadd.f32 0.0, %v1122
      %1124 = vdwg.mxu0
      %1125 = vmatpush.msra.mxu0 0.0
      %1126 = vmatpush.msra.mxu0 0.0
      %1127 = vmatpush.msra.mxu0 0.0
      %1128 = vmatpush.msra.mxu0 0.0
      %1129 = vmatpush.msra.mxu0 0.0
      %1130 = vmatpush.msra.mxu0 0.0
      %1131 = vmatpush.msra.mxu0 0.0
      %1132 = vmatpush.msra.mxu0 0.0
      %1133 = vmatpush.msra.mxu0 0.0
      %1134 = vmatpush.msra.mxu0 0.0
      %1135 = vmatpush.msra.mxu0 0.0
      %1136 = vmatpush.msra.mxu0 0.0
      %1137 = vmatpush.msra.mxu0 0.0
      %1138 = vmatpush.msra.mxu0 0.0
      %1139 = vmatpush.msra.mxu0 %v1039
      %1140 = vmatpush.msra.mxu0 %v1038
      %1141 = vmatmul.f32.gmra.mxu0 %v1072
      %v1142 = vpop.f32.mrf.mxu0
      %v1143 = vadd.f32 %v1120, %v1142
      %1144 = vmatmul.f32.gmra.mxu0 %v1075
      %v1145 = vpop.f32.mrf.mxu0
      %v1146 = vadd.f32 %v1123, %v1145
      %1147 = vdwg.mxu0
      %1150 = vrot.lane.b32.xlu0 %v1143, 36
      %v1151 = vpop.permute.xlu0 %1150
      %1152 = vrot.lane.b32.xlu0 %v1146, 36
      %v1153 = vpop.permute.xlu0 %1152
      %vm1156 = vcmask 293888
      %v1157 = vsel %vm1156, %v1100, %v1151
      %v1158 = vsel %vm1156, %v1101, %v1153
      %v1159 = vld [vmem:[%s5] sm:$0xff]
      %v1160 = vld [vmem:[%s5 + $0x8] sm:$0xff]
      %v1161 = vld [vmem:[%s5 + $0x10] sm:$0xff]
      %v1162 = vld [vmem:[%s5 + $0x18] sm:$0xff]
      %v1163 = vld [vmem:[%s5 + $0x20] sm:$0xff]
      %v1164 = vld [vmem:[%s5 + $0x28] sm:$0xff]
      %v1165 = vld [vmem:[%s5 + $0x30] sm:$0xff]
      %v1166 = vld [vmem:[%s5 + $0x38] sm:$0xff]
      %v1167 = vld [vmem:[%s5 + $0x40] sm:$0xff]
      %vm1168 = vcmask 588800
      %v1170 = vsel %vm1168, %v1157, 0
      %v1173 = vsel %vm1168, %v1158, 0
      %1175 = vmatpush.msra.mxu0 0.0
      %1176 = vmatpush.msra.mxu0 0.0
      %1177 = vmatpush.msra.mxu0 0.0
      %1178 = vmatpush.msra.mxu0 0.0
      %1179 = vmatpush.msra.mxu0 0.0
      %1180 = vmatpush.msra.mxu0 0.0
      %1181 = vmatpush.msra.mxu0 0.0
      %1182 = vmatpush.msra.mxu0 %v1167
      %1183 = vmatpush.msra.mxu0 %v1166
      %1184 = vmatpush.msra.mxu0 %v1165
      %1185 = vmatpush.msra.mxu0 %v1164
      %1186 = vmatpush.msra.mxu0 %v1163
      %1187 = vmatpush.msra.mxu0 %v1162
      %1188 = vmatpush.msra.mxu0 %v1161
      %1189 = vmatpush.msra.mxu0 %v1160
      %1190 = vmatpush.msra.mxu0 %v1159
      %1191 = vmatmul.f32.gmra.mxu0 %v1170
      %v1192 = vpop.f32.mrf.mxu0
      %v1193 = vadd.f32 0.0, %v1192
      %1194 = vmatmul.f32.gmra.mxu0 %v1173
      %v1195 = vpop.f32.mrf.mxu0
      %v1196 = vadd.f32 0.0, %v1195
      %1197 = vdwg.mxu0
      %v1198 = vld [vmem:[%s4 + $0xe0] sm:$0xff]
      %v1199 = vld [vmem:[%s4 + $0xe8] sm:$0xff]
      %v1200 = vld [vmem:[%s4 + $0xf0] sm:$0xff]
      %v1201 = vld [vmem:[%s4 + $0xf8] sm:$0xff]
      %v1202 = vld [vmem:[%s4 + $0x100] sm:$0xff]
      %v1203 = vld [vmem:[%s4 + $0x108] sm:$0xff]
      %v1204 = vld [vmem:[%s4 + $0x110] sm:$0xff]
      %v1205 = vld [vmem:[%s4 + $0x118] sm:$0xff]
      %v1206 = vld [vmem:[%s4 + $0x120] sm:$0xff]
      %v1207 = vld [vmem:[%s4 + $0x128] sm:$0xff]
      %v1208 = vld [vmem:[%s4 + $0x130] sm:$0xff]
      %v1209 = vld [vmem:[%s4 + $0x138] sm:$0xff]
      %v1210 = vld [vmem:[%s4 + $0x140] sm:$0xff]
      %v1211 = vld [vmem:[%s4 + $0x148] sm:$0xff]
      %v1212 = vld [vmem:[%s4 + $0x150] sm:$0xff]
      %v1213 = vld [vmem:[%s4 + $0x158] sm:$0xff]
      %v1215 = vsel %vm353, %v276, 0
      %v1218 = vsel %vm353, %v277, 0
      %1220 = vmatpush.msra.mxu0 0.0
      %1221 = vmatpush.msra.mxu0 0.0
      %1222 = vmatpush.msra.mxu0 0.0
      %1223 = vmatpush.msra.mxu0 0.0
      %1224 = vmatpush.msra.mxu0 0.0
      %1225 = vmatpush.msra.mxu0 0.0
      %1226 = vmatpush.msra.mxu0 0.0
      %1227 = vmatpush.msra.mxu0 0.0
      %1228 = vmatpush.msra.mxu0 %v1205
      %1229 = vmatpush.msra.mxu0 %v1204
      %1230 = vmatpush.msra.mxu0 %v1203
      %1231 = vmatpush.msra.mxu0 %v1202
      %1232 = vmatpush.msra.mxu0 %v1201
      %1233 = vmatpush.msra.mxu0 %v1200
      %1234 = vmatpush.msra.mxu0 %v1199
      %1235 = vmatpush.msra.mxu0 %v1198
      %1236 = vmatmul.f32.gmra.mxu0 %v1215
      %v1237 = vpop.f32.mrf.mxu0
      %v1238 = vadd.f32 0.0, %v1237
      %1239 = vmatmul.f32.gmra.mxu0 %v1218
      %v1240 = vpop.f32.mrf.mxu0
      %v1241 = vadd.f32 0.0, %v1240
      %1242 = vdwg.mxu0
      %1243 = vmatpush.msra.mxu0 0.0
      %1244 = vmatpush.msra.mxu0 0.0
      %1245 = vmatpush.msra.mxu0 0.0
      %1246 = vmatpush.msra.mxu0 0.0
      %1247 = vmatpush.msra.mxu0 0.0
      %1248 = vmatpush.msra.mxu0 0.0
      %1249 = vmatpush.msra.mxu0 0.0
      %1250 = vmatpush.msra.mxu0 0.0
      %1251 = vmatpush.msra.mxu0 %v1213
      %1252 = vmatpush.msra.mxu0 %v1212
      %1253 = vmatpush.msra.mxu0 %v1211
      %1254 = vmatpush.msra.mxu0 %v1210
      %1255 = vmatpush.msra.mxu0 %v1209
      %1256 = vmatpush.msra.mxu0 %v1208
      %1257 = vmatpush.msra.mxu0 %v1207
      %1258 = vmatpush.msra.mxu0 %v1206
      %1259 = vmatmul.f32.gmra.mxu0 %v1215
      %v1260 = vpop.f32.mrf.mxu0
      %v1261 = vadd.f32 0.0, %v1260
      %1262 = vmatmul.f32.gmra.mxu0 %v1218
      %v1263 = vpop.f32.mrf.mxu0
      %v1264 = vadd.f32 0.0, %v1263
      %1265 = vdwg.mxu0
      %v1266 = vld [vmem:[%s4 + $0x180] sm:$0x1f]
      %vm1267 = vcmask 261120
      %1268 = vst.msk [vmem:[#allocation2 + $0x1] sm:$0xff] %vm1267, %v1261
      %1269 = vst.msk [vmem:[#allocation2 + $0x9] sm:$0xff] %vm1267, %v1264
      %v1270 = vld [vmem:[%s4] sm:$0xff]
      %v1271 = vld [vmem:[%s4 + $0x8] sm:$0xff]
      %v1272 = vld [vmem:[%s4 + $0x10] sm:$0xff]
      %v1273 = vld [vmem:[%s4 + $0x18] sm:$0xff]
      %v1274 = vld [vmem:[#allocation2] sm:$0xff]
      %v1275 = vld [vmem:[#allocation2 + $0x8] sm:$0xff]
      %v1277 = vsel %vm1267, %v1274, 0
      %v1280 = vsel %vm1267, %v1275, 0
      %1282 = vmatpush.msra.mxu0 0.0
      %1283 = vmatpush.msra.mxu0 0.0
      %1284 = vmatpush.msra.mxu0 0.0
      %1285 = vmatpush.msra.mxu0 0.0
      %1286 = vmatpush.msra.mxu0 0.0
      %1287 = vmatpush.msra.mxu0 0.0
      %1288 = vmatpush.msra.mxu0 0.0
      %1289 = vmatpush.msra.mxu0 0.0
      %1290 = vmatpush.msra.mxu0 0.0
      %1291 = vmatpush.msra.mxu0 0.0
      %1292 = vmatpush.msra.mxu0 0.0
      %1293 = vmatpush.msra.mxu0 0.0
      %1294 = vmatpush.msra.mxu0 %v1273
      %1295 = vmatpush.msra.mxu0 %v1272
      %1296 = vmatpush.msra.mxu0 %v1271
      %1297 = vmatpush.msra.mxu0 %v1270
      %1298 = vmatmul.f32.gmra.mxu0 %v1277
      %v1299 = vpop.f32.mrf.mxu0
      %v1300 = vadd.f32 0.0, %v1299
      %1301 = vmatmul.f32.gmra.mxu0 %v1280
      %v1302 = vpop.f32.mrf.mxu0
      %v1303 = vadd.f32 0.0, %v1302
      %1304 = vdwg.mxu0
      %v1305 = vperm.slane %v1266, 0
      %v1306 = vadd.f32 %v1305, %v1300
      %v1307 = vadd.f32 %v1305, %v1303
      %v1308 = vld [vmem:[%s4 + $0x20] sm:$0xff]
      %v1309 = vld [vmem:[%s4 + $0x28] sm:$0xff]
      %v1310 = vld [vmem:[%s4 + $0x30] sm:$0xff]
      %v1311 = vld [vmem:[%s4 + $0x38] sm:$0xff]
      %v1312 = vld [vmem:[#allocation2 + $0x1] sm:$0xff]
      %v1313 = vld [vmem:[#allocation2 + $0x9] sm:$0xff]
      %v1315 = vsel %vm1267, %v1312, 0
      %v1318 = vsel %vm1267, %v1313, 0
      %1320 = vmatpush.msra.mxu0 0.0
      %1321 = vmatpush.msra.mxu0 0.0
      %1322 = vmatpush.msra.mxu0 0.0
      %1323 = vmatpush.msra.mxu0 0.0
      %1324 = vmatpush.msra.mxu0 0.0
      %1325 = vmatpush.msra.mxu0 0.0
      %1326 = vmatpush.msra.mxu0 0.0
      %1327 = vmatpush.msra.mxu0 0.0
      %1328 = vmatpush.msra.mxu0 0.0
      %1329 = vmatpush.msra.mxu0 0.0
      %1330 = vmatpush.msra.mxu0 0.0
      %1331 = vmatpush.msra.mxu0 0.0
      %1332 = vmatpush.msra.mxu0 %v1311
      %1333 = vmatpush.msra.mxu0 %v1310
      %1334 = vmatpush.msra.mxu0 %v1309
      %1335 = vmatpush.msra.mxu0 %v1308
      %1336 = vmatmul.f32.gmra.mxu0 %v1315
      %v1337 = vpop.f32.mrf.mxu0
      %v1338 = vadd.f32 0.0, %v1337
      %1339 = vmatmul.f32.gmra.mxu0 %v1318
      %v1340 = vpop.f32.mrf.mxu0
      %v1341 = vadd.f32 0.0, %v1340
      %1342 = vdwg.mxu0
      %v1343 = vadd.f32 %v1306, %v1338
      %v1344 = vadd.f32 %v1307, %v1341
      %v1345 = vld [vmem:[%s4 + $0x40] sm:$0xff]
      %v1346 = vld [vmem:[%s4 + $0x48] sm:$0xff]
      %v1347 = vld [vmem:[%s4 + $0x50] sm:$0xff]
      %v1348 = vld [vmem:[%s4 + $0x58] sm:$0xff]
      %v1349 = vld [vmem:[#allocation2 + $0x2] sm:$0xff]
      %v1350 = vld [vmem:[#allocation2 + $0xa] sm:$0xff]
      %v1352 = vsel %vm1267, %v1349, 0
      %v1355 = vsel %vm1267, %v1350, 0
      %1357 = vmatpush.msra.mxu0 0.0
      %1358 = vmatpush.msra.mxu0 0.0
      %1359 = vmatpush.msra.mxu0 0.0
      %1360 = vmatpush.msra.mxu0 0.0
      %1361 = vmatpush.msra.mxu0 0.0
      %1362 = vmatpush.msra.mxu0 0.0
      %1363 = vmatpush.msra.mxu0 0.0
      %1364 = vmatpush.msra.mxu0 0.0
      %1365 = vmatpush.msra.mxu0 0.0
      %1366 = vmatpush.msra.mxu0 0.0
      %1367 = vmatpush.msra.mxu0 0.0
      %1368 = vmatpush.msra.mxu0 0.0
      %1369 = vmatpush.msra.mxu0 %v1348
      %1370 = vmatpush.msra.mxu0 %v1347
      %1371 = vmatpush.msra.mxu0 %v1346
      %1372 = vmatpush.msra.mxu0 %v1345
      %1373 = vmatmul.f32.gmra.mxu0 %v1352
      %v1374 = vpop.f32.mrf.mxu0
      %v1375 = vadd.f32 0.0, %v1374
      %1376 = vmatmul.f32.gmra.mxu0 %v1355
      %v1377 = vpop.f32.mrf.mxu0
      %v1378 = vadd.f32 0.0, %v1377
      %1379 = vdwg.mxu0
      %v1380 = vadd.f32 %v1343, %v1375
      %v1381 = vadd.f32 %v1344, %v1378
      %v1382 = vld [vmem:[%s4 + $0x160] sm:$0xff]
      %v1383 = vld [vmem:[%s4 + $0x168] sm:$0xff]
      %v1384 = vld [vmem:[%s4 + $0x170] sm:$0xff]
      %v1385 = vld [vmem:[%s4 + $0x178] sm:$0xff]
      %v1387 = vsel %vm1267, %v1380, 0
      %v1390 = vsel %vm1267, %v1381, 0
      %1392 = vmatpush.msra.mxu0 0.0
      %1393 = vmatpush.msra.mxu0 0.0
      %1394 = vmatpush.msra.mxu0 0.0
      %1395 = vmatpush.msra.mxu0 0.0
      %1396 = vmatpush.msra.mxu0 0.0
      %1397 = vmatpush.msra.mxu0 0.0
      %1398 = vmatpush.msra.mxu0 0.0
      %1399 = vmatpush.msra.mxu0 0.0
      %1400 = vmatpush.msra.mxu0 0.0
      %1401 = vmatpush.msra.mxu0 0.0
      %1402 = vmatpush.msra.mxu0 0.0
      %1403 = vmatpush.msra.mxu0 0.0
      %1404 = vmatpush.msra.mxu0 %v1385
      %1405 = vmatpush.msra.mxu0 %v1384
      %1406 = vmatpush.msra.mxu0 %v1383
      %1407 = vmatpush.msra.mxu0 %v1382
      %1408 = vmatmul.f32.gmra.mxu0 %v1387
      %v1409 = vpop.f32.mrf.mxu0
      %v1410 = vadd.f32 0.0, %v1409
      %1411 = vmatmul.f32.gmra.mxu0 %v1390
      %v1412 = vpop.f32.mrf.mxu0
      %v1413 = vadd.f32 0.0, %v1412
      %1414 = vdwg.mxu0
      %v1415 = vsel %vm1267, %v1410, 0.0
      %v1416 = vsel %vm1267, %v1413, 0.0
      %v1417 = vadd.f32 %v1415, %v1416
      %v1418 = vrot.slane %v1417, 4
      %v1419 = vadd.f32 %v1417, %v1418
      %v1420 = vrot.slane %v1419, 2
      %v1421 = vadd.f32 %v1419, %v1420
      %v1422 = vrot.slane %v1421, 1
      %v1423 = vadd.f32 %v1421, %v1422
      %v1424 = vrcp.pop 16.0
      %v1425 = vmul.f32 16.0, %v1424
      %v1426 = vsub.f32 1.0, %v1425
      %v1427 = vmul.f32 %v1424, %v1426
      %v1428 = vadd.f32 %v1424, %v1427
      %vm1429 = vweird.f32 %v1424
      %v1430 = vsel %vm1429, %v1424, %v1428
      %v1431 = vmul.f32 %v1423, %v1430
      %v1432 = vmul.f32 %v1380, %v1380
      %v1433 = vmul.f32 %v1381, %v1381
      %v1435 = vsel %vm1267, %v1432, 0
      %v1438 = vsel %vm1267, %v1433, 0
      %1440 = vmatpush.msra.mxu0 0.0
      %1441 = vmatpush.msra.mxu0 0.0
      %1442 = vmatpush.msra.mxu0 0.0
      %1443 = vmatpush.msra.mxu0 0.0
      %1444 = vmatpush.msra.mxu0 0.0
      %1445 = vmatpush.msra.mxu0 0.0
      %1446 = vmatpush.msra.mxu0 0.0
      %1447 = vmatpush.msra.mxu0 0.0
      %1448 = vmatpush.msra.mxu0 0.0
      %1449 = vmatpush.msra.mxu0 0.0
      %1450 = vmatpush.msra.mxu0 0.0
      %1451 = vmatpush.msra.mxu0 0.0
      %1452 = vmatpush.msra.mxu0 %v1385
      %1453 = vmatpush.msra.mxu0 %v1384
      %1454 = vmatpush.msra.mxu0 %v1383
      %1455 = vmatpush.msra.mxu0 %v1382
      %1456 = vmatmul.f32.gmra.mxu0 %v1435
      %v1457 = vpop.f32.mrf.mxu0
      %v1458 = vadd.f32 0.0, %v1457
      %1459 = vmatmul.f32.gmra.mxu0 %v1438
      %v1460 = vpop.f32.mrf.mxu0
      %v1461 = vadd.f32 0.0, %v1460
      %1462 = vdwg.mxu0
      %v1463 = vsel %vm1267, %v1458, 0.0
      %v1464 = vsel %vm1267, %v1461, 0.0
      %v1465 = vadd.f32 %v1463, %v1464
      %v1466 = vrot.slane %v1465, 4
      %v1467 = vadd.f32 %v1465, %v1466
      %v1468 = vrot.slane %v1467, 2
      %v1469 = vadd.f32 %v1467, %v1468
      %v1470 = vrot.slane %v1469, 1
      %v1471 = vadd.f32 %v1469, %v1470
      %v1472 = vmul.f32 %v1471, %v1430
      %v1473 = vmul.f32 %v1431, %v1431
      %v1474 = vsub.f32 %v1472, %v1473
      %v1475 = vadd.f32 %v1474, 1e-05
      %v1476 = vrsqrt.pop %v1475
      %v1477 = vmul.f32 %v1476, %v1475
      %v1478 = vmul.f32 %v1477, %v1476
      %v1479 = vmul.f32 0.5, %v1478
      %v1480 = vsub.f32 1.5, %v1479
      %v1481 = vmul.f32 %v1476, %v1480
      %vm1482 = vweird.f32 %v1475
      %vm1483 = vweird.f32 %v1476
      %vm1484 = vmor %vm1482, %vm1483
      %v1485 = vsel %vm1484, %v1476, %v1481
      %v1486 = vsub.f32 %v1380, %v1431
      %v1487 = vsub.f32 %v1381, %v1431
      %v1488 = vmul.f32 %v1486, %v1485
      %v1489 = vmul.f32 %v1487, %v1485
      %v1490 = vperm.slane %v1266, 3
      %v1491 = vmul.f32 %v1488, %v1490
      %v1492 = vmul.f32 %v1489, %v1490
      %v1493 = vperm.slane %v1266, 4
      %v1494 = vadd.f32 %v1491, %v1493
      %v1495 = vadd.f32 %v1492, %v1493
      %v1496 = vlaneseq
      %v1497 = vand.u32 %v1496, 127
      %vm1498 = vcmp.lt.s32.totalorder %v1497, 0
      %v1499 = vsub.s32 0, %v1497
      %v1500 = vsel %vm1498, %v1499, %v1497
      %v1501 = vshrl.u32 %v1500, 1
      %v1502 = vand.u32 %v1500, 1
      %v1503 = vsub.s32 0, %v1502
      %v1504 = vsel %vm1498, %v1503, %v1502
      %vm1505 = vcmp.ne.s32.totalorder %v1504, 0
      %vm1506 = vcmp.lt.s32.totalorder %v1504, 0
      %vm1507 = vmand %vm1506, %vm1505
      %v1508 = vadd.s32 %v1504, 2
      %v1509 = vsel %vm1507, %v1508, %v1504
      %vm1510 = vcmp.lt.s32.totalorder %v1509, 1
      %v1511 = vsel %vm1510, %v1494, %v1380
      %v1512 = vsel %vm1510, %v1495, %v1381
      %vm1513 = vcmp.ge.f32.partialorder %v1511, 0.0
      %vm1514 = vcmp.ge.f32.partialorder %v1512, 0.0
      %v1515 = vmul.f32 %v1511, 0.1
      %v1516 = vmul.f32 %v1512, 0.1
      %v1517 = vsel %vm1513, %v1511, %v1515
      %v1518 = vsel %vm1514, %v1512, %v1516
      %1519 = vst.msk [vmem:[#allocation2 + $0x1] sm:$0xff] %vm1267, %v1517
      %1520 = vst.msk [vmem:[#allocation2 + $0x9] sm:$0xff] %vm1267, %v1518
      %v1521 = vld [vmem:[%s4 + $0x60] sm:$0xff]
      %v1522 = vld [vmem:[%s4 + $0x68] sm:$0xff]
      %v1523 = vld [vmem:[%s4 + $0x70] sm:$0xff]
      %v1524 = vld [vmem:[%s4 + $0x78] sm:$0xff]
      %v1525 = vld [vmem:[#allocation2] sm:$0xff]
      %v1526 = vld [vmem:[#allocation2 + $0x8] sm:$0xff]
      %v1528 = vsel %vm1267, %v1525, 0
      %v1531 = vsel %vm1267, %v1526, 0
      %1533 = vmatpush.msra.mxu0 0.0
      %1534 = vmatpush.msra.mxu0 0.0
      %1535 = vmatpush.msra.mxu0 0.0
      %1536 = vmatpush.msra.mxu0 0.0
      %1537 = vmatpush.msra.mxu0 0.0
      %1538 = vmatpush.msra.mxu0 0.0
      %1539 = vmatpush.msra.mxu0 0.0
      %1540 = vmatpush.msra.mxu0 0.0
      %1541 = vmatpush.msra.mxu0 0.0
      %1542 = vmatpush.msra.mxu0 0.0
      %1543 = vmatpush.msra.mxu0 0.0
      %1544 = vmatpush.msra.mxu0 0.0
      %1545 = vmatpush.msra.mxu0 %v1524
      %1546 = vmatpush.msra.mxu0 %v1523
      %1547 = vmatpush.msra.mxu0 %v1522
      %1548 = vmatpush.msra.mxu0 %v1521
      %1549 = vmatmul.f32.gmra.mxu0 %v1528
      %v1550 = vpop.f32.mrf.mxu0
      %v1551 = vadd.f32 0.0, %v1550
      %1552 = vmatmul.f32.gmra.mxu0 %v1531
      %v1553 = vpop.f32.mrf.mxu0
      %v1554 = vadd.f32 0.0, %v1553
      %1555 = vdwg.mxu0
      %v1556 = vperm.slane %v1266, 1
      %v1557 = vadd.f32 %v1556, %v1551
      %v1558 = vadd.f32 %v1556, %v1554
      %v1559 = vld [vmem:[%s4 + $0x80] sm:$0xff]
      %v1560 = vld [vmem:[%s4 + $0x88] sm:$0xff]
      %v1561 = vld [vmem:[%s4 + $0x90] sm:$0xff]
      %v1562 = vld [vmem:[%s4 + $0x98] sm:$0xff]
      %v1563 = vld [vmem:[#allocation2 + $0x1] sm:$0xff]
      %v1564 = vld [vmem:[#allocation2 + $0x9] sm:$0xff]
      %v1566 = vsel %vm1267, %v1563, 0
      %v1569 = vsel %vm1267, %v1564, 0
      %1571 = vmatpush.msra.mxu0 0.0
      %1572 = vmatpush.msra.mxu0 0.0
      %1573 = vmatpush.msra.mxu0 0.0
      %1574 = vmatpush.msra.mxu0 0.0
      %1575 = vmatpush.msra.mxu0 0.0
      %1576 = vmatpush.msra.mxu0 0.0
      %1577 = vmatpush.msra.mxu0 0.0
      %1578 = vmatpush.msra.mxu0 0.0
      %1579 = vmatpush.msra.mxu0 0.0
      %1580 = vmatpush.msra.mxu0 0.0
      %1581 = vmatpush.msra.mxu0 0.0
      %1582 = vmatpush.msra.mxu0 0.0
      %1583 = vmatpush.msra.mxu0 %v1562
      %1584 = vmatpush.msra.mxu0 %v1561
      %1585 = vmatpush.msra.mxu0 %v1560
      %1586 = vmatpush.msra.mxu0 %v1559
      %1587 = vmatmul.f32.gmra.mxu0 %v1566
      %v1588 = vpop.f32.mrf.mxu0
      %v1589 = vadd.f32 0.0, %v1588
      %1590 = vmatmul.f32.gmra.mxu0 %v1569
      %v1591 = vpop.f32.mrf.mxu0
      %v1592 = vadd.f32 0.0, %v1591
      %1593 = vdwg.mxu0
      %v1594 = vadd.f32 %v1557, %v1589
      %v1595 = vadd.f32 %v1558, %v1592
      %v1596 = vld [vmem:[%s4 + $0xa0] sm:$0xff]
      %v1597 = vld [vmem:[%s4 + $0xa8] sm:$0xff]
      %v1598 = vld [vmem:[%s4 + $0xb0] sm:$0xff]
      %v1599 = vld [vmem:[%s4 + $0xb8] sm:$0xff]
      %v1600 = vld [vmem:[#allocation2 + $0x2] sm:$0xff]
      %v1601 = vld [vmem:[#allocation2 + $0xa] sm:$0xff]
      %v1603 = vsel %vm1267, %v1600, 0
      %v1606 = vsel %vm1267, %v1601, 0
      %1608 = vmatpush.msra.mxu0 0.0
      %1609 = vmatpush.msra.mxu0 0.0
      %1610 = vmatpush.msra.mxu0 0.0
      %1611 = vmatpush.msra.mxu0 0.0
      %1612 = vmatpush.msra.mxu0 0.0
      %1613 = vmatpush.msra.mxu0 0.0
      %1614 = vmatpush.msra.mxu0 0.0
      %1615 = vmatpush.msra.mxu0 0.0
      %1616 = vmatpush.msra.mxu0 0.0
      %1617 = vmatpush.msra.mxu0 0.0
      %1618 = vmatpush.msra.mxu0 0.0
      %1619 = vmatpush.msra.mxu0 0.0
      %1620 = vmatpush.msra.mxu0 %v1599
      %1621 = vmatpush.msra.mxu0 %v1598
      %1622 = vmatpush.msra.mxu0 %v1597
      %1623 = vmatpush.msra.mxu0 %v1596
      %1624 = vmatmul.f32.gmra.mxu0 %v1603
      %v1625 = vpop.f32.mrf.mxu0
      %v1626 = vadd.f32 0.0, %v1625
      %1627 = vmatmul.f32.gmra.mxu0 %v1606
      %v1628 = vpop.f32.mrf.mxu0
      %v1629 = vadd.f32 0.0, %v1628
      %1630 = vdwg.mxu0
      %v1631 = vadd.f32 %v1594, %v1626
      %v1632 = vadd.f32 %v1595, %v1629
      %vm1633 = vcmp.ge.f32.partialorder %v1631, 0.0
      %vm1634 = vcmp.ge.f32.partialorder %v1632, 0.0
      %v1635 = vmul.f32 %v1631, 0.1
      %v1636 = vmul.f32 %v1632, 0.1
      %v1637 = vsel %vm1633, %v1631, %v1635
      %v1638 = vsel %vm1634, %v1632, %v1636
      %v1639 = vld [vmem:[%s4 + $0xc0] sm:$0xff]
      %v1640 = vld [vmem:[%s4 + $0xc8] sm:$0xff]
      %v1641 = vld [vmem:[%s4 + $0xd0] sm:$0xff]
      %v1642 = vld [vmem:[%s4 + $0xd8] sm:$0xff]
      %v1643 = vperm.slane %v1266, 2
      %v1645 = vsel %vm1267, %v1261, 0
      %v1648 = vsel %vm1267, %v1264, 0
      %1650 = vmatpush.msra.mxu0 0.0
      %1651 = vmatpush.msra.mxu0 0.0
      %1652 = vmatpush.msra.mxu0 0.0
      %1653 = vmatpush.msra.mxu0 0.0
      %1654 = vmatpush.msra.mxu0 0.0
      %1655 = vmatpush.msra.mxu0 0.0
      %1656 = vmatpush.msra.mxu0 0.0
      %1657 = vmatpush.msra.mxu0 0.0
      %1658 = vmatpush.msra.mxu0 0.0
      %1659 = vmatpush.msra.mxu0 0.0
      %1660 = vmatpush.msra.mxu0 0.0
      %1661 = vmatpush.msra.mxu0 0.0
      %1662 = vmatpush.msra.mxu0 %v1642
      %1663 = vmatpush.msra.mxu0 %v1641
      %1664 = vmatpush.msra.mxu0 %v1640
      %1665 = vmatpush.msra.mxu0 %v1639
      %1666 = vmatmul.f32.gmra.mxu0 %v1645
      %v1667 = vpop.f32.mrf.mxu0
      %v1668 = vadd.f32 %v1643, %v1667
      %1669 = vmatmul.f32.gmra.mxu0 %v1648
      %v1670 = vpop.f32.mrf.mxu0
      %v1671 = vadd.f32 %v1643, %v1670
      %1672 = vdwg.mxu0
      %v1673 = vadd.f32 %v1637, %v1668
      %v1674 = vadd.f32 %v1638, %v1671
      %v1675 = vadd.f32 %v1238, %v1673
      %v1676 = vadd.f32 %v1241, %v1674
      %v1677 = vld [vmem:[%s5 + $0x408] sm:$0x1f]
      %1678 = vst.msk [vmem:[#allocation2 + $0x1] sm:$0xff] %vm1267, %v1675
      %1679 = vst.msk [vmem:[#allocation2 + $0x9] sm:$0xff] %vm1267, %v1676
      %v1680 = vld [vmem:[%s5 + $0x48] sm:$0xff]
      %v1681 = vld [vmem:[%s5 + $0x50] sm:$0xff]
      %v1682 = vld [vmem:[%s5 + $0x58] sm:$0xff]
      %v1683 = vld [vmem:[%s5 + $0x60] sm:$0xff]
      %v1684 = vld [vmem:[#allocation2] sm:$0xff]
      %v1685 = vld [vmem:[#allocation2 + $0x8] sm:$0xff]
      %v1687 = vsel %vm1267, %v1684, 0
      %v1690 = vsel %vm1267, %v1685, 0
      %1692 = vmatpush.msra.mxu0 0.0
      %1693 = vmatpush.msra.mxu0 0.0
      %1694 = vmatpush.msra.mxu0 0.0
      %1695 = vmatpush.msra.mxu0 0.0
      %1696 = vmatpush.msra.mxu0 0.0
      %1697 = vmatpush.msra.mxu0 0.0
      %1698 = vmatpush.msra.mxu0 0.0
      %1699 = vmatpush.msra.mxu0 0.0
      %1700 = vmatpush.msra.mxu0 0.0
      %1701 = vmatpush.msra.mxu0 0.0
      %1702 = vmatpush.msra.mxu0 0.0
      %1703 = vmatpush.msra.mxu0 0.0
      %1704 = vmatpush.msra.mxu0 %v1683
      %1705 = vmatpush.msra.mxu0 %v1682
      %1706 = vmatpush.msra.mxu0 %v1681
      %1707 = vmatpush.msra.mxu0 %v1680
      %1708 = vmatmul.f32.gmra.mxu0 %v1687
      %v1709 = vpop.f32.mrf.mxu0
      %v1710 = vadd.f32 0.0, %v1709
      %1711 = vmatmul.f32.gmra.mxu0 %v1690
      %v1712 = vpop.f32.mrf.mxu0
      %v1713 = vadd.f32 0.0, %v1712
      %1714 = vdwg.mxu0
      %v1715 = vperm.slane %v1677, 0
      %v1716 = vadd.f32 %v1715, %v1710
      %v1717 = vadd.f32 %v1715, %v1713
      %v1718 = vld [vmem:[%s5 + $0x68] sm:$0xff]
      %v1719 = vld [vmem:[%s5 + $0x70] sm:$0xff]
      %v1720 = vld [vmem:[%s5 + $0x78] sm:$0xff]
      %v1721 = vld [vmem:[%s5 + $0x80] sm:$0xff]
      %v1722 = vld [vmem:[#allocation2 + $0x1] sm:$0xff]
      %v1723 = vld [vmem:[#allocation2 + $0x9] sm:$0xff]
      %v1725 = vsel %vm1267, %v1722, 0
      %v1728 = vsel %vm1267, %v1723, 0
      %1730 = vmatpush.msra.mxu0 0.0
      %1731 = vmatpush.msra.mxu0 0.0
      %1732 = vmatpush.msra.mxu0 0.0
      %1733 = vmatpush.msra.mxu0 0.0
      %1734 = vmatpush.msra.mxu0 0.0
      %1735 = vmatpush.msra.mxu0 0.0
      %1736 = vmatpush.msra.mxu0 0.0
      %1737 = vmatpush.msra.mxu0 0.0
      %1738 = vmatpush.msra.mxu0 0.0
      %1739 = vmatpush.msra.mxu0 0.0
      %1740 = vmatpush.msra.mxu0 0.0
      %1741 = vmatpush.msra.mxu0 0.0
      %1742 = vmatpush.msra.mxu0 %v1721
      %1743 = vmatpush.msra.mxu0 %v1720
      %1744 = vmatpush.msra.mxu0 %v1719
      %1745 = vmatpush.msra.mxu0 %v1718
      %1746 = vmatmul.f32.gmra.mxu0 %v1725
      %v1747 = vpop.f32.mrf.mxu0
      %v1748 = vadd.f32 0.0, %v1747
      %1749 = vmatmul.f32.gmra.mxu0 %v1728
      %v1750 = vpop.f32.mrf.mxu0
      %v1751 = vadd.f32 0.0, %v1750
      %1752 = vdwg.mxu0
      %v1753 = vadd.f32 %v1716, %v1748
      %v1754 = vadd.f32 %v1717, %v1751
      %v1755 = vld [vmem:[%s5 + $0x88] sm:$0xff]
      %v1756 = vld [vmem:[%s5 + $0x90] sm:$0xff]
      %v1757 = vld [vmem:[%s5 + $0x98] sm:$0xff]
      %v1758 = vld [vmem:[%s5 + $0xa0] sm:$0xff]
      %v1759 = vld [vmem:[#allocation2 + $0x2] sm:$0xff]
      %v1760 = vld [vmem:[#allocation2 + $0xa] sm:$0xff]
      %v1762 = vsel %vm1267, %v1759, 0
      %v1765 = vsel %vm1267, %v1760, 0
      %1767 = vmatpush.msra.mxu0 0.0
      %1768 = vmatpush.msra.mxu0 0.0
      %1769 = vmatpush.msra.mxu0 0.0
      %1770 = vmatpush.msra.mxu0 0.0
      %1771 = vmatpush.msra.mxu0 0.0
      %1772 = vmatpush.msra.mxu0 0.0
      %1773 = vmatpush.msra.mxu0 0.0
      %1774 = vmatpush.msra.mxu0 0.0
      %1775 = vmatpush.msra.mxu0 0.0
      %1776 = vmatpush.msra.mxu0 0.0
      %1777 = vmatpush.msra.mxu0 0.0
      %1778 = vmatpush.msra.mxu0 0.0
      %1779 = vmatpush.msra.mxu0 %v1758
      %1780 = vmatpush.msra.mxu0 %v1757
      %1781 = vmatpush.msra.mxu0 %v1756
      %1782 = vmatpush.msra.mxu0 %v1755
      %1783 = vmatmul.f32.gmra.mxu0 %v1762
      %v1784 = vpop.f32.mrf.mxu0
      %v1785 = vadd.f32 0.0, %v1784
      %1786 = vmatmul.f32.gmra.mxu0 %v1765
      %v1787 = vpop.f32.mrf.mxu0
      %v1788 = vadd.f32 0.0, %v1787
      %1789 = vdwg.mxu0
      %v1790 = vadd.f32 %v1753, %v1785
      %v1791 = vadd.f32 %v1754, %v1788
      %v1792 = vld [vmem:[%s5 + $0x188] sm:$0xff]
      %v1793 = vld [vmem:[%s5 + $0x190] sm:$0xff]
      %v1794 = vld [vmem:[%s5 + $0x198] sm:$0xff]
      %v1795 = vld [vmem:[%s5 + $0x1a0] sm:$0xff]
      %v1796 = vld [vmem:[%s5 + $0x1a8] sm:$0xff]
      %v1797 = vld [vmem:[%s5 + $0x1b0] sm:$0xff]
      %v1798 = vld [vmem:[%s5 + $0x1b8] sm:$0xff]
      %v1799 = vld [vmem:[%s5 + $0x1c0] sm:$0xff]
      %v1801 = vsel %vm353, %v1790, 0
      %v1804 = vsel %vm353, %v1791, 0
      %1806 = vmatpush.msra.mxu0 0.0
      %1807 = vmatpush.msra.mxu0 0.0
      %1808 = vmatpush.msra.mxu0 0.0
      %1809 = vmatpush.msra.mxu0 0.0
      %1810 = vmatpush.msra.mxu0 0.0
      %1811 = vmatpush.msra.mxu0 0.0
      %1812 = vmatpush.msra.mxu0 0.0
      %1813 = vmatpush.msra.mxu0 0.0
      %1814 = vmatpush.msra.mxu0 %v1799
      %1815 = vmatpush.msra.mxu0 %v1798
      %1816 = vmatpush.msra.mxu0 %v1797
      %1817 = vmatpush.msra.mxu0 %v1796
      %1818 = vmatpush.msra.mxu0 %v1795
      %1819 = vmatpush.msra.mxu0 %v1794
      %1820 = vmatpush.msra.mxu0 %v1793
      %1821 = vmatpush.msra.mxu0 %v1792
      %1822 = vmatmul.f32.gmra.mxu0 %v1801
      %v1823 = vpop.f32.mrf.mxu0
      %v1824 = vadd.f32 0.0, %v1823
      %1825 = vmatmul.f32.gmra.mxu0 %v1804
      %v1826 = vpop.f32.mrf.mxu0
      %v1827 = vadd.f32 0.0, %v1826
      %1828 = vdwg.mxu0
      %v1829 = vsel %vm353, %v1824, 0.0
      %v1830 = vsel %vm353, %v1827, 0.0
      %v1831 = vadd.f32 %v1829, %v1830
      %v1832 = vrot.slane %v1831, 4
      %v1833 = vadd.f32 %v1831, %v1832
      %v1834 = vrot.slane %v1833, 2
      %v1835 = vadd.f32 %v1833, %v1834
      %v1836 = vrot.slane %v1835, 1
      %v1837 = vadd.f32 %v1835, %v1836
      %v1838 = vmul.f32 %v1837, %v1430
      %v1839 = vmul.f32 %v1790, %v1790
      %v1840 = vmul.f32 %v1791, %v1791
      %v1842 = vsel %vm353, %v1839, 0
      %v1845 = vsel %vm353, %v1840, 0
      %1847 = vmatpush.msra.mxu0 0.0
      %1848 = vmatpush.msra.mxu0 0.0
      %1849 = vmatpush.msra.mxu0 0.0
      %1850 = vmatpush.msra.mxu0 0.0
      %1851 = vmatpush.msra.mxu0 0.0
      %1852 = vmatpush.msra.mxu0 0.0
      %1853 = vmatpush.msra.mxu0 0.0
      %1854 = vmatpush.msra.mxu0 0.0
      %1855 = vmatpush.msra.mxu0 %v1799
      %1856 = vmatpush.msra.mxu0 %v1798
      %1857 = vmatpush.msra.mxu0 %v1797
      %1858 = vmatpush.msra.mxu0 %v1796
      %1859 = vmatpush.msra.mxu0 %v1795
      %1860 = vmatpush.msra.mxu0 %v1794
      %1861 = vmatpush.msra.mxu0 %v1793
      %1862 = vmatpush.msra.mxu0 %v1792
      %1863 = vmatmul.f32.gmra.mxu0 %v1842
      %v1864 = vpop.f32.mrf.mxu0
      %v1865 = vadd.f32 0.0, %v1864
      %1866 = vmatmul.f32.gmra.mxu0 %v1845
      %v1867 = vpop.f32.mrf.mxu0
      %v1868 = vadd.f32 0.0, %v1867
      %1869 = vdwg.mxu0
      %v1870 = vsel %vm353, %v1865, 0.0
      %v1871 = vsel %vm353, %v1868, 0.0
      %v1872 = vadd.f32 %v1870, %v1871
      %v1873 = vrot.slane %v1872, 4
      %v1874 = vadd.f32 %v1872, %v1873
      %v1875 = vrot.slane %v1874, 2
      %v1876 = vadd.f32 %v1874, %v1875
      %v1877 = vrot.slane %v1876, 1
      %v1878 = vadd.f32 %v1876, %v1877
      %v1879 = vmul.f32 %v1878, %v1430
      %v1880 = vmul.f32 %v1838, %v1838
      %v1881 = vsub.f32 %v1879, %v1880
      %v1882 = vadd.f32 %v1881, 1e-05
      %v1883 = vrsqrt.pop %v1882
      %v1884 = vmul.f32 %v1883, %v1882
      %v1885 = vmul.f32 %v1884, %v1883
      %v1886 = vmul.f32 0.5, %v1885
      %v1887 = vsub.f32 1.5, %v1886
      %v1888 = vmul.f32 %v1883, %v1887
      %vm1889 = vweird.f32 %v1882
      %vm1890 = vweird.f32 %v1883
      %vm1891 = vmor %vm1889, %vm1890
      %v1892 = vsel %vm1891, %v1883, %v1888
      %v1893 = vsub.f32 %v1790, %v1838
      %v1894 = vsub.f32 %v1791, %v1838
      %v1895 = vmul.f32 %v1893, %v1892
      %v1896 = vmul.f32 %v1894, %v1892
      %v1897 = vperm.slane %v1677, 3
      %v1898 = vmul.f32 %v1895, %v1897
      %v1899 = vmul.f32 %v1896, %v1897
      %v1900 = vperm.slane %v1677, 4
      %v1901 = vadd.f32 %v1898, %v1900
      %v1902 = vadd.f32 %v1899, %v1900
      %v1903 = vsel %vm1510, %v1901, %v1790
      %v1904 = vsel %vm1510, %v1902, %v1791
      %vm1905 = vcmp.ge.f32.partialorder %v1903, 0.0
      %vm1906 = vcmp.ge.f32.partialorder %v1904, 0.0
      %v1907 = vmul.f32 %v1903, 0.1
      %v1908 = vmul.f32 %v1904, 0.1
      %v1909 = vsel %vm1905, %v1903, %v1907
      %v1910 = vsel %vm1906, %v1904, %v1908
      %1911 = vst.msk [vmem:[#allocation2 + $0x1] sm:$0xff] %vm353, %v1909
      %1912 = vst.msk [vmem:[#allocation2 + $0x9] sm:$0xff] %vm353, %v1910
      %v1913 = vld [vmem:[%s5 + $0xa8] sm:$0xff]
      %v1914 = vld [vmem:[%s5 + $0xb0] sm:$0xff]
      %v1915 = vld [vmem:[%s5 + $0xb8] sm:$0xff]
      %v1916 = vld [vmem:[%s5 + $0xc0] sm:$0xff]
      %v1917 = vld [vmem:[%s5 + $0xc8] sm:$0xff]
      %v1918 = vld [vmem:[%s5 + $0xd0] sm:$0xff]
      %v1919 = vld [vmem:[%s5 + $0xd8] sm:$0xff]
      %v1920 = vld [vmem:[%s5 + $0xe0] sm:$0xff]
      %v1921 = vld [vmem:[#allocation2] sm:$0xff]
      %v1922 = vld [vmem:[#allocation2 + $0x8] sm:$0xff]
      %v1924 = vsel %vm353, %v1921, 0
      %v1927 = vsel %vm353, %v1922, 0
      %1929 = vmatpush.msra.mxu0 0.0
      %1930 = vmatpush.msra.mxu0 0.0
      %1931 = vmatpush.msra.mxu0 0.0
      %1932 = vmatpush.msra.mxu0 0.0
      %1933 = vmatpush.msra.mxu0 0.0
      %1934 = vmatpush.msra.mxu0 0.0
      %1935 = vmatpush.msra.mxu0 0.0
      %1936 = vmatpush.msra.mxu0 0.0
      %1937 = vmatpush.msra.mxu0 %v1920
      %1938 = vmatpush.msra.mxu0 %v1919
      %1939 = vmatpush.msra.mxu0 %v1918
      %1940 = vmatpush.msra.mxu0 %v1917
      %1941 = vmatpush.msra.mxu0 %v1916
      %1942 = vmatpush.msra.mxu0 %v1915
      %1943 = vmatpush.msra.mxu0 %v1914
      %1944 = vmatpush.msra.mxu0 %v1913
      %1945 = vmatmul.f32.gmra.mxu0 %v1924
      %v1946 = vpop.f32.mrf.mxu0
      %v1947 = vadd.f32 0.0, %v1946
      %1948 = vmatmul.f32.gmra.mxu0 %v1927
      %v1949 = vpop.f32.mrf.mxu0
      %v1950 = vadd.f32 0.0, %v1949
      %1951 = vdwg.mxu0
      %v1952 = vperm.slane %v1677, 1
      %v1953 = vadd.f32 %v1952, %v1947
      %v1954 = vadd.f32 %v1952, %v1950
      %v1955 = vld [vmem:[%s5 + $0xe8] sm:$0xff]
      %v1956 = vld [vmem:[%s5 + $0xf0] sm:$0xff]
      %v1957 = vld [vmem:[%s5 + $0xf8] sm:$0xff]
      %v1958 = vld [vmem:[%s5 + $0x100] sm:$0xff]
      %v1959 = vld [vmem:[%s5 + $0x108] sm:$0xff]
      %v1960 = vld [vmem:[%s5 + $0x110] sm:$0xff]
      %v1961 = vld [vmem:[%s5 + $0x118] sm:$0xff]
      %v1962 = vld [vmem:[%s5 + $0x120] sm:$0xff]
      %v1963 = vld [vmem:[#allocation2 + $0x1] sm:$0xff]
      %v1964 = vld [vmem:[#allocation2 + $0x9] sm:$0xff]
      %v1966 = vsel %vm353, %v1963, 0
      %v1969 = vsel %vm353, %v1964, 0
      %1971 = vmatpush.msra.mxu0 0.0
      %1972 = vmatpush.msra.mxu0 0.0
      %1973 = vmatpush.msra.mxu0 0.0
      %1974 = vmatpush.msra.mxu0 0.0
      %1975 = vmatpush.msra.mxu0 0.0
      %1976 = vmatpush.msra.mxu0 0.0
      %1977 = vmatpush.msra.mxu0 0.0
      %1978 = vmatpush.msra.mxu0 0.0
      %1979 = vmatpush.msra.mxu0 %v1962
      %1980 = vmatpush.msra.mxu0 %v1961
      %1981 = vmatpush.msra.mxu0 %v1960
      %1982 = vmatpush.msra.mxu0 %v1959
      %1983 = vmatpush.msra.mxu0 %v1958
      %1984 = vmatpush.msra.mxu0 %v1957
      %1985 = vmatpush.msra.mxu0 %v1956
      %1986 = vmatpush.msra.mxu0 %v1955
      %1987 = vmatmul.f32.gmra.mxu0 %v1966
      %v1988 = vpop.f32.mrf.mxu0
      %v1989 = vadd.f32 0.0, %v1988
      %1990 = vmatmul.f32.gmra.mxu0 %v1969
      %v1991 = vpop.f32.mrf.mxu0
      %v1992 = vadd.f32 0.0, %v1991
      %1993 = vdwg.mxu0
      %v1994 = vadd.f32 %v1953, %v1989
      %v1995 = vadd.f32 %v1954, %v1992
      %v1996 = vld [vmem:[%s5 + $0x128] sm:$0xff]
      %v1997 = vld [vmem:[%s5 + $0x130] sm:$0xff]
      %v1998 = vld [vmem:[%s5 + $0x138] sm:$0xff]
      %v1999 = vld [vmem:[%s5 + $0x140] sm:$0xff]
      %v2000 = vld [vmem:[%s5 + $0x148] sm:$0xff]
      %v2001 = vld [vmem:[%s5 + $0x150] sm:$0xff]
      %v2002 = vld [vmem:[%s5 + $0x158] sm:$0xff]
      %v2003 = vld [vmem:[%s5 + $0x160] sm:$0xff]
      %v2004 = vld [vmem:[#allocation2 + $0x2] sm:$0xff]
      %v2005 = vld [vmem:[#allocation2 + $0xa] sm:$0xff]
      %v2007 = vsel %vm353, %v2004, 0
      %v2010 = vsel %vm353, %v2005, 0
      %2012 = vmatpush.msra.mxu0 0.0
      %2013 = vmatpush.msra.mxu0 0.0
      %2014 = vmatpush.msra.mxu0 0.0
      %2015 = vmatpush.msra.mxu0 0.0
      %2016 = vmatpush.msra.mxu0 0.0
      %2017 = vmatpush.msra.mxu0 0.0
      %2018 = vmatpush.msra.mxu0 0.0
      %2019 = vmatpush.msra.mxu0 0.0
      %2020 = vmatpush.msra.mxu0 %v2003
      %2021 = vmatpush.msra.mxu0 %v2002
      %2022 = vmatpush.msra.mxu0 %v2001
      %2023 = vmatpush.msra.mxu0 %v2000
      %2024 = vmatpush.msra.mxu0 %v1999
      %2025 = vmatpush.msra.mxu0 %v1998
      %2026 = vmatpush.msra.mxu0 %v1997
      %2027 = vmatpush.msra.mxu0 %v1996
      %2028 = vmatmul.f32.gmra.mxu0 %v2007
      %v2029 = vpop.f32.mrf.mxu0
      %v2030 = vadd.f32 0.0, %v2029
      %2031 = vmatmul.f32.gmra.mxu0 %v2010
      %v2032 = vpop.f32.mrf.mxu0
      %v2033 = vadd.f32 0.0, %v2032
      %2034 = vdwg.mxu0
      %v2035 = vadd.f32 %v1994, %v2030
      %v2036 = vadd.f32 %v1995, %v2033
      %vm2037 = vcmp.ge.f32.partialorder %v2035, 0.0
      %vm2038 = vcmp.ge.f32.partialorder %v2036, 0.0
      %v2039 = vmul.f32 %v2035, 0.1
      %v2040 = vmul.f32 %v2036, 0.1
      %v2041 = vsel %vm2037, %v2035, %v2039
      %v2042 = vsel %vm2038, %v2036, %v2040
      %v2043 = vld [vmem:[%s5 + $0x168] sm:$0xff]
      %v2044 = vld [vmem:[%s5 + $0x170] sm:$0xff]
      %v2045 = vld [vmem:[%s5 + $0x178] sm:$0xff]
      %v2046 = vld [vmem:[%s5 + $0x180] sm:$0xff]
      %v2047 = vperm.slane %v1677, 2
      %v2049 = vsel %vm1267, %v1675, 0
      %v2052 = vsel %vm1267, %v1676, 0
      %2054 = vmatpush.msra.mxu0 0.0
      %2055 = vmatpush.msra.mxu0 0.0
      %2056 = vmatpush.msra.mxu0 0.0
      %2057 = vmatpush.msra.mxu0 0.0
      %2058 = vmatpush.msra.mxu0 0.0
      %2059 = vmatpush.msra.mxu0 0.0
      %2060 = vmatpush.msra.mxu0 0.0
      %2061 = vmatpush.msra.mxu0 0.0
      %2062 = vmatpush.msra.mxu0 0.0
      %2063 = vmatpush.msra.mxu0 0.0
      %2064 = vmatpush.msra.mxu0 0.0
      %2065 = vmatpush.msra.mxu0 0.0
      %2066 = vmatpush.msra.mxu0 %v2046
      %2067 = vmatpush.msra.mxu0 %v2045
      %2068 = vmatpush.msra.mxu0 %v2044
      %2069 = vmatpush.msra.mxu0 %v2043
      %2070 = vmatmul.f32.gmra.mxu0 %v2049
      %v2071 = vpop.f32.mrf.mxu0
      %v2072 = vadd.f32 %v2047, %v2071
      %2073 = vmatmul.f32.gmra.mxu0 %v2052
      %v2074 = vpop.f32.mrf.mxu0
      %v2075 = vadd.f32 %v2047, %v2074
      %2076 = vdwg.mxu0
      %v2077 = vadd.f32 %v2041, %v2072
      %v2078 = vadd.f32 %v2042, %v2075
      %v2080 = vsel %vm353, %v2077, 0
      %v2083 = vsel %vm353, %v2078, 0
      %2085 = vmatpush.msra.mxu0 0.0
      %2086 = vmatpush.msra.mxu0 0.0
      %2087 = vmatpush.msra.mxu0 0.0
      %2088 = vmatpush.msra.mxu0 0.0
      %2089 = vmatpush.msra.mxu0 0.0
      %2090 = vmatpush.msra.mxu0 0.0
      %2091 = vmatpush.msra.mxu0 0.0
      %2092 = vmatpush.msra.mxu0 0.0
      %2093 = vmatpush.msra.mxu0 %v1205
      %2094 = vmatpush.msra.mxu0 %v1204
      %2095 = vmatpush.msra.mxu0 %v1203
      %2096 = vmatpush.msra.mxu0 %v1202
      %2097 = vmatpush.msra.mxu0 %v1201
      %2098 = vmatpush.msra.mxu0 %v1200
      %2099 = vmatpush.msra.mxu0 %v1199
      %2100 = vmatpush.msra.mxu0 %v1198
      %2101 = vmatmul.f32.gmra.mxu0 %v2080
      %v2102 = vpop.f32.mrf.mxu0
      %v2103 = vadd.f32 0.0, %v2102
      %2104 = vmatmul.f32.gmra.mxu0 %v2083
      %v2105 = vpop.f32.mrf.mxu0
      %v2106 = vadd.f32 0.0, %v2105
      %2107 = vdwg.mxu0
      %2108 = vmatpush.msra.mxu0 0.0
      %2109 = vmatpush.msra.mxu0 0.0
      %2110 = vmatpush.msra.mxu0 0.0
      %2111 = vmatpush.msra.mxu0 0.0
      %2112 = vmatpush.msra.mxu0 0.0
      %2113 = vmatpush.msra.mxu0 0.0
      %2114 = vmatpush.msra.mxu0 0.0
      %2115 = vmatpush.msra.mxu0 0.0
      %2116 = vmatpush.msra.mxu0 %v1213
      %2117 = vmatpush.msra.mxu0 %v1212
      %2118 = vmatpush.msra.mxu0 %v1211
      %2119 = vmatpush.msra.mxu0 %v1210
      %2120 = vmatpush.msra.mxu0 %v1209
      %2121 = vmatpush.msra.mxu0 %v1208
      %2122 = vmatpush.msra.mxu0 %v1207
      %2123 = vmatpush.msra.mxu0 %v1206
      %2124 = vmatmul.f32.gmra.mxu0 %v2080
      %v2125 = vpop.f32.mrf.mxu0
      %v2126 = vadd.f32 0.0, %v2125
      %2127 = vmatmul.f32.gmra.mxu0 %v2083
      %v2128 = vpop.f32.mrf.mxu0
      %v2129 = vadd.f32 0.0, %v2128
      %2130 = vdwg.mxu0
      %v2131 = vxor.u32 %v2103, 2147483648
      %v2132 = vxor.u32 %v2106, 2147483648
      %v2133 = vmul.f32 %v2131, 1.442695
      %v2134 = vpow.pop %v2133
      %v2135 = vmul.f32 %v2132, 1.442695
      %v2136 = vpow.pop %v2135
      %v2137 = vadd.f32 %v2134, 1.0
      %v2138 = vadd.f32 %v2136, 1.0
      %v2139 = vrcp.pop %v2137
      %v2140 = vmul.f32 %v2137, %v2139
      %v2141 = vsub.f32 1.0, %v2140
      %v2142 = vmul.f32 %v2139, %v2141
      %v2143 = vadd.f32 %v2139, %v2142
      %vm2144 = vweird.f32 %v2137
      %vm2145 = vweird.f32 %v2139
      %vm2146 = vmor %vm2144, %vm2145
      %v2147 = vsel %vm2146, %v2139, %v2143
      %v2148 = vand.u32 2147483647, %v2137
      %vm2149 = vcmp.eq.f32.partialorder %v2148, 8.507059e+37
      %v2150 = vand.u32 %v2137, 2147483648
      %v2151 = vor.u32 1.1754944e-38, %v2150
      %v2152 = vsel %vm2149, %v2151, %v2147
      %v2153 = vmul.f32 1.0, %v2152
      %v2154 = vrcp.pop %v2138
      %v2155 = vmul.f32 %v2138, %v2154
      %v2156 = vsub.f32 1.0, %v2155
      %v2157 = vmul.f32 %v2154, %v2156
      %v2158 = vadd.f32 %v2154, %v2157
      %vm2159 = vweird.f32 %v2138
      %vm2160 = vweird.f32 %v2154
      %vm2161 = vmor %vm2159, %vm2160
      %v2162 = vsel %vm2161, %v2154, %v2158
      %v2163 = vand.u32 2147483647, %v2138
      %vm2164 = vcmp.eq.f32.partialorder %v2163, 8.507059e+37
      %v2165 = vand.u32 %v2138, 2147483648
      %v2166 = vor.u32 1.1754944e-38, %v2165
      %v2167 = vsel %vm2164, %v2166, %v2162
      %v2168 = vmul.f32 1.0, %v2167
      %v2169 = vmul.f32 %v2153, 2.0
      %v2170 = vmul.f32 %v2168, 2.0
      %v2171 = vsub.f32 %v2169, 1.0
      %v2172 = vsub.f32 %v2170, 1.0
      %v2173 = vmul.f32 %v2171, 0.8
      %v2174 = vmul.f32 %v2172, 0.8
      %v2175 = vmul.f32 %v2173, 1.442695
      %v2176 = vpow.pop %v2175
      %v2177 = vmul.f32 %v2174, 1.442695
      %v2178 = vpow.pop %v2177
      %v2179 = vmul.f32 %v1261, %v2176
      %v2180 = vmul.f32 %v1264, %v2178
      %v2181 = vadd.f32 %v2179, %v2126
      %v2182 = vadd.f32 %v2180, %v2129
      %v2183 = vadd.f32 %v1238, %v1675
      %v2184 = vadd.f32 %v1241, %v1676
      %v2185 = vadd.f32 %v1261, %v2181
      %v2186 = vadd.f32 %v1264, %v2182
      %v2187 = vld [vmem:[%s5 + $0x410] sm:$0x3]
      %2188 = vst.msk [vmem:[#allocation2 + $0x1] sm:$0xff] %vm353, %v1193
      %2189 = vst.msk [vmem:[#allocation2 + $0x9] sm:$0xff] %vm353, %v1196
      %v2190 = vld [vmem:[%s5 + $0x1c8] sm:$0xff]
      %v2191 = vld [vmem:[%s5 + $0x1d0] sm:$0xff]
      %v2192 = vld [vmem:[%s5 + $0x1d8] sm:$0xff]
      %v2193 = vld [vmem:[%s5 + $0x1e0] sm:$0xff]
      %v2194 = vld [vmem:[%s5 + $0x1e8] sm:$0xff]
      %v2195 = vld [vmem:[%s5 + $0x1f0] sm:$0xff]
      %v2196 = vld [vmem:[%s5 + $0x1f8] sm:$0xff]
      %v2197 = vld [vmem:[%s5 + $0x200] sm:$0xff]
      %v2198 = vld [vmem:[#allocation2] sm:$0xff]
      %v2199 = vld [vmem:[#allocation2 + $0x8] sm:$0xff]
      %v2201 = vsel %vm353, %v2198, 0
      %v2204 = vsel %vm353, %v2199, 0
      %2206 = vmatpush.msra.mxu0 0.0
      %2207 = vmatpush.msra.mxu0 0.0
      %2208 = vmatpush.msra.mxu0 0.0
      %2209 = vmatpush.msra.mxu0 0.0
      %2210 = vmatpush.msra.mxu0 0.0
      %2211 = vmatpush.msra.mxu0 0.0
      %2212 = vmatpush.msra.mxu0 0.0
      %2213 = vmatpush.msra.mxu0 0.0
      %2214 = vmatpush.msra.mxu0 %v2197
      %2215 = vmatpush.msra.mxu0 %v2196
      %2216 = vmatpush.msra.mxu0 %v2195
      %2217 = vmatpush.msra.mxu0 %v2194
      %2218 = vmatpush.msra.mxu0 %v2193
      %2219 = vmatpush.msra.mxu0 %v2192
      %2220 = vmatpush.msra.mxu0 %v2191
      %2221 = vmatpush.msra.mxu0 %v2190
      %2222 = vmatmul.f32.gmra.mxu0 %v2201
      %v2223 = vpop.f32.mrf.mxu0
      %v2224 = vadd.f32 0.0, %v2223
      %2225 = vmatmul.f32.gmra.mxu0 %v2204
      %v2226 = vpop.f32.mrf.mxu0
      %v2227 = vadd.f32 0.0, %v2226
      %2228 = vdwg.mxu0
      %v2229 = vperm.slane %v2187, 0
      %v2230 = vadd.f32 %v2229, %v2224
      %v2231 = vadd.f32 %v2229, %v2227
      %v2232 = vld [vmem:[%s5 + $0x208] sm:$0xff]
      %v2233 = vld [vmem:[%s5 + $0x210] sm:$0xff]
      %v2234 = vld [vmem:[%s5 + $0x218] sm:$0xff]
      %v2235 = vld [vmem:[%s5 + $0x220] sm:$0xff]
      %v2236 = vld [vmem:[%s5 + $0x228] sm:$0xff]
      %v2237 = vld [vmem:[%s5 + $0x230] sm:$0xff]
      %v2238 = vld [vmem:[%s5 + $0x238] sm:$0xff]
      %v2239 = vld [vmem:[%s5 + $0x240] sm:$0xff]
      %v2240 = vld [vmem:[#allocation2 + $0x1] sm:$0xff]
      %v2241 = vld [vmem:[#allocation2 + $0x9] sm:$0xff]
      %v2243 = vsel %vm353, %v2240, 0
      %v2246 = vsel %vm353, %v2241, 0
      %2248 = vmatpush.msra.mxu0 0.0
      %2249 = vmatpush.msra.mxu0 0.0
      %2250 = vmatpush.msra.mxu0 0.0
      %2251 = vmatpush.msra.mxu0 0.0
      %2252 = vmatpush.msra.mxu0 0.0
      %2253 = vmatpush.msra.mxu0 0.0
      %2254 = vmatpush.msra.mxu0 0.0
      %2255 = vmatpush.msra.mxu0 0.0
      %2256 = vmatpush.msra.mxu0 %v2239
      %2257 = vmatpush.msra.mxu0 %v2238
      %2258 = vmatpush.msra.mxu0 %v2237
      %2259 = vmatpush.msra.mxu0 %v2236
      %2260 = vmatpush.msra.mxu0 %v2235
      %2261 = vmatpush.msra.mxu0 %v2234
      %2262 = vmatpush.msra.mxu0 %v2233
      %2263 = vmatpush.msra.mxu0 %v2232
      %2264 = vmatmul.f32.gmra.mxu0 %v2243
      %v2265 = vpop.f32.mrf.mxu0
      %v2266 = vadd.f32 0.0, %v2265
      %2267 = vmatmul.f32.gmra.mxu0 %v2246
      %v2268 = vpop.f32.mrf.mxu0
      %v2269 = vadd.f32 0.0, %v2268
      %2270 = vdwg.mxu0
      %v2271 = vadd.f32 %v2230, %v2266
      %v2272 = vadd.f32 %v2231, %v2269
      %v2273 = vld [vmem:[%s5 + $0x248] sm:$0xff]
      %v2274 = vld [vmem:[%s5 + $0x250] sm:$0xff]
      %v2275 = vld [vmem:[%s5 + $0x258] sm:$0xff]
      %v2276 = vld [vmem:[%s5 + $0x260] sm:$0xff]
      %v2277 = vld [vmem:[%s5 + $0x268] sm:$0xff]
      %v2278 = vld [vmem:[%s5 + $0x270] sm:$0xff]
      %v2279 = vld [vmem:[%s5 + $0x278] sm:$0xff]
      %v2280 = vld [vmem:[%s5 + $0x280] sm:$0xff]
      %v2281 = vld [vmem:[#allocation2 + $0x2] sm:$0xff]
      %v2282 = vld [vmem:[#allocation2 + $0xa] sm:$0xff]
      %v2284 = vsel %vm353, %v2281, 0
      %v2287 = vsel %vm353, %v2282, 0
      %2289 = vmatpush.msra.mxu0 0.0
      %2290 = vmatpush.msra.mxu0 0.0
      %2291 = vmatpush.msra.mxu0 0.0
      %2292 = vmatpush.msra.mxu0 0.0
      %2293 = vmatpush.msra.mxu0 0.0
      %2294 = vmatpush.msra.mxu0 0.0
      %2295 = vmatpush.msra.mxu0 0.0
      %2296 = vmatpush.msra.mxu0 0.0
      %2297 = vmatpush.msra.mxu0 %v2280
      %2298 = vmatpush.msra.mxu0 %v2279
      %2299 = vmatpush.msra.mxu0 %v2278
      %2300 = vmatpush.msra.mxu0 %v2277
      %2301 = vmatpush.msra.mxu0 %v2276
      %2302 = vmatpush.msra.mxu0 %v2275
      %2303 = vmatpush.msra.mxu0 %v2274
      %2304 = vmatpush.msra.mxu0 %v2273
      %2305 = vmatmul.f32.gmra.mxu0 %v2284
      %v2306 = vpop.f32.mrf.mxu0
      %v2307 = vadd.f32 0.0, %v2306
      %2308 = vmatmul.f32.gmra.mxu0 %v2287
      %v2309 = vpop.f32.mrf.mxu0
      %v2310 = vadd.f32 0.0, %v2309
      %2311 = vdwg.mxu0
      %v2312 = vadd.f32 %v2271, %v2307
      %v2313 = vadd.f32 %v2272, %v2310
      %2316 = vrot.lane.b32.xlu0 %v2185, 32
      %v2317 = vpop.permute.xlu0 %2316
      %2318 = vrot.lane.b32.xlu0 %v2186, 32
      %v2319 = vpop.permute.xlu0 %2318
      %v2322 = vsel %vm1267, %v2183, %v2317
      %v2323 = vsel %vm1267, %v2184, %v2319
      %2324 = vst.msk [vmem:[#allocation2 + $0x1] sm:$0xff] %vm353, %v2322
      %2325 = vst.msk [vmem:[#allocation2 + $0x9] sm:$0xff] %vm353, %v2323
      %v2326 = vld [vmem:[%s5 + $0x288] sm:$0xff]
      %v2327 = vld [vmem:[%s5 + $0x290] sm:$0xff]
      %v2328 = vld [vmem:[%s5 + $0x298] sm:$0xff]
      %v2329 = vld [vmem:[%s5 + $0x2a0] sm:$0xff]
      %v2330 = vld [vmem:[%s5 + $0x2a8] sm:$0xff]
      %v2331 = vld [vmem:[%s5 + $0x2b0] sm:$0xff]
      %v2332 = vld [vmem:[%s5 + $0x2b8] sm:$0xff]
      %v2333 = vld [vmem:[%s5 + $0x2c0] sm:$0xff]
      %v2334 = vld [vmem:[#allocation2] sm:$0xff]
      %v2335 = vld [vmem:[#allocation2 + $0x8] sm:$0xff]
      %v2337 = vsel %vm353, %v2334, 0
      %v2340 = vsel %vm353, %v2335, 0
      %2342 = vmatpush.msra.mxu0 0.0
      %2343 = vmatpush.msra.mxu0 0.0
      %2344 = vmatpush.msra.mxu0 0.0
      %2345 = vmatpush.msra.mxu0 0.0
      %2346 = vmatpush.msra.mxu0 0.0
      %2347 = vmatpush.msra.mxu0 0.0
      %2348 = vmatpush.msra.mxu0 0.0
      %2349 = vmatpush.msra.mxu0 0.0
      %2350 = vmatpush.msra.mxu0 %v2333
      %2351 = vmatpush.msra.mxu0 %v2332
      %2352 = vmatpush.msra.mxu0 %v2331
      %2353 = vmatpush.msra.mxu0 %v2330
      %2354 = vmatpush.msra.mxu0 %v2329
      %2355 = vmatpush.msra.mxu0 %v2328
      %2356 = vmatpush.msra.mxu0 %v2327
      %2357 = vmatpush.msra.mxu0 %v2326
      %2358 = vmatmul.f32.gmra.mxu0 %v2337
      %v2359 = vpop.f32.mrf.mxu0
      %v2360 = vadd.f32 0.0, %v2359
      %2361 = vmatmul.f32.gmra.mxu0 %v2340
      %v2362 = vpop.f32.mrf.mxu0
      %v2363 = vadd.f32 0.0, %v2362
      %2364 = vdwg.mxu0
      %v2365 = vperm.slane %v2187, 1
      %v2366 = vadd.f32 %v2365, %v2360
      %v2367 = vadd.f32 %v2365, %v2363
      %v2368 = vld [vmem:[%s5 + $0x2c8] sm:$0xff]
      %v2369 = vld [vmem:[%s5 + $0x2d0] sm:$0xff]
      %v2370 = vld [vmem:[%s5 + $0x2d8] sm:$0xff]
      %v2371 = vld [vmem:[%s5 + $0x2e0] sm:$0xff]
      %v2372 = vld [vmem:[%s5 + $0x2e8] sm:$0xff]
      %v2373 = vld [vmem:[%s5 + $0x2f0] sm:$0xff]
      %v2374 = vld [vmem:[%s5 + $0x2f8] sm:$0xff]
      %v2375 = vld [vmem:[%s5 + $0x300] sm:$0xff]
      %v2376 = vld [vmem:[#allocation2 + $0x1] sm:$0xff]
      %v2377 = vld [vmem:[#allocation2 + $0x9] sm:$0xff]
      %v2379 = vsel %vm353, %v2376, 0
      %v2382 = vsel %vm353, %v2377, 0
      %2384 = vmatpush.msra.mxu0 0.0
      %2385 = vmatpush.msra.mxu0 0.0
      %2386 = vmatpush.msra.mxu0 0.0
      %2387 = vmatpush.msra.mxu0 0.0
      %2388 = vmatpush.msra.mxu0 0.0
      %2389 = vmatpush.msra.mxu0 0.0
      %2390 = vmatpush.msra.mxu0 0.0
      %2391 = vmatpush.msra.mxu0 0.0
      %2392 = vmatpush.msra.mxu0 %v2375
      %2393 = vmatpush.msra.mxu0 %v2374
      %2394 = vmatpush.msra.mxu0 %v2373
      %2395 = vmatpush.msra.mxu0 %v2372
      %2396 = vmatpush.msra.mxu0 %v2371
      %2397 = vmatpush.msra.mxu0 %v2370
      %2398 = vmatpush.msra.mxu0 %v2369
      %2399 = vmatpush.msra.mxu0 %v2368
      %2400 = vmatmul.f32.gmra.mxu0 %v2379
      %v2401 = vpop.f32.mrf.mxu0
      %v2402 = vadd.f32 0.0, %v2401
      %2403 = vmatmul.f32.gmra.mxu0 %v2382
      %v2404 = vpop.f32.mrf.mxu0
      %v2405 = vadd.f32 0.0, %v2404
      %2406 = vdwg.mxu0
      %v2407 = vadd.f32 %v2366, %v2402
      %v2408 = vadd.f32 %v2367, %v2405
      %v2409 = vld [vmem:[%s5 + $0x308] sm:$0xff]
      %v2410 = vld [vmem:[%s5 + $0x310] sm:$0xff]
      %v2411 = vld [vmem:[%s5 + $0x318] sm:$0xff]
      %v2412 = vld [vmem:[%s5 + $0x320] sm:$0xff]
      %v2413 = vld [vmem:[%s5 + $0x328] sm:$0xff]
      %v2414 = vld [vmem:[%s5 + $0x330] sm:$0xff]
      %v2415 = vld [vmem:[%s5 + $0x338] sm:$0xff]
      %v2416 = vld [vmem:[%s5 + $0x340] sm:$0xff]
      %v2417 = vld [vmem:[#allocation2 + $0x2] sm:$0xff]
      %v2418 = vld [vmem:[#allocation2 + $0xa] sm:$0xff]
      %v2420 = vsel %vm353, %v2417, 0
      %v2423 = vsel %vm353, %v2418, 0
      %2425 = vmatpush.msra.mxu0 0.0
      %2426 = vmatpush.msra.mxu0 0.0
      %2427 = vmatpush.msra.mxu0 0.0
      %2428 = vmatpush.msra.mxu0 0.0
      %2429 = vmatpush.msra.mxu0 0.0
      %2430 = vmatpush.msra.mxu0 0.0
      %2431 = vmatpush.msra.mxu0 0.0
      %2432 = vmatpush.msra.mxu0 0.0
      %2433 = vmatpush.msra.mxu0 %v2416
      %2434 = vmatpush.msra.mxu0 %v2415
      %2435 = vmatpush.msra.mxu0 %v2414
      %2436 = vmatpush.msra.mxu0 %v2413
      %2437 = vmatpush.msra.mxu0 %v2412
      %2438 = vmatpush.msra.mxu0 %v2411
      %2439 = vmatpush.msra.mxu0 %v2410
      %2440 = vmatpush.msra.mxu0 %v2409
      %2441 = vmatmul.f32.gmra.mxu0 %v2420
      %v2442 = vpop.f32.mrf.mxu0
      %v2443 = vadd.f32 0.0, %v2442
      %2444 = vmatmul.f32.gmra.mxu0 %v2423
      %v2445 = vpop.f32.mrf.mxu0
      %v2446 = vadd.f32 0.0, %v2445
      %2447 = vdwg.mxu0
      %v2448 = vadd.f32 %v2407, %v2443
      %v2449 = vadd.f32 %v2408, %v2446
      %2450 = vst.msk [vmem:[#allocation2 + $0x1] sm:$0xff] %vm353, %v2312
      %2451 = vst.msk [vmem:[#allocation2 + $0x9] sm:$0xff] %vm353, %v2313
      %v2452 = vld [vmem:[%s5 + $0x348] sm:$0xff]
      %v2453 = vld [vmem:[%s5 + $0x350] sm:$0xff]
      %v2454 = vld [vmem:[%s5 + $0x358] sm:$0xff]
      %v2455 = vld [vmem:[%s5 + $0x360] sm:$0xff]
      %v2456 = vld [vmem:[%s5 + $0x368] sm:$0xff]
      %v2457 = vld [vmem:[%s5 + $0x370] sm:$0xff]
      %v2458 = vld [vmem:[%s5 + $0x378] sm:$0xff]
      %v2459 = vld [vmem:[%s5 + $0x380] sm:$0xff]
      %v2460 = vld [vmem:[#allocation2] sm:$0xff]
      %v2461 = vld [vmem:[#allocation2 + $0x8] sm:$0xff]
      %v2463 = vsel %vm353, %v2460, 0
      %v2466 = vsel %vm353, %v2461, 0
      %2468 = vmatpush.msra.mxu0 0.0
      %2469 = vmatpush.msra.mxu0 0.0
      %2470 = vmatpush.msra.mxu0 0.0
      %2471 = vmatpush.msra.mxu0 0.0
      %2472 = vmatpush.msra.mxu0 0.0
      %2473 = vmatpush.msra.mxu0 0.0
      %2474 = vmatpush.msra.mxu0 0.0
      %2475 = vmatpush.msra.mxu0 0.0
      %2476 = vmatpush.msra.mxu0 %v2459
      %2477 = vmatpush.msra.mxu0 %v2458
      %2478 = vmatpush.msra.mxu0 %v2457
      %2479 = vmatpush.msra.mxu0 %v2456
      %2480 = vmatpush.msra.mxu0 %v2455
      %2481 = vmatpush.msra.mxu0 %v2454
      %2482 = vmatpush.msra.mxu0 %v2453
      %2483 = vmatpush.msra.mxu0 %v2452
      %2484 = vmatmul.f32.gmra.mxu0 %v2463
      %v2485 = vpop.f32.mrf.mxu0
      %v2486 = vadd.f32 0.0, %v2485
      %2487 = vmatmul.f32.gmra.mxu0 %v2466
      %v2488 = vpop.f32.mrf.mxu0
      %v2489 = vadd.f32 0.0, %v2488
      %2490 = vdwg.mxu0
      %v2491 = vadd.f32 %v2448, %v2486
      %v2492 = vadd.f32 %v2449, %v2489
      %v2493 = vld [vmem:[%s5 + $0x388] sm:$0xff]
      %v2494 = vld [vmem:[%s5 + $0x390] sm:$0xff]
      %v2495 = vld [vmem:[%s5 + $0x398] sm:$0xff]
      %v2496 = vld [vmem:[%s5 + $0x3a0] sm:$0xff]
      %v2497 = vld [vmem:[%s5 + $0x3a8] sm:$0xff]
      %v2498 = vld [vmem:[%s5 + $0x3b0] sm:$0xff]
      %v2499 = vld [vmem:[%s5 + $0x3b8] sm:$0xff]
      %v2500 = vld [vmem:[%s5 + $0x3c0] sm:$0xff]
      %v2501 = vld [vmem:[#allocation2 + $0x1] sm:$0xff]
      %v2502 = vld [vmem:[#allocation2 + $0x9] sm:$0xff]
      %v2504 = vsel %vm353, %v2501, 0
      %v2507 = vsel %vm353, %v2502, 0
      %2509 = vmatpush.msra.mxu0 0.0
      %2510 = vmatpush.msra.mxu0 0.0
      %2511 = vmatpush.msra.mxu0 0.0
      %2512 = vmatpush.msra.mxu0 0.0
      %2513 = vmatpush.msra.mxu0 0.0
      %2514 = vmatpush.msra.mxu0 0.0
      %2515 = vmatpush.msra.mxu0 0.0
      %2516 = vmatpush.msra.mxu0 0.0
      %2517 = vmatpush.msra.mxu0 %v2500
      %2518 = vmatpush.msra.mxu0 %v2499
      %2519 = vmatpush.msra.mxu0 %v2498
      %2520 = vmatpush.msra.mxu0 %v2497
      %2521 = vmatpush.msra.mxu0 %v2496
      %2522 = vmatpush.msra.mxu0 %v2495
      %2523 = vmatpush.msra.mxu0 %v2494
      %2524 = vmatpush.msra.mxu0 %v2493
      %2525 = vmatmul.f32.gmra.mxu0 %v2504
      %v2526 = vpop.f32.mrf.mxu0
      %v2527 = vadd.f32 0.0, %v2526
      %2528 = vmatmul.f32.gmra.mxu0 %v2507
      %v2529 = vpop.f32.mrf.mxu0
      %v2530 = vadd.f32 0.0, %v2529
      %2531 = vdwg.mxu0
      %v2532 = vadd.f32 %v2491, %v2527
      %v2533 = vadd.f32 %v2492, %v2530
      %v2534 = vld [vmem:[%s5 + $0x3c8] sm:$0xff]
      %v2535 = vld [vmem:[%s5 + $0x3d0] sm:$0xff]
      %v2536 = vld [vmem:[%s5 + $0x3d8] sm:$0xff]
      %v2537 = vld [vmem:[%s5 + $0x3e0] sm:$0xff]
      %v2538 = vld [vmem:[%s5 + $0x3e8] sm:$0xff]
      %v2539 = vld [vmem:[%s5 + $0x3f0] sm:$0xff]
      %v2540 = vld [vmem:[%s5 + $0x3f8] sm:$0xff]
      %v2541 = vld [vmem:[%s5 + $0x400] sm:$0xff]
      %v2542 = vld [vmem:[#allocation2 + $0x2] sm:$0xff]
      %v2543 = vld [vmem:[#allocation2 + $0xa] sm:$0xff]
      %v2545 = vsel %vm353, %v2542, 0
      %v2548 = vsel %vm353, %v2543, 0
      %2550 = vmatpush.msra.mxu0 0.0
      %2551 = vmatpush.msra.mxu0 0.0
      %2552 = vmatpush.msra.mxu0 0.0
      %2553 = vmatpush.msra.mxu0 0.0
      %2554 = vmatpush.msra.mxu0 0.0
      %2555 = vmatpush.msra.mxu0 0.0
      %2556 = vmatpush.msra.mxu0 0.0
      %2557 = vmatpush.msra.mxu0 0.0
      %2558 = vmatpush.msra.mxu0 %v2541
      %2559 = vmatpush.msra.mxu0 %v2540
      %2560 = vmatpush.msra.mxu0 %v2539
      %2561 = vmatpush.msra.mxu0 %v2538
      %2562 = vmatpush.msra.mxu0 %v2537
      %2563 = vmatpush.msra.mxu0 %v2536
      %2564 = vmatpush.msra.mxu0 %v2535
      %2565 = vmatpush.msra.mxu0 %v2534
      %2566 = vmatmul.f32.gmra.mxu0 %v2545
      %v2567 = vpop.f32.mrf.mxu0
      %v2568 = vadd.f32 0.0, %v2567
      %2569 = vmatmul.f32.gmra.mxu0 %v2548
      %v2570 = vpop.f32.mrf.mxu0
      %v2571 = vadd.f32 0.0, %v2570
      %2572 = vdwg.mxu0
      %v2573 = vadd.f32 %v2532, %v2568
      %v2574 = vadd.f32 %v2533, %v2571
      %v2575 = vadd.f32 %v2573, %v276
      %v2576 = vadd.f32 %v2574, %v277
      %2577 = vst.msk [vmem:[%s251] sm:$0xff] %vm353, %v2575
      %2578 = vst.msk [vmem:[%s251 + $0x8] sm:$0xff] %vm353, %v2576
      %p2579 = scmp.lt.s32.totalorder %s17, 1
      %s2580 = scalar_select %p2579, %s17, 1
      %s2581 = smul.addr %s2580, 2
      %s2582 = smul.addr %s2581, 8
      %s2583 = scalar_lea.vmem %s6, %s2582
      // Predicated region
      $region45: #{forward.1} parent=43 // pred_check
        %p2584 = pneg %p166
      $region46: #{forward.1} parent=43 // pred_check_branch
        %2586 = sbr.rel (%p2584) target = $region48
      $region47: #{forward.1} parent=43 // pred_region
        _
      $region48: #{forward.1} parent=43 // pred_fallthru
        _
    $region44: #{forward.1} parent=5 // pred_fallthru
      _
    %p2587 = scmp.le.s32.totalorder 2, %s12
    // Predicated region
    $region49: #{forward.1} parent=5 // pred_check
      %p2588 = pneg %p2587
    $region50: #{forward.1} parent=5 // pred_check_branch
      %2590 = sbr.rel (%p2588) target = $region52
    $region51: #{forward.1} parent=5 // pred_region
      %s2591 = ssub.s32 %s12, 2
      // Predicated region
      $region53: #{forward.1} parent=51 // pred_check
        %p2592 = pneg %p172
      $region54: #{forward.1} parent=51 // pred_check_branch
        %2594 = sbr.rel (%p2592) target = $region56
      $region55: #{forward.1} parent=51 // pred_region
        %p2595 = scmp.lt.s32.totalorder %s18, 1
        %s2596 = scalar_select %p2595, %s18, 1
        %s2597 = smul.addr %s2596, 2
        %s2598 = smul.addr %s2597, 8
        %s2599 = scalar_lea.vmem %s6, %s2598
      $region56: #{forward.1} parent=51 // pred_fallthru
        _
    $region52: #{forward.1} parent=5 // pred_fallthru
      _
  $region6: #{forward.1} parent=0 // loop_footer
    %s16 = sadd.s32 1, %s12
  $region7: #{forward.1} parent=0 // loop_footer_branch
    %11 = sbr.rel target = $region3
  $region8: #{forward.1} parent=0 // loop_exit
    _

</llo_original>
